<compile_context>
chip_gen: v6e
topology: v6e:2x2x1
jax: 0.10.0
libtpu: 0.0.40
codegen_flags: <defaults>
</compile_context>

<pallas_src>
import functools

import jax
import jax.numpy as jnp
from jax.experimental import pallas as pl
from jax.experimental.pallas import tpu as pltpu

D_IN = 256
D_HID = 1024
D_OUT = 9
D_OUT_PAD = 128  # pad final output dim to a full lane width; slice back to 9 in wrapper


def _round_up(n, m):
    return ((n + m - 1) // m) * m


def _mlp_kernel(x_ref, w1_ref, b1_ref, w2_ref, b2_ref, w3_ref, b3_ref, o_ref):
    # In-kernel f32 -> bf16 cast of the activation tile (cheap VPU pack).
    x = x_ref[...].astype(jnp.bfloat16)
    # Layer 1: (TB, 256)bf16 @ (256, 1024)bf16 -> f32 acc; bias + ReLU in f32.
    h1 = jnp.dot(x, w1_ref[...], preferred_element_type=jnp.float32)
    h1 = jnp.maximum(h1 + b1_ref[...], 0.0).astype(jnp.bfloat16)
    # Layer 2: (TB, 1024)bf16 @ (1024, 1024)bf16 -> f32 acc; bias + ReLU in f32.
    h2 = jnp.dot(h1, w2_ref[...], preferred_element_type=jnp.float32)
    h2 = jnp.maximum(h2 + b2_ref[...], 0.0).astype(jnp.bfloat16)
    # Layer 3: (TB, 1024)bf16 @ (1024, 128)bf16 -> f32 (padded output, real dim = 9).
    o = jnp.dot(h2, w3_ref[...], preferred_element_type=jnp.float32)
    o_ref[...] = (o + b3_ref[...]).astype(o_ref.dtype)


def _resident_spec(shape):
    """BlockSpec for weights/biases identical across all grid steps:
    constant index_map + single buffering (no point double-buffering constants)."""
    index_map = lambda i: (0, 0)
    if hasattr(pl, "Buffered"):
        try:
            return pl.BlockSpec(shape, index_map, pipeline_mode=pl.Buffered(1))
        except TypeError:
            pass
    return pl.BlockSpec(shape, index_map)


@functools.partial(jax.jit, static_argnames=("block_batch",))
def label_predictor_forward(x, kparams, *, block_batch=512):
    """x: (N, 256) float32. kparams: output of prepare_params(). Returns (N, 9) f32."""
    w1, b1, w2, b2, w3, b3 = kparams
    n = x.shape[0]
    n8 = _round_up(max(n, 1), 8)

    # Tile selection (all static under jit):
    #  - enough tiles that each tile <= block_batch,
    #  - at least 2 tiles when N >= 16 so both v7x TensorCores get work,
    #  - bb rounded to a multiple of 8; padding waste < 8 * n_tiles rows.
    n_tiles = max(pl.cdiv(n8, block_batch), 2 if n8 >= 16 else 1)
    bb = _round_up(pl.cdiv(n8, n_tiles), 8)
    n_pad = n_tiles * bb

    xp = x
    if n_pad != n:                      # static under jit; skipped when aligned
        xp = jnp.pad(x, ((0, n_pad - n), (0, 0)))

    out = pl.pallas_call(
        _mlp_kernel,
        out_shape=jax.ShapeDtypeStruct((n_pad, D_OUT_PAD), jnp.float32),
        grid_spec=pltpu.PrefetchScalarGridSpec(
            num_scalar_prefetch=0,
            grid=(n_tiles,),
            in_specs=[
                pl.BlockSpec((bb, D_IN), lambda i: (i, 0)),   # x tile (f32, cast in-kernel)
                _resident_spec((D_IN, D_HID)),                # w1 (bf16)
                _resident_spec((1, D_HID)),                   # b1 (f32)
                _resident_spec((D_HID, D_HID)),               # w2 (bf16)
                _resident_spec((1, D_HID)),                   # b2 (f32)
                _resident_spec((D_HID, D_OUT_PAD)),           # w3 padded (bf16)
                _resident_spec((1, D_OUT_PAD)),               # b3 padded (f32)
            ],
            out_specs=pl.BlockSpec((bb, D_OUT_PAD), lambda i: (i, 0)),
        ),
        compiler_params=pltpu.CompilerParams(
            dimension_semantics=("parallel",),   # batch tiles shard across TCs (v7x)
            vmem_limit_bytes=32 * 1024 * 1024,
        ),
    )(xp, w1, b1, w2, b2, w3, b3)

    # Single slice pass drops both the batch padding and the 9->128 lane padding.
    return out[:n, :D_OUT]


def init_params(key):
    """Deterministic init matching nn.Linear shapes:
       Linear(256,1024), Linear(1024,1024), Linear(1024,9).
       Stored as (in, out) f32 so the math is x @ W + b."""
    ks = jax.random.split(key, 6)

    def linear_init(kw, kb, fan_in, fan_out):
        bound = 1.0 / jnp.sqrt(fan_in)
        w = jax.random.uniform(kw, (fan_in, fan_out), jnp.float32, -bound, bound)
        b = jax.random.uniform(kb, (fan_out,), jnp.float32, -bound, bound)
        return w, b

    w1, b1 = linear_init(ks[0], ks[1], D_IN, D_HID)
    w2, b2 = linear_init(ks[2], ks[3], D_HID, D_HID)
    w3, b3 = linear_init(ks[4], ks[5], D_HID, D_OUT)
    return (w1, b1, w2, b2, w3, b3)


def prepare_params(raw_params):
    """One-time prep: bf16 weights, lane-padded last layer, (1, D) f32 biases."""
    w1, b1, w2, b2, w3, b3 = raw_params
    bf = jnp.bfloat16
    w3p = jnp.zeros((D_HID, D_OUT_PAD), jnp.float32).at[:, :D_OUT].set(w3).astype(bf)
    b3p = jnp.zeros((1, D_OUT_PAD), jnp.float32).at[:, :D_OUT].set(b3.reshape(1, -1))
    return (w1.astype(bf), b1.reshape(1, -1).astype(jnp.float32),
            w2.astype(bf), b2.reshape(1, -1).astype(jnp.float32),
            w3p, b3p)


def reference_forward_f32(x, raw_params):
    """Original PyTorch module semantics in pure f32."""
    w1, b1, w2, b2, w3, b3 = raw_params
    h = jnp.maximum(x @ w1 + b1, 0.0)
    h = jnp.maximum(h @ w2 + b2, 0.0)
    return h @ w3 + b3


def reference_forward_bf16(x, raw_params):
    """Mirror of the kernel numerics: bf16 MXU inputs, f32 accumulation/bias/ReLU."""
    w1, b1, w2, b2, w3, b3 = raw_params
    bf = jnp.bfloat16
    h = jnp.dot(x.astype(bf), w1.astype(bf), preferred_element_type=jnp.float32)
    h = jnp.maximum(h + b1, 0.0)
    h = jnp.dot(h.astype(bf), w2.astype(bf), preferred_element_type=jnp.float32)
    h = jnp.maximum(h + b2, 0.0)
    return jnp.dot(h.astype(bf), w3.astype(bf), preferred_element_type=jnp.float32) + b3


if __name__ == "__main__":
    key = jax.random.PRNGKey(0)
    k_x, k_p = jax.random.split(key)

    batch = 8
    x = jax.random.normal(k_x, (batch, D_IN), jnp.float32)
    raw_params = init_params(k_p)
    kparams = prepare_params(raw_params)  # one-time padding / casting, outside forward

    out = label_predictor_forward(x, kparams)
    out = jax.block_until_ready(out)

    assert out.shape == (batch, D_OUT), out.shape

    # Tight check against a reference that mirrors the kernel's bf16-MXU / f32-acc math.
    ref_bf16 = reference_forward_bf16(x, raw_params)
    max_err = float(jnp.max(jnp.abs(out - ref_bf16)))
    assert jnp.allclose(out, ref_bf16, atol=1e-2, rtol=1e-2), max_err

    # Loose sanity check against the full-f32 PyTorch-equivalent module.
    ref_f32 = reference_forward_f32(x, raw_params)
    assert float(jnp.max(jnp.abs(out - ref_f32))) < 0.5

    # Exercise a non-aligned / multi-tile batch to cover the adaptive tiling path.
    batch2 = 260
    x2 = jax.random.normal(k_x, (batch2, D_IN), jnp.float32)
    out2 = jax.block_until_ready(label_predictor_forward(x2, kparams))
    assert out2.shape == (batch2, D_OUT), out2.shape
    ref2 = reference_forward_bf16(x2, raw_params)
    assert jnp.allclose(out2, ref2, atol=1e-2, rtol=1e-2)

    print("KERNEL_OK")
</pallas_src>

<mosaic_0001>
module attributes {stable_mosaic.version = 11 : i64} {
  func.func @_mlp_kernel(%arg0: i32, %arg1: memref<8x256xf32, #tpu.memory_space<vmem>>, %arg2: memref<256x1024xbf16, #tpu.memory_space<vmem>>, %arg3: memref<1x1024xf32, #tpu.memory_space<vmem>>, %arg4: memref<1024x1024xbf16, #tpu.memory_space<vmem>>, %arg5: memref<1x1024xf32, #tpu.memory_space<vmem>>, %arg6: memref<1024x128xbf16, #tpu.memory_space<vmem>>, %arg7: memref<1x128xf32, #tpu.memory_space<vmem>>, %arg8: memref<8x128xf32, #tpu.memory_space<vmem>>) attributes {dimension_semantics = [#tpu.dimension_semantics<parallel>], iteration_bounds = array<i64: 1>, scalar_prefetch = 0 : i64, scratch_operands = 0 : i64, tpu.core_type = #tpu.core_type<tc>, window_params = [{transform_indices = @transform_0, window_bounds = array<i64: 8, 256>}, {pipeline_mode = #tpu.pipeline_mode<synchronous>, transform_indices = @transform_1, window_bounds = array<i64: 256, 1024>}, {pipeline_mode = #tpu.pipeline_mode<synchronous>, transform_indices = @transform_2, window_bounds = array<i64: 1, 1024>}, {pipeline_mode = #tpu.pipeline_mode<synchronous>, transform_indices = @transform_3, window_bounds = array<i64: 1024, 1024>}, {pipeline_mode = #tpu.pipeline_mode<synchronous>, transform_indices = @transform_4, window_bounds = array<i64: 1, 1024>}, {pipeline_mode = #tpu.pipeline_mode<synchronous>, transform_indices = @transform_5, window_bounds = array<i64: 1024, 128>}, {pipeline_mode = #tpu.pipeline_mode<synchronous>, transform_indices = @transform_6, window_bounds = array<i64: 1, 128>}, {transform_indices = @transform_7, window_bounds = array<i64: 8, 128>}]} {
    %c0 = arith.constant 0 : index
    %c0_0 = arith.constant 0 : index
    %0 = vector.load %arg1[%c0, %c0_0] : memref<8x256xf32, #tpu.memory_space<vmem>>, vector<8x256xf32>
    %1 = arith.truncf %0 : vector<8x256xf32> to vector<8x256xbf16>
    %c0_1 = arith.constant 0 : index
    %c0_2 = arith.constant 0 : index
    %2 = vector.load %arg2[%c0_1, %c0_2] : memref<256x1024xbf16, #tpu.memory_space<vmem>>, vector<256x1024xbf16>
    %cst = arith.constant dense<0.000000e+00> : vector<8x1024xf32>
    %3 = tpu.matmul %1, %2, %cst {dimension_numbers = #tpu.dot_dimension_numbers<[1], [0], [0], [1], [0, 0, 1, 1], [], []>} : vector<8x256xbf16>, vector<256x1024xbf16>, vector<8x1024xf32> -> vector<8x1024xf32>
    %c0_3 = arith.constant 0 : index
    %c0_4 = arith.constant 0 : index
    %4 = vector.load %arg3[%c0_3, %c0_4] : memref<1x1024xf32, #tpu.memory_space<vmem>>, vector<1x1024xf32>
    %5 = vector.broadcast %4 : vector<1x1024xf32> to vector<8x1024xf32>
    %6 = arith.addf %3, %5 : vector<8x1024xf32>
    %cst_5 = arith.constant 0.000000e+00 : f32
    %7 = vector.broadcast %cst_5 : f32 to vector<8x1024xf32>
    %8 = arith.maximumf %6, %7 : vector<8x1024xf32>
    %9 = arith.truncf %8 : vector<8x1024xf32> to vector<8x1024xbf16>
    %c0_6 = arith.constant 0 : index
    %c0_7 = arith.constant 0 : index
    %10 = vector.load %arg4[%c0_6, %c0_7] : memref<1024x1024xbf16, #tpu.memory_space<vmem>>, vector<1024x1024xbf16>
    %cst_8 = arith.constant dense<0.000000e+00> : vector<8x1024xf32>
    %11 = tpu.matmul %9, %10, %cst_8 {dimension_numbers = #tpu.dot_dimension_numbers<[1], [0], [0], [1], [0, 0, 1, 1], [], []>} : vector<8x1024xbf16>, vector<1024x1024xbf16>, vector<8x1024xf32> -> vector<8x1024xf32>
    %c0_9 = arith.constant 0 : index
    %c0_10 = arith.constant 0 : index
    %12 = vector.load %arg5[%c0_9, %c0_10] : memref<1x1024xf32, #tpu.memory_space<vmem>>, vector<1x1024xf32>
    %13 = vector.broadcast %12 : vector<1x1024xf32> to vector<8x1024xf32>
    %14 = arith.addf %11, %13 : vector<8x1024xf32>
    %cst_11 = arith.constant 0.000000e+00 : f32
    %15 = vector.broadcast %cst_11 : f32 to vector<8x1024xf32>
    %16 = arith.maximumf %14, %15 : vector<8x1024xf32>
    %17 = arith.truncf %16 : vector<8x1024xf32> to vector<8x1024xbf16>
    %c0_12 = arith.constant 0 : index
    %c0_13 = arith.constant 0 : index
    %18 = vector.load %arg6[%c0_12, %c0_13] : memref<1024x128xbf16, #tpu.memory_space<vmem>>, vector<1024x128xbf16>
    %cst_14 = arith.constant dense<0.000000e+00> : vector<8x128xf32>
    %19 = tpu.matmul %17, %18, %cst_14 {dimension_numbers = #tpu.dot_dimension_numbers<[1], [0], [0], [1], [0, 0, 1, 1], [], []>} : vector<8x1024xbf16>, vector<1024x128xbf16>, vector<8x128xf32> -> vector<8x128xf32>
    %c0_15 = arith.constant 0 : index
    %c0_16 = arith.constant 0 : index
    %20 = vector.load %arg7[%c0_15, %c0_16] : memref<1x128xf32, #tpu.memory_space<vmem>>, vector<1x128xf32>
    %21 = vector.broadcast %20 : vector<1x128xf32> to vector<8x128xf32>
    %22 = arith.addf %19, %21 : vector<8x128xf32>
    %c0_17 = arith.constant 0 : index
    %c0_18 = arith.constant 0 : index
    %23 = vector.load %arg8[%c0_17, %c0_18] : memref<8x128xf32, #tpu.memory_space<vmem>>, vector<8x128xf32>
    tpu.vector_store %arg8[%c0_17, %c0_18], %22 {strides = array<i32>} : memref<8x128xf32, #tpu.memory_space<vmem>>, vector<8x128xf32>,
    return
  }
  func.func @transform_0(%arg0: i32) -> (i32, i32) {
    %c0_i32 = arith.constant 0 : i32
    %c0_i32_0 = arith.constant 0 : i32
    return %arg0, %c0_i32 : i32, i32
  }
  func.func @transform_1(%arg0: i32) -> (i32, i32) {
    %c0_i32 = arith.constant 0 : i32
    %c0_i32_0 = arith.constant 0 : i32
    %c0_i32_1 = arith.constant 0 : i32
    return %c0_i32, %c0_i32_0 : i32, i32
  }
  func.func @transform_2(%arg0: i32) -> (i32, i32) {
    %c0_i32 = arith.constant 0 : i32
    %c0_i32_0 = arith.constant 0 : i32
    %c0_i32_1 = arith.constant 0 : i32
    return %c0_i32, %c0_i32_0 : i32, i32
  }
  func.func @transform_3(%arg0: i32) -> (i32, i32) {
    %c0_i32 = arith.constant 0 : i32
    %c0_i32_0 = arith.constant 0 : i32
    %c0_i32_1 = arith.constant 0 : i32
    return %c0_i32, %c0_i32_0 : i32, i32
  }
  func.func @transform_4(%arg0: i32) -> (i32, i32) {
    %c0_i32 = arith.constant 0 : i32
    %c0_i32_0 = arith.constant 0 : i32
    %c0_i32_1 = arith.constant 0 : i32
    return %c0_i32, %c0_i32_0 : i32, i32
  }
  func.func @transform_5(%arg0: i32) -> (i32, i32) {
    %c0_i32 = arith.constant 0 : i32
    %c0_i32_0 = arith.constant 0 : i32
    %c0_i32_1 = arith.constant 0 : i32
    return %c0_i32, %c0_i32_0 : i32, i32
  }
  func.func @transform_6(%arg0: i32) -> (i32, i32) {
    %c0_i32 = arith.constant 0 : i32
    %c0_i32_0 = arith.constant 0 : i32
    %c0_i32_1 = arith.constant 0 : i32
    return %c0_i32, %c0_i32_0 : i32, i32
  }
  func.func @transform_7(%arg0: i32) -> (i32, i32) {
    %c0_i32 = arith.constant 0 : i32
    %c0_i32_0 = arith.constant 0 : i32
    return %arg0, %c0_i32 : i32, i32
  }
}

</mosaic_0001>

<llo_original>
// kernel: label_predictor_forward.1
$region0: #{label_predictor_forward.1}
  #allocation0 [shape = 'u32[]', space=smem, size = 0x4, offset = 0x4, fixed_abs, tag = 'smem constant byte address 0x4 - core index']
  #allocation1 [shape = 'u32[144,128]{1,0:T(1,128)}', space=vmem, size = 0x12000, scoped, tag = 'internal scratch']
  %s0 = inlined_call_operand.hbm [shape: f32[8,256], index: 0, kind: input, shape index: {}]
  %s1 = inlined_call_operand.hbm [shape: bf16[256,1024], index: 1, kind: input, shape index: {}]
  %s2 = inlined_call_operand.hbm [shape: f32[1,1024], index: 2, kind: input, shape index: {}]
  %s3 = inlined_call_operand.hbm [shape: bf16[1024,1024], index: 3, kind: input, shape index: {}]
  %s4 = inlined_call_operand.hbm [shape: f32[1,1024], index: 4, kind: input, shape index: {}]
  %s5 = inlined_call_operand.hbm [shape: bf16[1024,128], index: 5, kind: input, shape index: {}]
  %s6 = inlined_call_operand.hbm [shape: f32[1,128], index: 6, kind: input, shape index: {}]
  %s7 = inlined_call_operand.hbm [shape: f32[8,128], index: 7, kind: output, shape index: {}]
  %s8 = sld [smem:[#allocation0]]
  $region66: #{label_predictor_forward.1} parent=0
    _
  %s10 = ssub.s32 1, %s8
  %s11 = scalar_select 0, %s10, %s8
  $region1: #{label_predictor_forward.1} parent=0
    #allocation2 [shape = 'u8[8192]{0}', space=vmem, size = 0x2000, scoped, tag = 'input window, operand 0, single buffered']
    #allocation3 [shape = 's32[1]{0}', space=sflag, size = 0x4, scoped, tag = 'scoped memory for label_predictor_forward.1']
    #allocation4 [shape = 's32[1]{0}', space=sflag, size = 0x4, scoped, tag = 'scoped memory for label_predictor_forward.1']
    #allocation5 [shape = 'u8[524288]{0}', space=vmem, size = 0x80000, scoped, tag = 'input window, operand 1, single buffered']
    #allocation6 [shape = 's32[1]{0}', space=sflag, size = 0x4, scoped, tag = 'scoped memory for label_predictor_forward.1']
    #allocation7 [shape = 'u8[4096]{0}', space=vmem, size = 0x1000, scoped, tag = 'input window, operand 2, single buffered']
    #allocation8 [shape = 'u8[2097152]{0}', space=vmem, size = 0x200000, scoped, tag = 'input window, operand 3, single buffered']
    #allocation9 [shape = 's32[1]{0}', space=sflag, size = 0x4, scoped, tag = 'scoped memory for label_predictor_forward.1']
    #allocation10 [shape = 'u8[4096]{0}', space=vmem, size = 0x1000, scoped, tag = 'input window, operand 4, single buffered']
    #allocation11 [shape = 'u8[262144]{0}', space=vmem, size = 0x40000, scoped, tag = 'input window, operand 5, single buffered']
    #allocation12 [shape = 's32[1]{0}', space=sflag, size = 0x4, scoped, tag = 'scoped memory for label_predictor_forward.1']
    #allocation13 [shape = 'u8[512]{0}', space=vmem, size = 0x400, scoped, tag = 'input window, operand 6, single buffered']
    #allocation14 [shape = 'u8[4096]{0}', space=vmem, size = 0x1000, scoped, tag = 'output window, operand 0, single buffered']
    %12 = vsyncpa [#allocation3], 0
    %13 = vsyncpa [#allocation6], 0
    %14 = vsyncpa [#allocation9], 0
    %15 = vsyncpa [#allocation12], 0
    %16 = vsyncpa [#allocation4], 0
    // Predicated region
    $region2: #{label_predictor_forward.1} parent=1 // pred_check
      _
    $region3: #{label_predictor_forward.1} parent=1 // pred_check_branch
      %18 = sbr.rel (0) target = $region5
    $region4: #{label_predictor_forward.1} parent=1 // pred_region
      %s20 = ssub.s32 256, 256
      %21 = vsyncadd [#allocation3], %s20
      %s23 = sshll.u32 [#allocation2], 4
      %s24 = int_to_ptr.vmem [resolvable:$true] %s23
      %26 = dma.hbm_to_vmem [thread:$0]  %s0, 256, %s24, [#allocation3]
    $region5: #{label_predictor_forward.1} parent=1 // pred_fallthru
      _
    // Predicated region
    $region6: #{label_predictor_forward.1} parent=1 // pred_check
      _
    $region7: #{label_predictor_forward.1} parent=1 // pred_check_branch
      %28 = sbr.rel (0) target = $region9
    $region8: #{label_predictor_forward.1} parent=1 // pred_region
      %s30 = ssub.s32 16384, 16384
      %31 = vsyncadd [#allocation6], %s30
      %s32 = sshll.u32 [#allocation5], 4
      %s33 = int_to_ptr.vmem [resolvable:$true] %s32
      %38 = dma.hbm_to_vmem [thread:$0]  %s1, 16384, %s33, [#allocation6], 512, 512, 32
    $region9: #{label_predictor_forward.1} parent=1 // pred_fallthru
      _
    // Predicated region
    $region10: #{label_predictor_forward.1} parent=1 // pred_check
      _
    $region11: #{label_predictor_forward.1} parent=1 // pred_check_branch
      %40 = sbr.rel (0) target = $region13
    $region12: #{label_predictor_forward.1} parent=1 // pred_region
      %s42 = ssub.s32 128, 128
      %43 = vsyncadd [#allocation6], %s42
      %s45 = sshll.u32 [#allocation7], 4
      %s46 = int_to_ptr.vmem [resolvable:$true] %s45
      %48 = dma.hbm_to_vmem [thread:$0]  %s2, 128, %s46, [#allocation6]
    $region13: #{label_predictor_forward.1} parent=1 // pred_fallthru
      _
    // Predicated region
    $region14: #{label_predictor_forward.1} parent=1 // pred_check
      _
    $region15: #{label_predictor_forward.1} parent=1 // pred_check_branch
      %50 = sbr.rel (0) target = $region17
    $region16: #{label_predictor_forward.1} parent=1 // pred_region
      %s52 = ssub.s32 65536, 65536
      %53 = vsyncadd [#allocation9], %s52
      %s54 = sshll.u32 [#allocation8], 4
      %s55 = int_to_ptr.vmem [resolvable:$true] %s54
      %60 = dma.hbm_to_vmem [thread:$0]  %s3, 65536, %s55, [#allocation9], 512, 512, 32
    $region17: #{label_predictor_forward.1} parent=1 // pred_fallthru
      _
    // Predicated region
    $region18: #{label_predictor_forward.1} parent=1 // pred_check
      _
    $region19: #{label_predictor_forward.1} parent=1 // pred_check_branch
      %62 = sbr.rel (0) target = $region21
    $region20: #{label_predictor_forward.1} parent=1 // pred_region
      %s64 = ssub.s32 128, 128
      %65 = vsyncadd [#allocation9], %s64
      %s67 = sshll.u32 [#allocation10], 4
      %s68 = int_to_ptr.vmem [resolvable:$true] %s67
      %70 = dma.hbm_to_vmem [thread:$0]  %s4, 128, %s68, [#allocation9]
    $region21: #{label_predictor_forward.1} parent=1 // pred_fallthru
      _
    // Predicated region
    $region22: #{label_predictor_forward.1} parent=1 // pred_check
      _
    $region23: #{label_predictor_forward.1} parent=1 // pred_check_branch
      %72 = sbr.rel (0) target = $region25
    $region24: #{label_predictor_forward.1} parent=1 // pred_region
      %s74 = ssub.s32 8192, 8192
      %75 = vsyncadd [#allocation12], %s74
      %s76 = sshll.u32 [#allocation11], 4
      %s77 = int_to_ptr.vmem [resolvable:$true] %s76
      %82 = dma.hbm_to_vmem [thread:$0]  %s5, 8192, %s77, [#allocation12], 64, 64, 4
    $region25: #{label_predictor_forward.1} parent=1 // pred_fallthru
      _
    // Predicated region
    $region26: #{label_predictor_forward.1} parent=1 // pred_check
      _
    $region27: #{label_predictor_forward.1} parent=1 // pred_check_branch
      %84 = sbr.rel (0) target = $region29
    $region28: #{label_predictor_forward.1} parent=1 // pred_region
      %s86 = ssub.s32 16, 16
      %87 = vsyncadd [#allocation12], %s86
      %s89 = sshll.u32 [#allocation13], 4
      %s90 = int_to_ptr.vmem [resolvable:$true] %s89
      %92 = dma.hbm_to_vmem [thread:$0]  %s6, 16, %s90, [#allocation12]
    $region29: #{label_predictor_forward.1} parent=1 // pred_fallthru
      _
    // Predicated region
    $region30: #{label_predictor_forward.1} parent=1 // pred_check
      _
    $region31: #{label_predictor_forward.1} parent=1 // pred_check_branch
      %94 = sbr.rel (0) target = $region33
    $region32: #{label_predictor_forward.1} parent=1 // pred_region
      %95 = dma.done [#allocation3], 256
    $region33: #{label_predictor_forward.1} parent=1 // pred_fallthru
      _
    // Predicated region
    $region34: #{label_predictor_forward.1} parent=1 // pred_check
      _
    $region35: #{label_predictor_forward.1} parent=1 // pred_check_branch
      %97 = sbr.rel (0) target = $region37
    $region36: #{label_predictor_forward.1} parent=1 // pred_region
      %98 = dma.done [#allocation6], 16384
    $region37: #{label_predictor_forward.1} parent=1 // pred_fallthru
      _
    // Predicated region
    $region38: #{label_predictor_forward.1} parent=1 // pred_check
      _
    $region39: #{label_predictor_forward.1} parent=1 // pred_check_branch
      %100 = sbr.rel (0) target = $region41
    $region40: #{label_predictor_forward.1} parent=1 // pred_region
      %101 = dma.done [#allocation6], 128
    $region41: #{label_predictor_forward.1} parent=1 // pred_fallthru
      _
    // Predicated region
    $region42: #{label_predictor_forward.1} parent=1 // pred_check
      _
    $region43: #{label_predictor_forward.1} parent=1 // pred_check_branch
      %103 = sbr.rel (0) target = $region45
    $region44: #{label_predictor_forward.1} parent=1 // pred_region
      %104 = dma.done [#allocation9], 65536
    $region45: #{label_predictor_forward.1} parent=1 // pred_fallthru
      _
    // Predicated region
    $region46: #{label_predictor_forward.1} parent=1 // pred_check
      _
    $region47: #{label_predictor_forward.1} parent=1 // pred_check_branch
      %106 = sbr.rel (0) target = $region49
    $region48: #{label_predictor_forward.1} parent=1 // pred_region
      %107 = dma.done [#allocation9], 128
    $region49: #{label_predictor_forward.1} parent=1 // pred_fallthru
      _
    // Predicated region
    $region50: #{label_predictor_forward.1} parent=1 // pred_check
      _
    $region51: #{label_predictor_forward.1} parent=1 // pred_check_branch
      %109 = sbr.rel (0) target = $region53
    $region52: #{label_predictor_forward.1} parent=1 // pred_region
      %110 = dma.done [#allocation12], 8192
    $region53: #{label_predictor_forward.1} parent=1 // pred_fallthru
      _
    // Predicated region
    $region54: #{label_predictor_forward.1} parent=1 // pred_check
      _
    $region55: #{label_predictor_forward.1} parent=1 // pred_check_branch
      %112 = sbr.rel (0) target = $region57
    $region56: #{label_predictor_forward.1} parent=1 // pred_region
      %113 = dma.done [#allocation12], 16
    $region57: #{label_predictor_forward.1} parent=1 // pred_fallthru
      _
    %v115 = vld [vmem:[#allocation2] sm:$0xff]
    %v116 = vld [vmem:[#allocation2 + $0x8] sm:$0xff]
    %v117 = vpack.c.bf16 %v115, %v115
    %v118 = vpack.c.bf16 %v116, %v116
    %v119 = vld [vmem:[#allocation5] sm:$0xff]
    %v120 = vld [vmem:[#allocation5 + $0x8] sm:$0xff]
    %v121 = vld [vmem:[#allocation5 + $0x10] sm:$0xff]
    %v122 = vld [vmem:[#allocation5 + $0x18] sm:$0xff]
    %v123 = vld [vmem:[#allocation5 + $0x20] sm:$0xff]
    %v124 = vld [vmem:[#allocation5 + $0x28] sm:$0xff]
    %v125 = vld [vmem:[#allocation5 + $0x30] sm:$0xff]
    %v126 = vld [vmem:[#allocation5 + $0x38] sm:$0xff]
    %v127 = vld [vmem:[#allocation5 + $0x40] sm:$0xff]
    %v128 = vld [vmem:[#allocation5 + $0x48] sm:$0xff]
    %v129 = vld [vmem:[#allocation5 + $0x50] sm:$0xff]
    %v130 = vld [vmem:[#allocation5 + $0x58] sm:$0xff]
    %v131 = vld [vmem:[#allocation5 + $0x60] sm:$0xff]
    %v132 = vld [vmem:[#allocation5 + $0x68] sm:$0xff]
    %v133 = vld [vmem:[#allocation5 + $0x70] sm:$0xff]
    %v134 = vld [vmem:[#allocation5 + $0x78] sm:$0xff]
    %v135 = vld [vmem:[#allocation5 + $0x80] sm:$0xff]
    %v136 = vld [vmem:[#allocation5 + $0x88] sm:$0xff]
    %v137 = vld [vmem:[#allocation5 + $0x90] sm:$0xff]
    %v138 = vld [vmem:[#allocation5 + $0x98] sm:$0xff]
    %v139 = vld [vmem:[#allocation5 + $0xa0] sm:$0xff]
    %v140 = vld [vmem:[#allocation5 + $0xa8] sm:$0xff]
    %v141 = vld [vmem:[#allocation5 + $0xb0] sm:$0xff]
    %v142 = vld [vmem:[#allocation5 + $0xb8] sm:$0xff]
    %v143 = vld [vmem:[#allocation5 + $0xc0] sm:$0xff]
    %v144 = vld [vmem:[#allocation5 + $0xc8] sm:$0xff]
    %v145 = vld [vmem:[#allocation5 + $0xd0] sm:$0xff]
    %v146 = vld [vmem:[#allocation5 + $0xd8] sm:$0xff]
    %v147 = vld [vmem:[#allocation5 + $0xe0] sm:$0xff]
    %v148 = vld [vmem:[#allocation5 + $0xe8] sm:$0xff]
    %v149 = vld [vmem:[#allocation5 + $0xf0] sm:$0xff]
    %v150 = vld [vmem:[#allocation5 + $0xf8] sm:$0xff]
    %v151 = vld [vmem:[#allocation5 + $0x100] sm:$0xff]
    %v152 = vld [vmem:[#allocation5 + $0x108] sm:$0xff]
    %v153 = vld [vmem:[#allocation5 + $0x110] sm:$0xff]
    %v154 = vld [vmem:[#allocation5 + $0x118] sm:$0xff]
    %v155 = vld [vmem:[#allocation5 + $0x120] sm:$0xff]
    %v156 = vld [vmem:[#allocation5 + $0x128] sm:$0xff]
    %v157 = vld [vmem:[#allocation5 + $0x130] sm:$0xff]
    %v158 = vld [vmem:[#allocation5 + $0x138] sm:$0xff]
    %v159 = vld [vmem:[#allocation5 + $0x140] sm:$0xff]
    %v160 = vld [vmem:[#allocation5 + $0x148] sm:$0xff]
    %v161 = vld [vmem:[#allocation5 + $0x150] sm:$0xff]
    %v162 = vld [vmem:[#allocation5 + $0x158] sm:$0xff]
    %v163 = vld [vmem:[#allocation5 + $0x160] sm:$0xff]
    %v164 = vld [vmem:[#allocation5 + $0x168] sm:$0xff]
    %v165 = vld [vmem:[#allocation5 + $0x170] sm:$0xff]
    %v166 = vld [vmem:[#allocation5 + $0x178] sm:$0xff]
    %v167 = vld [vmem:[#allocation5 + $0x180] sm:$0xff]
    %v168 = vld [vmem:[#allocation5 + $0x188] sm:$0xff]
    %v169 = vld [vmem:[#allocation5 + $0x190] sm:$0xff]
    %v170 = vld [vmem:[#allocation5 + $0x198] sm:$0xff]
    %v171 = vld [vmem:[#allocation5 + $0x1a0] sm:$0xff]
    %v172 = vld [vmem:[#allocation5 + $0x1a8] sm:$0xff]
    %v173 = vld [vmem:[#allocation5 + $0x1b0] sm:$0xff]
    %v174 = vld [vmem:[#allocation5 + $0x1b8] sm:$0xff]
    %v175 = vld [vmem:[#allocation5 + $0x1c0] sm:$0xff]
    %v176 = vld [vmem:[#allocation5 + $0x1c8] sm:$0xff]
    %v177 = vld [vmem:[#allocation5 + $0x1d0] sm:$0xff]
    %v178 = vld [vmem:[#allocation5 + $0x1d8] sm:$0xff]
    %v179 = vld [vmem:[#allocation5 + $0x1e0] sm:$0xff]
    %v180 = vld [vmem:[#allocation5 + $0x1e8] sm:$0xff]
    %v181 = vld [vmem:[#allocation5 + $0x1f0] sm:$0xff]
    %v182 = vld [vmem:[#allocation5 + $0x1f8] sm:$0xff]
    %v183 = vld [vmem:[#allocation5 + $0x200] sm:$0xff]
    %v184 = vld [vmem:[#allocation5 + $0x208] sm:$0xff]
    %v185 = vld [vmem:[#allocation5 + $0x210] sm:$0xff]
    %v186 = vld [vmem:[#allocation5 + $0x218] sm:$0xff]
    %v187 = vld [vmem:[#allocation5 + $0x220] sm:$0xff]
    %v188 = vld [vmem:[#allocation5 + $0x228] sm:$0xff]
    %v189 = vld [vmem:[#allocation5 + $0x230] sm:$0xff]
    %v190 = vld [vmem:[#allocation5 + $0x238] sm:$0xff]
    %v191 = vld [vmem:[#allocation5 + $0x240] sm:$0xff]
    %v192 = vld [vmem:[#allocation5 + $0x248] sm:$0xff]
    %v193 = vld [vmem:[#allocation5 + $0x250] sm:$0xff]
    %v194 = vld [vmem:[#allocation5 + $0x258] sm:$0xff]
    %v195 = vld [vmem:[#allocation5 + $0x260] sm:$0xff]
    %v196 = vld [vmem:[#allocation5 + $0x268] sm:$0xff]
    %v197 = vld [vmem:[#allocation5 + $0x270] sm:$0xff]
    %v198 = vld [vmem:[#allocation5 + $0x278] sm:$0xff]
    %v199 = vld [vmem:[#allocation5 + $0x280] sm:$0xff]
    %v200 = vld [vmem:[#allocation5 + $0x288] sm:$0xff]
    %v201 = vld [vmem:[#allocation5 + $0x290] sm:$0xff]
    %v202 = vld [vmem:[#allocation5 + $0x298] sm:$0xff]
    %v203 = vld [vmem:[#allocation5 + $0x2a0] sm:$0xff]
    %v204 = vld [vmem:[#allocation5 + $0x2a8] sm:$0xff]
    %v205 = vld [vmem:[#allocation5 + $0x2b0] sm:$0xff]
    %v206 = vld [vmem:[#allocation5 + $0x2b8] sm:$0xff]
    %v207 = vld [vmem:[#allocation5 + $0x2c0] sm:$0xff]
    %v208 = vld [vmem:[#allocation5 + $0x2c8] sm:$0xff]
    %v209 = vld [vmem:[#allocation5 + $0x2d0] sm:$0xff]
    %v210 = vld [vmem:[#allocation5 + $0x2d8] sm:$0xff]
    %v211 = vld [vmem:[#allocation5 + $0x2e0] sm:$0xff]
    %v212 = vld [vmem:[#allocation5 + $0x2e8] sm:$0xff]
    %v213 = vld [vmem:[#allocation5 + $0x2f0] sm:$0xff]
    %v214 = vld [vmem:[#allocation5 + $0x2f8] sm:$0xff]
    %v215 = vld [vmem:[#allocation5 + $0x300] sm:$0xff]
    %v216 = vld [vmem:[#allocation5 + $0x308] sm:$0xff]
    %v217 = vld [vmem:[#allocation5 + $0x310] sm:$0xff]
    %v218 = vld [vmem:[#allocation5 + $0x318] sm:$0xff]
    %v219 = vld [vmem:[#allocation5 + $0x320] sm:$0xff]
    %v220 = vld [vmem:[#allocation5 + $0x328] sm:$0xff]
    %v221 = vld [vmem:[#allocation5 + $0x330] sm:$0xff]
    %v222 = vld [vmem:[#allocation5 + $0x338] sm:$0xff]
    %v223 = vld [vmem:[#allocation5 + $0x340] sm:$0xff]
    %v224 = vld [vmem:[#allocation5 + $0x348] sm:$0xff]
    %v225 = vld [vmem:[#allocation5 + $0x350] sm:$0xff]
    %v226 = vld [vmem:[#allocation5 + $0x358] sm:$0xff]
    %v227 = vld [vmem:[#allocation5 + $0x360] sm:$0xff]
    %v228 = vld [vmem:[#allocation5 + $0x368] sm:$0xff]
    %v229 = vld [vmem:[#allocation5 + $0x370] sm:$0xff]
    %v230 = vld [vmem:[#allocation5 + $0x378] sm:$0xff]
    %v231 = vld [vmem:[#allocation5 + $0x380] sm:$0xff]
    %v232 = vld [vmem:[#allocation5 + $0x388] sm:$0xff]
    %v233 = vld [vmem:[#allocation5 + $0x390] sm:$0xff]
    %v234 = vld [vmem:[#allocation5 + $0x398] sm:$0xff]
    %v235 = vld [vmem:[#allocation5 + $0x3a0] sm:$0xff]
    %v236 = vld [vmem:[#allocation5 + $0x3a8] sm:$0xff]
    %v237 = vld [vmem:[#allocation5 + $0x3b0] sm:$0xff]
    %v238 = vld [vmem:[#allocation5 + $0x3b8] sm:$0xff]
    %v239 = vld [vmem:[#allocation5 + $0x3c0] sm:$0xff]
    %v240 = vld [vmem:[#allocation5 + $0x3c8] sm:$0xff]
    %v241 = vld [vmem:[#allocation5 + $0x3d0] sm:$0xff]
    %v242 = vld [vmem:[#allocation5 + $0x3d8] sm:$0xff]
    %v243 = vld [vmem:[#allocation5 + $0x3e0] sm:$0xff]
    %v244 = vld [vmem:[#allocation5 + $0x3e8] sm:$0xff]
    %v245 = vld [vmem:[#allocation5 + $0x3f0] sm:$0xff]
    %v246 = vld [vmem:[#allocation5 + $0x3f8] sm:$0xff]
    %v247 = vld [vmem:[#allocation7] sm:$0xff]
    %v249 = vlaneseq
    %v250 = vshrl.u32 %v249, 7
    %v251 = vsub.s32 0, %v250
    %v252 = vrot.slane %v247, %v251
    %v253 = vlaneseq
    %v254 = vshrl.u32 %v253, 7
    %v255 = vsub.s32 1, %v254
    %v256 = vrot.slane %v247, %v255
    %v257 = vlaneseq
    %v258 = vshrl.u32 %v257, 7
    %v259 = vsub.s32 2, %v258
    %v260 = vrot.slane %v247, %v259
    %v261 = vlaneseq
    %v262 = vshrl.u32 %v261, 7
    %v263 = vsub.s32 3, %v262
    %v264 = vrot.slane %v247, %v263
    %v265 = vlaneseq
    %v266 = vshrl.u32 %v265, 7
    %v267 = vsub.s32 4, %v266
    %v268 = vrot.slane %v247, %v267
    %v269 = vlaneseq
    %v270 = vshrl.u32 %v269, 7
    %v271 = vsub.s32 5, %v270
    %v272 = vrot.slane %v247, %v271
    %v273 = vlaneseq
    %v274 = vshrl.u32 %v273, 7
    %v275 = vsub.s32 6, %v274
    %v276 = vrot.slane %v247, %v275
    %v277 = vlaneseq
    %v278 = vshrl.u32 %v277, 7
    %v279 = vsub.s32 7, %v278
    %v280 = vrot.slane %v247, %v279
    %v417 = vunpack.c.l.b16 %v119
    %v418 = vunpack.c.h.b16 %v119
    %v419 = vunpack.c.l.b16 %v120
    %v420 = vunpack.c.h.b16 %v120
    %v421 = vunpack.c.l.b16 %v121
    %v422 = vunpack.c.h.b16 %v121
    %v423 = vunpack.c.l.b16 %v122
    %v424 = vunpack.c.h.b16 %v122
    %v425 = vunpack.c.l.b16 %v123
    %v426 = vunpack.c.h.b16 %v123
    %v427 = vunpack.c.l.b16 %v124
    %v428 = vunpack.c.h.b16 %v124
    %v429 = vunpack.c.l.b16 %v125
    %v430 = vunpack.c.h.b16 %v125
    %v431 = vunpack.c.l.b16 %v126
    %v432 = vunpack.c.h.b16 %v126
    %v433 = vunpack.c.l.b16 %v127
    %v434 = vunpack.c.h.b16 %v127
    %v435 = vunpack.c.l.b16 %v128
    %v436 = vunpack.c.h.b16 %v128
    %v437 = vunpack.c.l.b16 %v129
    %v438 = vunpack.c.h.b16 %v129
    %v439 = vunpack.c.l.b16 %v130
    %v440 = vunpack.c.h.b16 %v130
    %v441 = vunpack.c.l.b16 %v131
    %v442 = vunpack.c.h.b16 %v131
    %v443 = vunpack.c.l.b16 %v132
    %v444 = vunpack.c.h.b16 %v132
    %v445 = vunpack.c.l.b16 %v133
    %v446 = vunpack.c.h.b16 %v133
    %v447 = vunpack.c.l.b16 %v134
    %v448 = vunpack.c.h.b16 %v134
    %v449 = vunpack.c.l.b16 %v135
    %v450 = vunpack.c.h.b16 %v135
    %v451 = vunpack.c.l.b16 %v136
    %v452 = vunpack.c.h.b16 %v136
    %v453 = vunpack.c.l.b16 %v137
    %v454 = vunpack.c.h.b16 %v137
    %v455 = vunpack.c.l.b16 %v138
    %v456 = vunpack.c.h.b16 %v138
    %v457 = vunpack.c.l.b16 %v139
    %v458 = vunpack.c.h.b16 %v139
    %v459 = vunpack.c.l.b16 %v140
    %v460 = vunpack.c.h.b16 %v140
    %v461 = vunpack.c.l.b16 %v141
    %v462 = vunpack.c.h.b16 %v141
    %v463 = vunpack.c.l.b16 %v142
    %v464 = vunpack.c.h.b16 %v142
    %v465 = vunpack.c.l.b16 %v143
    %v466 = vunpack.c.h.b16 %v143
    %v467 = vunpack.c.l.b16 %v144
    %v468 = vunpack.c.h.b16 %v144
    %v469 = vunpack.c.l.b16 %v145
    %v470 = vunpack.c.h.b16 %v145
    %v471 = vunpack.c.l.b16 %v146
    %v472 = vunpack.c.h.b16 %v146
    %v473 = vunpack.c.l.b16 %v147
    %v474 = vunpack.c.h.b16 %v147
    %v475 = vunpack.c.l.b16 %v148
    %v476 = vunpack.c.h.b16 %v148
    %v477 = vunpack.c.l.b16 %v149
    %v478 = vunpack.c.h.b16 %v149
    %v479 = vunpack.c.l.b16 %v150
    %v480 = vunpack.c.h.b16 %v150
    %v481 = vunpack.c.l.b16 %v151
    %v482 = vunpack.c.h.b16 %v151
    %v483 = vunpack.c.l.b16 %v152
    %v484 = vunpack.c.h.b16 %v152
    %v485 = vunpack.c.l.b16 %v153
    %v486 = vunpack.c.h.b16 %v153
    %v487 = vunpack.c.l.b16 %v154
    %v488 = vunpack.c.h.b16 %v154
    %v489 = vunpack.c.l.b16 %v155
    %v490 = vunpack.c.h.b16 %v155
    %v491 = vunpack.c.l.b16 %v156
    %v492 = vunpack.c.h.b16 %v156
    %v493 = vunpack.c.l.b16 %v157
    %v494 = vunpack.c.h.b16 %v157
    %v495 = vunpack.c.l.b16 %v158
    %v496 = vunpack.c.h.b16 %v158
    %v497 = vunpack.c.l.b16 %v159
    %v498 = vunpack.c.h.b16 %v159
    %v499 = vunpack.c.l.b16 %v160
    %v500 = vunpack.c.h.b16 %v160
    %v501 = vunpack.c.l.b16 %v161
    %v502 = vunpack.c.h.b16 %v161
    %v503 = vunpack.c.l.b16 %v162
    %v504 = vunpack.c.h.b16 %v162
    %v505 = vunpack.c.l.b16 %v163
    %v506 = vunpack.c.h.b16 %v163
    %v507 = vunpack.c.l.b16 %v164
    %v508 = vunpack.c.h.b16 %v164
    %v509 = vunpack.c.l.b16 %v165
    %v510 = vunpack.c.h.b16 %v165
    %v511 = vunpack.c.l.b16 %v166
    %v512 = vunpack.c.h.b16 %v166
    %v513 = vunpack.c.l.b16 %v167
    %v514 = vunpack.c.h.b16 %v167
    %v515 = vunpack.c.l.b16 %v168
    %v516 = vunpack.c.h.b16 %v168
    %v517 = vunpack.c.l.b16 %v169
    %v518 = vunpack.c.h.b16 %v169
    %v519 = vunpack.c.l.b16 %v170
    %v520 = vunpack.c.h.b16 %v170
    %v521 = vunpack.c.l.b16 %v171
    %v522 = vunpack.c.h.b16 %v171
    %v523 = vunpack.c.l.b16 %v172
    %v524 = vunpack.c.h.b16 %v172
    %v525 = vunpack.c.l.b16 %v173
    %v526 = vunpack.c.h.b16 %v173
    %v527 = vunpack.c.l.b16 %v174
    %v528 = vunpack.c.h.b16 %v174
    %v529 = vunpack.c.l.b16 %v175
    %v530 = vunpack.c.h.b16 %v175
    %v531 = vunpack.c.l.b16 %v176
    %v532 = vunpack.c.h.b16 %v176
    %v533 = vunpack.c.l.b16 %v177
    %v534 = vunpack.c.h.b16 %v177
    %v535 = vunpack.c.l.b16 %v178
    %v536 = vunpack.c.h.b16 %v178
    %v537 = vunpack.c.l.b16 %v179
    %v538 = vunpack.c.h.b16 %v179
    %v539 = vunpack.c.l.b16 %v180
    %v540 = vunpack.c.h.b16 %v180
    %v541 = vunpack.c.l.b16 %v181
    %v542 = vunpack.c.h.b16 %v181
    %v543 = vunpack.c.l.b16 %v182
    %v544 = vunpack.c.h.b16 %v182
    %v545 = vunpack.c.l.b16 %v183
    %v546 = vunpack.c.h.b16 %v183
    %v547 = vunpack.c.l.b16 %v184
    %v548 = vunpack.c.h.b16 %v184
    %v549 = vunpack.c.l.b16 %v185
    %v550 = vunpack.c.h.b16 %v185
    %v551 = vunpack.c.l.b16 %v186
    %v552 = vunpack.c.h.b16 %v186
    %v553 = vunpack.c.l.b16 %v187
    %v554 = vunpack.c.h.b16 %v187
    %v555 = vunpack.c.l.b16 %v188
    %v556 = vunpack.c.h.b16 %v188
    %v557 = vunpack.c.l.b16 %v189
    %v558 = vunpack.c.h.b16 %v189
    %v559 = vunpack.c.l.b16 %v190
    %v560 = vunpack.c.h.b16 %v190
    %v561 = vunpack.c.l.b16 %v191
    %v562 = vunpack.c.h.b16 %v191
    %v563 = vunpack.c.l.b16 %v192
    %v564 = vunpack.c.h.b16 %v192
    %v565 = vunpack.c.l.b16 %v193
    %v566 = vunpack.c.h.b16 %v193
    %v567 = vunpack.c.l.b16 %v194
    %v568 = vunpack.c.h.b16 %v194
    %v569 = vunpack.c.l.b16 %v195
    %v570 = vunpack.c.h.b16 %v195
    %v571 = vunpack.c.l.b16 %v196
    %v572 = vunpack.c.h.b16 %v196
    %v573 = vunpack.c.l.b16 %v197
    %v574 = vunpack.c.h.b16 %v197
    %v575 = vunpack.c.l.b16 %v198
    %v576 = vunpack.c.h.b16 %v198
    %v577 = vunpack.c.l.b16 %v199
    %v578 = vunpack.c.h.b16 %v199
    %v579 = vunpack.c.l.b16 %v200
    %v580 = vunpack.c.h.b16 %v200
    %v581 = vunpack.c.l.b16 %v201
    %v582 = vunpack.c.h.b16 %v201
    %v583 = vunpack.c.l.b16 %v202
    %v584 = vunpack.c.h.b16 %v202
    %v585 = vunpack.c.l.b16 %v203
    %v586 = vunpack.c.h.b16 %v203
    %v587 = vunpack.c.l.b16 %v204
    %v588 = vunpack.c.h.b16 %v204
    %v589 = vunpack.c.l.b16 %v205
    %v590 = vunpack.c.h.b16 %v205
    %v591 = vunpack.c.l.b16 %v206
    %v592 = vunpack.c.h.b16 %v206
    %v593 = vunpack.c.l.b16 %v207
    %v594 = vunpack.c.h.b16 %v207
    %v595 = vunpack.c.l.b16 %v208
    %v596 = vunpack.c.h.b16 %v208
    %v597 = vunpack.c.l.b16 %v209
    %v598 = vunpack.c.h.b16 %v209
    %v599 = vunpack.c.l.b16 %v210
    %v600 = vunpack.c.h.b16 %v210
    %v601 = vunpack.c.l.b16 %v211
    %v602 = vunpack.c.h.b16 %v211
    %v603 = vunpack.c.l.b16 %v212
    %v604 = vunpack.c.h.b16 %v212
    %v605 = vunpack.c.l.b16 %v213
    %v606 = vunpack.c.h.b16 %v213
    %v607 = vunpack.c.l.b16 %v214
    %v608 = vunpack.c.h.b16 %v214
    %v609 = vunpack.c.l.b16 %v215
    %v610 = vunpack.c.h.b16 %v215
    %v611 = vunpack.c.l.b16 %v216
    %v612 = vunpack.c.h.b16 %v216
    %v613 = vunpack.c.l.b16 %v217
    %v614 = vunpack.c.h.b16 %v217
    %v615 = vunpack.c.l.b16 %v218
    %v616 = vunpack.c.h.b16 %v218
    %v617 = vunpack.c.l.b16 %v219
    %v618 = vunpack.c.h.b16 %v219
    %v619 = vunpack.c.l.b16 %v220
    %v620 = vunpack.c.h.b16 %v220
    %v621 = vunpack.c.l.b16 %v221
    %v622 = vunpack.c.h.b16 %v221
    %v623 = vunpack.c.l.b16 %v222
    %v624 = vunpack.c.h.b16 %v222
    %v625 = vunpack.c.l.b16 %v223
    %v626 = vunpack.c.h.b16 %v223
    %v627 = vunpack.c.l.b16 %v224
    %v628 = vunpack.c.h.b16 %v224
    %v629 = vunpack.c.l.b16 %v225
    %v630 = vunpack.c.h.b16 %v225
    %v631 = vunpack.c.l.b16 %v226
    %v632 = vunpack.c.h.b16 %v226
    %v633 = vunpack.c.l.b16 %v227
    %v634 = vunpack.c.h.b16 %v227
    %v635 = vunpack.c.l.b16 %v228
    %v636 = vunpack.c.h.b16 %v228
    %v637 = vunpack.c.l.b16 %v229
    %v638 = vunpack.c.h.b16 %v229
    %v639 = vunpack.c.l.b16 %v230
    %v640 = vunpack.c.h.b16 %v230
    %v641 = vunpack.c.l.b16 %v231
    %v642 = vunpack.c.h.b16 %v231
    %v643 = vunpack.c.l.b16 %v232
    %v644 = vunpack.c.h.b16 %v232
    %v645 = vunpack.c.l.b16 %v233
    %v646 = vunpack.c.h.b16 %v233
    %v647 = vunpack.c.l.b16 %v234
    %v648 = vunpack.c.h.b16 %v234
    %v649 = vunpack.c.l.b16 %v235
    %v650 = vunpack.c.h.b16 %v235
    %v651 = vunpack.c.l.b16 %v236
    %v652 = vunpack.c.h.b16 %v236
    %v653 = vunpack.c.l.b16 %v237
    %v654 = vunpack.c.h.b16 %v237
    %v655 = vunpack.c.l.b16 %v238
    %v656 = vunpack.c.h.b16 %v238
    %v657 = vunpack.c.l.b16 %v239
    %v658 = vunpack.c.h.b16 %v239
    %v659 = vunpack.c.l.b16 %v240
    %v660 = vunpack.c.h.b16 %v240
    %v661 = vunpack.c.l.b16 %v241
    %v662 = vunpack.c.h.b16 %v241
    %v663 = vunpack.c.l.b16 %v242
    %v664 = vunpack.c.h.b16 %v242
    %v665 = vunpack.c.l.b16 %v243
    %v666 = vunpack.c.h.b16 %v243
    %v667 = vunpack.c.l.b16 %v244
    %v668 = vunpack.c.h.b16 %v244
    %v669 = vunpack.c.l.b16 %v245
    %v670 = vunpack.c.h.b16 %v245
    %v671 = vunpack.c.l.b16 %v246
    %v672 = vunpack.c.h.b16 %v246
    %v673 = vpack.c.b16 %v425, %v417
    %v674 = vpack.c.b16 %v426, %v418
    %v675 = vpack.c.b16 %v427, %v419
    %v676 = vpack.c.b16 %v428, %v420
    %v677 = vpack.c.b16 %v429, %v421
    %v678 = vpack.c.b16 %v430, %v422
    %v679 = vpack.c.b16 %v431, %v423
    %v680 = vpack.c.b16 %v432, %v424
    %v681 = vpack.c.b16 %v441, %v433
    %v682 = vpack.c.b16 %v442, %v434
    %v683 = vpack.c.b16 %v443, %v435
    %v684 = vpack.c.b16 %v444, %v436
    %v685 = vpack.c.b16 %v445, %v437
    %v686 = vpack.c.b16 %v446, %v438
    %v687 = vpack.c.b16 %v447, %v439
    %v688 = vpack.c.b16 %v448, %v440
    %v689 = vpack.c.b16 %v457, %v449
    %v690 = vpack.c.b16 %v458, %v450
    %v691 = vpack.c.b16 %v459, %v451
    %v692 = vpack.c.b16 %v460, %v452
    %v693 = vpack.c.b16 %v461, %v453
    %v694 = vpack.c.b16 %v462, %v454
    %v695 = vpack.c.b16 %v463, %v455
    %v696 = vpack.c.b16 %v464, %v456
    %v697 = vpack.c.b16 %v473, %v465
    %v698 = vpack.c.b16 %v474, %v466
    %v699 = vpack.c.b16 %v475, %v467
    %v700 = vpack.c.b16 %v476, %v468
    %v701 = vpack.c.b16 %v477, %v469
    %v702 = vpack.c.b16 %v478, %v470
    %v703 = vpack.c.b16 %v479, %v471
    %v704 = vpack.c.b16 %v480, %v472
    %v705 = vpack.c.b16 %v489, %v481
    %v706 = vpack.c.b16 %v490, %v482
    %v707 = vpack.c.b16 %v491, %v483
    %v708 = vpack.c.b16 %v492, %v484
    %v709 = vpack.c.b16 %v493, %v485
    %v710 = vpack.c.b16 %v494, %v486
    %v711 = vpack.c.b16 %v495, %v487
    %v712 = vpack.c.b16 %v496, %v488
    %v713 = vpack.c.b16 %v505, %v497
    %v714 = vpack.c.b16 %v506, %v498
    %v715 = vpack.c.b16 %v507, %v499
    %v716 = vpack.c.b16 %v508, %v500
    %v717 = vpack.c.b16 %v509, %v501
    %v718 = vpack.c.b16 %v510, %v502
    %v719 = vpack.c.b16 %v511, %v503
    %v720 = vpack.c.b16 %v512, %v504
    %v721 = vpack.c.b16 %v521, %v513
    %v722 = vpack.c.b16 %v522, %v514
    %v723 = vpack.c.b16 %v523, %v515
    %v724 = vpack.c.b16 %v524, %v516
    %v725 = vpack.c.b16 %v525, %v517
    %v726 = vpack.c.b16 %v526, %v518
    %v727 = vpack.c.b16 %v527, %v519
    %v728 = vpack.c.b16 %v528, %v520
    %v729 = vpack.c.b16 %v537, %v529
    %v730 = vpack.c.b16 %v538, %v530
    %v731 = vpack.c.b16 %v539, %v531
    %v732 = vpack.c.b16 %v540, %v532
    %v733 = vpack.c.b16 %v541, %v533
    %v734 = vpack.c.b16 %v542, %v534
    %v735 = vpack.c.b16 %v543, %v535
    %v736 = vpack.c.b16 %v544, %v536
    %v737 = vpack.c.b16 %v553, %v545
    %v738 = vpack.c.b16 %v554, %v546
    %v739 = vpack.c.b16 %v555, %v547
    %v740 = vpack.c.b16 %v556, %v548
    %v741 = vpack.c.b16 %v557, %v549
    %v742 = vpack.c.b16 %v558, %v550
    %v743 = vpack.c.b16 %v559, %v551
    %v744 = vpack.c.b16 %v560, %v552
    %v745 = vpack.c.b16 %v569, %v561
    %v746 = vpack.c.b16 %v570, %v562
    %v747 = vpack.c.b16 %v571, %v563
    %v748 = vpack.c.b16 %v572, %v564
    %v749 = vpack.c.b16 %v573, %v565
    %v750 = vpack.c.b16 %v574, %v566
    %v751 = vpack.c.b16 %v575, %v567
    %v752 = vpack.c.b16 %v576, %v568
    %v753 = vpack.c.b16 %v585, %v577
    %v754 = vpack.c.b16 %v586, %v578
    %v755 = vpack.c.b16 %v587, %v579
    %v756 = vpack.c.b16 %v588, %v580
    %v757 = vpack.c.b16 %v589, %v581
    %v758 = vpack.c.b16 %v590, %v582
    %v759 = vpack.c.b16 %v591, %v583
    %v760 = vpack.c.b16 %v592, %v584
    %v761 = vpack.c.b16 %v601, %v593
    %v762 = vpack.c.b16 %v602, %v594
    %v763 = vpack.c.b16 %v603, %v595
    %v764 = vpack.c.b16 %v604, %v596
    %v765 = vpack.c.b16 %v605, %v597
    %v766 = vpack.c.b16 %v606, %v598
    %v767 = vpack.c.b16 %v607, %v599
    %v768 = vpack.c.b16 %v608, %v600
    %v769 = vpack.c.b16 %v617, %v609
    %v770 = vpack.c.b16 %v618, %v610
    %v771 = vpack.c.b16 %v619, %v611
    %v772 = vpack.c.b16 %v620, %v612
    %v773 = vpack.c.b16 %v621, %v613
    %v774 = vpack.c.b16 %v622, %v614
    %v775 = vpack.c.b16 %v623, %v615
    %v776 = vpack.c.b16 %v624, %v616
    %v777 = vpack.c.b16 %v633, %v625
    %v778 = vpack.c.b16 %v634, %v626
    %v779 = vpack.c.b16 %v635, %v627
    %v780 = vpack.c.b16 %v636, %v628
    %v781 = vpack.c.b16 %v637, %v629
    %v782 = vpack.c.b16 %v638, %v630
    %v783 = vpack.c.b16 %v639, %v631
    %v784 = vpack.c.b16 %v640, %v632
    %v785 = vpack.c.b16 %v649, %v641
    %v786 = vpack.c.b16 %v650, %v642
    %v787 = vpack.c.b16 %v651, %v643
    %v788 = vpack.c.b16 %v652, %v644
    %v789 = vpack.c.b16 %v653, %v645
    %v790 = vpack.c.b16 %v654, %v646
    %v791 = vpack.c.b16 %v655, %v647
    %v792 = vpack.c.b16 %v656, %v648
    %v793 = vpack.c.b16 %v665, %v657
    %v794 = vpack.c.b16 %v666, %v658
    %v795 = vpack.c.b16 %v667, %v659
    %v796 = vpack.c.b16 %v668, %v660
    %v797 = vpack.c.b16 %v669, %v661
    %v798 = vpack.c.b16 %v670, %v662
    %v799 = vpack.c.b16 %v671, %v663
    %v800 = vpack.c.b16 %v672, %v664
    %929 = vmatprep.subr.bf16.mxu0 %v730
    %930 = vmatpush1.bf16.msra.mxu0 %v729
    %931 = vmatprep.subr.bf16.mxu0 %v722
    %932 = vmatpush1.bf16.msra.mxu0 %v721
    %933 = vmatprep.subr.bf16.mxu0 %v714
    %934 = vmatpush1.bf16.msra.mxu0 %v713
    %935 = vmatprep.subr.bf16.mxu0 %v706
    %936 = vmatpush1.bf16.msra.mxu0 %v705
    %937 = vmatprep.subr.bf16.mxu0 %v698
    %938 = vmatpush1.bf16.msra.mxu0 %v697
    %939 = vmatprep.subr.bf16.mxu0 %v690
    %940 = vmatpush1.bf16.msra.mxu0 %v689
    %941 = vmatprep.subr.bf16.mxu0 %v682
    %942 = vmatpush1.bf16.msra.mxu0 %v681
    %943 = vmatprep.subr.bf16.mxu0 %v674
    %944 = vmatpush1.bf16.msra.mxu0 %v673
    %945 = vmatprep.subr.bf16.mxu0 %v794
    %946 = vmatpush2.bf16.msra.mxu0 %v793
    %947 = vmatprep.subr.bf16.mxu0 %v786
    %948 = vmatpush2.bf16.msra.mxu0 %v785
    %949 = vmatprep.subr.bf16.mxu0 %v778
    %950 = vmatpush2.bf16.msra.mxu0 %v777
    %951 = vmatprep.subr.bf16.mxu0 %v770
    %952 = vmatpush2.bf16.msra.mxu0 %v769
    %953 = vmatprep.subr.bf16.mxu0 %v762
    %954 = vmatpush2.bf16.msra.mxu0 %v761
    %955 = vmatprep.subr.bf16.mxu0 %v754
    %956 = vmatpush2.bf16.msra.mxu0 %v753
    %957 = vmatprep.subr.bf16.mxu0 %v746
    %958 = vmatpush2.bf16.msra.mxu0 %v745
    %959 = vmatprep.subr.bf16.mxu0 %v738
    %960 = vmatpush2.bf16.msra.mxu0 %v737
    %961 = vmatprep.mubr.bf16.mxu0 %v118
    %962 = vmatmul.mubr.bf16.gmra.mxu0 %v117
    %v963 = vpop.f32.mrf.mxu0
    %v964 = vadd.f32 %v252, %v963
    %v965 = vpop.f32.mrf.mxu0
    %v966 = vadd.f32 %v256, %v965
    %v967 = vpop.f32.mrf.mxu0
    %v968 = vpop.f32.mrf.mxu0
    %969 = vdwg.mxu0
    %970 = vmatprep.subr.bf16.mxu0 %v732
    %971 = vmatpush1.bf16.msra.mxu0 %v731
    %972 = vmatprep.subr.bf16.mxu0 %v724
    %973 = vmatpush1.bf16.msra.mxu0 %v723
    %974 = vmatprep.subr.bf16.mxu0 %v716
    %975 = vmatpush1.bf16.msra.mxu0 %v715
    %976 = vmatprep.subr.bf16.mxu0 %v708
    %977 = vmatpush1.bf16.msra.mxu0 %v707
    %978 = vmatprep.subr.bf16.mxu0 %v700
    %979 = vmatpush1.bf16.msra.mxu0 %v699
    %980 = vmatprep.subr.bf16.mxu0 %v692
    %981 = vmatpush1.bf16.msra.mxu0 %v691
    %982 = vmatprep.subr.bf16.mxu0 %v684
    %983 = vmatpush1.bf16.msra.mxu0 %v683
    %984 = vmatprep.subr.bf16.mxu0 %v676
    %985 = vmatpush1.bf16.msra.mxu0 %v675
    %986 = vmatprep.subr.bf16.mxu0 %v796
    %987 = vmatpush2.bf16.msra.mxu0 %v795
    %988 = vmatprep.subr.bf16.mxu0 %v788
    %989 = vmatpush2.bf16.msra.mxu0 %v787
    %990 = vmatprep.subr.bf16.mxu0 %v780
    %991 = vmatpush2.bf16.msra.mxu0 %v779
    %992 = vmatprep.subr.bf16.mxu0 %v772
    %993 = vmatpush2.bf16.msra.mxu0 %v771
    %994 = vmatprep.subr.bf16.mxu0 %v764
    %995 = vmatpush2.bf16.msra.mxu0 %v763
    %996 = vmatprep.subr.bf16.mxu0 %v756
    %997 = vmatpush2.bf16.msra.mxu0 %v755
    %998 = vmatprep.subr.bf16.mxu0 %v748
    %999 = vmatpush2.bf16.msra.mxu0 %v747
    %1000 = vmatprep.subr.bf16.mxu0 %v740
    %1001 = vmatpush2.bf16.msra.mxu0 %v739
    %1002 = vmatprep.mubr.bf16.mxu0 %v118
    %1003 = vmatmul.mubr.bf16.gmra.mxu0 %v117
    %v1004 = vpop.f32.mrf.mxu0
    %v1005 = vadd.f32 %v260, %v1004
    %v1006 = vpop.f32.mrf.mxu0
    %v1007 = vadd.f32 %v264, %v1006
    %v1008 = vpop.f32.mrf.mxu0
    %v1009 = vpop.f32.mrf.mxu0
    %1010 = vdwg.mxu0
    %1011 = vmatprep.subr.bf16.mxu0 %v734
    %1012 = vmatpush1.bf16.msra.mxu0 %v733
    %1013 = vmatprep.subr.bf16.mxu0 %v726
    %1014 = vmatpush1.bf16.msra.mxu0 %v725
    %1015 = vmatprep.subr.bf16.mxu0 %v718
    %1016 = vmatpush1.bf16.msra.mxu0 %v717
    %1017 = vmatprep.subr.bf16.mxu0 %v710
    %1018 = vmatpush1.bf16.msra.mxu0 %v709
    %1019 = vmatprep.subr.bf16.mxu0 %v702
    %1020 = vmatpush1.bf16.msra.mxu0 %v701
    %1021 = vmatprep.subr.bf16.mxu0 %v694
    %1022 = vmatpush1.bf16.msra.mxu0 %v693
    %1023 = vmatprep.subr.bf16.mxu0 %v686
    %1024 = vmatpush1.bf16.msra.mxu0 %v685
    %1025 = vmatprep.subr.bf16.mxu0 %v678
    %1026 = vmatpush1.bf16.msra.mxu0 %v677
    %1027 = vmatprep.subr.bf16.mxu0 %v798
    %1028 = vmatpush2.bf16.msra.mxu0 %v797
    %1029 = vmatprep.subr.bf16.mxu0 %v790
    %1030 = vmatpush2.bf16.msra.mxu0 %v789
    %1031 = vmatprep.subr.bf16.mxu0 %v782
    %1032 = vmatpush2.bf16.msra.mxu0 %v781
    %1033 = vmatprep.subr.bf16.mxu0 %v774
    %1034 = vmatpush2.bf16.msra.mxu0 %v773
    %1035 = vmatprep.subr.bf16.mxu0 %v766
    %1036 = vmatpush2.bf16.msra.mxu0 %v765
    %1037 = vmatprep.subr.bf16.mxu0 %v758
    %1038 = vmatpush2.bf16.msra.mxu0 %v757
    %1039 = vmatprep.subr.bf16.mxu0 %v750
    %1040 = vmatpush2.bf16.msra.mxu0 %v749
    %1041 = vmatprep.subr.bf16.mxu0 %v742
    %1042 = vmatpush2.bf16.msra.mxu0 %v741
    %1043 = vmatprep.mubr.bf16.mxu0 %v118
    %1044 = vmatmul.mubr.bf16.gmra.mxu0 %v117
    %v1045 = vpop.f32.mrf.mxu0
    %v1046 = vadd.f32 %v268, %v1045
    %v1047 = vpop.f32.mrf.mxu0
    %v1048 = vadd.f32 %v272, %v1047
    %v1049 = vpop.f32.mrf.mxu0
    %v1050 = vpop.f32.mrf.mxu0
    %1051 = vdwg.mxu0
    %1052 = vmatprep.subr.bf16.mxu0 %v736
    %1053 = vmatpush1.bf16.msra.mxu0 %v735
    %1054 = vmatprep.subr.bf16.mxu0 %v728
    %1055 = vmatpush1.bf16.msra.mxu0 %v727
    %1056 = vmatprep.subr.bf16.mxu0 %v720
    %1057 = vmatpush1.bf16.msra.mxu0 %v719
    %1058 = vmatprep.subr.bf16.mxu0 %v712
    %1059 = vmatpush1.bf16.msra.mxu0 %v711
    %1060 = vmatprep.subr.bf16.mxu0 %v704
    %1061 = vmatpush1.bf16.msra.mxu0 %v703
    %1062 = vmatprep.subr.bf16.mxu0 %v696
    %1063 = vmatpush1.bf16.msra.mxu0 %v695
    %1064 = vmatprep.subr.bf16.mxu0 %v688
    %1065 = vmatpush1.bf16.msra.mxu0 %v687
    %1066 = vmatprep.subr.bf16.mxu0 %v680
    %1067 = vmatpush1.bf16.msra.mxu0 %v679
    %1068 = vmatprep.subr.bf16.mxu0 %v800
    %1069 = vmatpush2.bf16.msra.mxu0 %v799
    %1070 = vmatprep.subr.bf16.mxu0 %v792
    %1071 = vmatpush2.bf16.msra.mxu0 %v791
    %1072 = vmatprep.subr.bf16.mxu0 %v784
    %1073 = vmatpush2.bf16.msra.mxu0 %v783
    %1074 = vmatprep.subr.bf16.mxu0 %v776
    %1075 = vmatpush2.bf16.msra.mxu0 %v775
    %1076 = vmatprep.subr.bf16.mxu0 %v768
    %1077 = vmatpush2.bf16.msra.mxu0 %v767
    %1078 = vmatprep.subr.bf16.mxu0 %v760
    %1079 = vmatpush2.bf16.msra.mxu0 %v759
    %1080 = vmatprep.subr.bf16.mxu0 %v752
    %1081 = vmatpush2.bf16.msra.mxu0 %v751
    %1082 = vmatprep.subr.bf16.mxu0 %v744
    %1083 = vmatpush2.bf16.msra.mxu0 %v743
    %1084 = vmatprep.mubr.bf16.mxu0 %v118
    %1085 = vmatmul.mubr.bf16.gmra.mxu0 %v117
    %v1086 = vpop.f32.mrf.mxu0
    %v1087 = vadd.f32 %v276, %v1086
    %v1088 = vpop.f32.mrf.mxu0
    %v1089 = vadd.f32 %v280, %v1088
    %v1090 = vpop.f32.mrf.mxu0
    %v1091 = vpop.f32.mrf.mxu0
    %1092 = vdwg.mxu0
    %v1093 = vmax.f32 %v964, 0.0
    %v1094 = vmax.f32 %v966, 0.0
    %v1095 = vmax.f32 %v1005, 0.0
    %v1096 = vmax.f32 %v1007, 0.0
    %v1097 = vmax.f32 %v1046, 0.0
    %v1098 = vmax.f32 %v1048, 0.0
    %v1099 = vmax.f32 %v1087, 0.0
    %v1100 = vmax.f32 %v1089, 0.0
    %v1101 = vpack.c.bf16 %v1093, %v1093
    %v1102 = vpack.c.bf16 %v1094, %v1094
    %v1103 = vpack.c.bf16 %v1095, %v1095
    %v1104 = vpack.c.bf16 %v1096, %v1096
    %v1105 = vpack.c.bf16 %v1097, %v1097
    %v1106 = vpack.c.bf16 %v1098, %v1098
    %v1107 = vpack.c.bf16 %v1099, %v1099
    %v1108 = vpack.c.bf16 %v1100, %v1100
    %v1109 = vld [vmem:[#allocation8] sm:$0xff]
    %v1110 = vld [vmem:[#allocation8 + $0x8] sm:$0xff]
    %v1111 = vld [vmem:[#allocation8 + $0x10] sm:$0xff]
    %v1112 = vld [vmem:[#allocation8 + $0x18] sm:$0xff]
    %v1113 = vld [vmem:[#allocation8 + $0x20] sm:$0xff]
    %v1114 = vld [vmem:[#allocation8 + $0x28] sm:$0xff]
    %v1115 = vld [vmem:[#allocation8 + $0x30] sm:$0xff]
    %v1116 = vld [vmem:[#allocation8 + $0x38] sm:$0xff]
    %v1117 = vld [vmem:[#allocation8 + $0x40] sm:$0xff]
    %v1118 = vld [vmem:[#allocation8 + $0x48] sm:$0xff]
    %v1119 = vld [vmem:[#allocation8 + $0x50] sm:$0xff]
    %v1120 = vld [vmem:[#allocation8 + $0x58] sm:$0xff]
    %v1121 = vld [vmem:[#allocation8 + $0x60] sm:$0xff]
    %v1122 = vld [vmem:[#allocation8 + $0x68] sm:$0xff]
    %v1123 = vld [vmem:[#allocation8 + $0x70] sm:$0xff]
    %v1124 = vld [vmem:[#allocation8 + $0x78] sm:$0xff]
    %v1125 = vld [vmem:[#allocation8 + $0x80] sm:$0xff]
    %v1126 = vld [vmem:[#allocation8 + $0x88] sm:$0xff]
    %v1127 = vld [vmem:[#allocation8 + $0x90] sm:$0xff]
    %v1128 = vld [vmem:[#allocation8 + $0x98] sm:$0xff]
    %v1129 = vld [vmem:[#allocation8 + $0xa0] sm:$0xff]
    %v1130 = vld [vmem:[#allocation8 + $0xa8] sm:$0xff]
    %v1131 = vld [vmem:[#allocation8 + $0xb0] sm:$0xff]
    %v1132 = vld [vmem:[#allocation8 + $0xb8] sm:$0xff]
    %v1133 = vld [vmem:[#allocation8 + $0xc0] sm:$0xff]
    %v1134 = vld [vmem:[#allocation8 + $0xc8] sm:$0xff]
    %v1135 = vld [vmem:[#allocation8 + $0xd0] sm:$0xff]
    %v1136 = vld [vmem:[#allocation8 + $0xd8] sm:$0xff]
    %v1137 = vld [vmem:[#allocation8 + $0xe0] sm:$0xff]
    %v1138 = vld [vmem:[#allocation8 + $0xe8] sm:$0xff]
    %v1139 = vld [vmem:[#allocation8 + $0xf0] sm:$0xff]
    %v1140 = vld [vmem:[#allocation8 + $0xf8] sm:$0xff]
    %v1141 = vld [vmem:[#allocation8 + $0x100] sm:$0xff]
    %v1142 = vld [vmem:[#allocation8 + $0x108] sm:$0xff]
    %v1143 = vld [vmem:[#allocation8 + $0x110] sm:$0xff]
    %v1144 = vld [vmem:[#allocation8 + $0x118] sm:$0xff]
    %v1145 = vld [vmem:[#allocation8 + $0x120] sm:$0xff]
    %v1146 = vld [vmem:[#allocation8 + $0x128] sm:$0xff]
    %v1147 = vld [vmem:[#allocation8 + $0x130] sm:$0xff]
    %v1148 = vld [vmem:[#allocation8 + $0x138] sm:$0xff]
    %v1149 = vld [vmem:[#allocation8 + $0x140] sm:$0xff]
    %v1150 = vld [vmem:[#allocation8 + $0x148] sm:$0xff]
    %v1151 = vld [vmem:[#allocation8 + $0x150] sm:$0xff]
    %v1152 = vld [vmem:[#allocation8 + $0x158] sm:$0xff]
    %v1153 = vld [vmem:[#allocation8 + $0x160] sm:$0xff]
    %v1154 = vld [vmem:[#allocation8 + $0x168] sm:$0xff]
    %v1155 = vld [vmem:[#allocation8 + $0x170] sm:$0xff]
    %v1156 = vld [vmem:[#allocation8 + $0x178] sm:$0xff]
    %v1157 = vld [vmem:[#allocation8 + $0x180] sm:$0xff]
    %v1158 = vld [vmem:[#allocation8 + $0x188] sm:$0xff]
    %v1159 = vld [vmem:[#allocation8 + $0x190] sm:$0xff]
    %v1160 = vld [vmem:[#allocation8 + $0x198] sm:$0xff]
    %v1161 = vld [vmem:[#allocation8 + $0x1a0] sm:$0xff]
    %v1162 = vld [vmem:[#allocation8 + $0x1a8] sm:$0xff]
    %v1163 = vld [vmem:[#allocation8 + $0x1b0] sm:$0xff]
    %v1164 = vld [vmem:[#allocation8 + $0x1b8] sm:$0xff]
    %v1165 = vld [vmem:[#allocation8 + $0x1c0] sm:$0xff]
    %v1166 = vld [vmem:[#allocation8 + $0x1c8] sm:$0xff]
    %v1167 = vld [vmem:[#allocation8 + $0x1d0] sm:$0xff]
    %v1168 = vld [vmem:[#allocation8 + $0x1d8] sm:$0xff]
    %v1169 = vld [vmem:[#allocation8 + $0x1e0] sm:$0xff]
    %v1170 = vld [vmem:[#allocation8 + $0x1e8] sm:$0xff]
    %v1171 = vld [vmem:[#allocation8 + $0x1f0] sm:$0xff]
    %v1172 = vld [vmem:[#allocation8 + $0x1f8] sm:$0xff]
    %v1173 = vld [vmem:[#allocation8 + $0x200] sm:$0xff]
    %v1174 = vld [vmem:[#allocation8 + $0x208] sm:$0xff]
    %v1175 = vld [vmem:[#allocation8 + $0x210] sm:$0xff]
    %v1176 = vld [vmem:[#allocation8 + $0x218] sm:$0xff]
    %v1177 = vld [vmem:[#allocation8 + $0x220] sm:$0xff]
    %v1178 = vld [vmem:[#allocation8 + $0x228] sm:$0xff]
    %v1179 = vld [vmem:[#allocation8 + $0x230] sm:$0xff]
    %v1180 = vld [vmem:[#allocation8 + $0x238] sm:$0xff]
    %v1181 = vld [vmem:[#allocation8 + $0x240] sm:$0xff]
    %v1182 = vld [vmem:[#allocation8 + $0x248] sm:$0xff]
    %v1183 = vld [vmem:[#allocation8 + $0x250] sm:$0xff]
    %v1184 = vld [vmem:[#allocation8 + $0x258] sm:$0xff]
    %v1185 = vld [vmem:[#allocation8 + $0x260] sm:$0xff]
    %v1186 = vld [vmem:[#allocation8 + $0x268] sm:$0xff]
    %v1187 = vld [vmem:[#allocation8 + $0x270] sm:$0xff]
    %v1188 = vld [vmem:[#allocation8 + $0x278] sm:$0xff]
    %v1189 = vld [vmem:[#allocation8 + $0x280] sm:$0xff]
    %v1190 = vld [vmem:[#allocation8 + $0x288] sm:$0xff]
    %v1191 = vld [vmem:[#allocation8 + $0x290] sm:$0xff]
    %v1192 = vld [vmem:[#allocation8 + $0x298] sm:$0xff]
    %v1193 = vld [vmem:[#allocation8 + $0x2a0] sm:$0xff]
    %v1194 = vld [vmem:[#allocation8 + $0x2a8] sm:$0xff]
    %v1195 = vld [vmem:[#allocation8 + $0x2b0] sm:$0xff]
    %v1196 = vld [vmem:[#allocation8 + $0x2b8] sm:$0xff]
    %v1197 = vld [vmem:[#allocation8 + $0x2c0] sm:$0xff]
    %v1198 = vld [vmem:[#allocation8 + $0x2c8] sm:$0xff]
    %v1199 = vld [vmem:[#allocation8 + $0x2d0] sm:$0xff]
    %v1200 = vld [vmem:[#allocation8 + $0x2d8] sm:$0xff]
    %v1201 = vld [vmem:[#allocation8 + $0x2e0] sm:$0xff]
    %v1202 = vld [vmem:[#allocation8 + $0x2e8] sm:$0xff]
    %v1203 = vld [vmem:[#allocation8 + $0x2f0] sm:$0xff]
    %v1204 = vld [vmem:[#allocation8 + $0x2f8] sm:$0xff]
    %v1205 = vld [vmem:[#allocation8 + $0x300] sm:$0xff]
    %v1206 = vld [vmem:[#allocation8 + $0x308] sm:$0xff]
    %v1207 = vld [vmem:[#allocation8 + $0x310] sm:$0xff]
    %v1208 = vld [vmem:[#allocation8 + $0x318] sm:$0xff]
    %v1209 = vld [vmem:[#allocation8 + $0x320] sm:$0xff]
    %v1210 = vld [vmem:[#allocation8 + $0x328] sm:$0xff]
    %v1211 = vld [vmem:[#allocation8 + $0x330] sm:$0xff]
    %v1212 = vld [vmem:[#allocation8 + $0x338] sm:$0xff]
    %v1213 = vld [vmem:[#allocation8 + $0x340] sm:$0xff]
    %v1214 = vld [vmem:[#allocation8 + $0x348] sm:$0xff]
    %v1215 = vld [vmem:[#allocation8 + $0x350] sm:$0xff]
    %v1216 = vld [vmem:[#allocation8 + $0x358] sm:$0xff]
    %v1217 = vld [vmem:[#allocation8 + $0x360] sm:$0xff]
    %v1218 = vld [vmem:[#allocation8 + $0x368] sm:$0xff]
    %v1219 = vld [vmem:[#allocation8 + $0x370] sm:$0xff]
    %v1220 = vld [vmem:[#allocation8 + $0x378] sm:$0xff]
    %v1221 = vld [vmem:[#allocation8 + $0x380] sm:$0xff]
    %v1222 = vld [vmem:[#allocation8 + $0x388] sm:$0xff]
    %v1223 = vld [vmem:[#allocation8 + $0x390] sm:$0xff]
    %v1224 = vld [vmem:[#allocation8 + $0x398] sm:$0xff]
    %v1225 = vld [vmem:[#allocation8 + $0x3a0] sm:$0xff]
    %v1226 = vld [vmem:[#allocation8 + $0x3a8] sm:$0xff]
    %v1227 = vld [vmem:[#allocation8 + $0x3b0] sm:$0xff]
    %v1228 = vld [vmem:[#allocation8 + $0x3b8] sm:$0xff]
    %v1229 = vld [vmem:[#allocation8 + $0x3c0] sm:$0xff]
    %v1230 = vld [vmem:[#allocation8 + $0x3c8] sm:$0xff]
    %v1231 = vld [vmem:[#allocation8 + $0x3d0] sm:$0xff]
    %v1232 = vld [vmem:[#allocation8 + $0x3d8] sm:$0xff]
    %v1233 = vld [vmem:[#allocation8 + $0x3e0] sm:$0xff]
    %v1234 = vld [vmem:[#allocation8 + $0x3e8] sm:$0xff]
    %v1235 = vld [vmem:[#allocation8 + $0x3f0] sm:$0xff]
    %v1236 = vld [vmem:[#allocation8 + $0x3f8] sm:$0xff]
    %v1237 = vld [vmem:[#allocation8 + $0x400] sm:$0xff]
    %v1238 = vld [vmem:[#allocation8 + $0x408] sm:$0xff]
    %v1239 = vld [vmem:[#allocation8 + $0x410] sm:$0xff]
    %v1240 = vld [vmem:[#allocation8 + $0x418] sm:$0xff]
    %v1241 = vld [vmem:[#allocation8 + $0x420] sm:$0xff]
    %v1242 = vld [vmem:[#allocation8 + $0x428] sm:$0xff]
    %v1243 = vld [vmem:[#allocation8 + $0x430] sm:$0xff]
    %v1244 = vld [vmem:[#allocation8 + $0x438] sm:$0xff]
    %v1245 = vld [vmem:[#allocation8 + $0x440] sm:$0xff]
    %v1246 = vld [vmem:[#allocation8 + $0x448] sm:$0xff]
    %v1247 = vld [vmem:[#allocation8 + $0x450] sm:$0xff]
    %v1248 = vld [vmem:[#allocation8 + $0x458] sm:$0xff]
    %v1249 = vld [vmem:[#allocation8 + $0x460] sm:$0xff]
    %v1250 = vld [vmem:[#allocation8 + $0x468] sm:$0xff]
    %v1251 = vld [vmem:[#allocation8 + $0x470] sm:$0xff]
    %v1252 = vld [vmem:[#allocation8 + $0x478] sm:$0xff]
    %v1253 = vld [vmem:[#allocation8 + $0x480] sm:$0xff]
    %v1254 = vld [vmem:[#allocation8 + $0x488] sm:$0xff]
    %v1255 = vld [vmem:[#allocation8 + $0x490] sm:$0xff]
    %v1256 = vld [vmem:[#allocation8 + $0x498] sm:$0xff]
    %v1257 = vld [vmem:[#allocation8 + $0x4a0] sm:$0xff]
    %v1258 = vld [vmem:[#allocation8 + $0x4a8] sm:$0xff]
    %v1259 = vld [vmem:[#allocation8 + $0x4b0] sm:$0xff]
    %v1260 = vld [vmem:[#allocation8 + $0x4b8] sm:$0xff]
    %v1261 = vld [vmem:[#allocation8 + $0x4c0] sm:$0xff]
    %v1262 = vld [vmem:[#allocation8 + $0x4c8] sm:$0xff]
    %v1263 = vld [vmem:[#allocation8 + $0x4d0] sm:$0xff]
    %v1264 = vld [vmem:[#allocation8 + $0x4d8] sm:$0xff]
    %v1265 = vld [vmem:[#allocation8 + $0x4e0] sm:$0xff]
    %v1266 = vld [vmem:[#allocation8 + $0x4e8] sm:$0xff]
    %v1267 = vld [vmem:[#allocation8 + $0x4f0] sm:$0xff]
    %v1268 = vld [vmem:[#allocation8 + $0x4f8] sm:$0xff]
    %v1269 = vld [vmem:[#allocation8 + $0x500] sm:$0xff]
    %v1270 = vld [vmem:[#allocation8 + $0x508] sm:$0xff]
    %v1271 = vld [vmem:[#allocation8 + $0x510] sm:$0xff]
    %v1272 = vld [vmem:[#allocation8 + $0x518] sm:$0xff]
    %v1273 = vld [vmem:[#allocation8 + $0x520] sm:$0xff]
    %v1274 = vld [vmem:[#allocation8 + $0x528] sm:$0xff]
    %v1275 = vld [vmem:[#allocation8 + $0x530] sm:$0xff]
    %v1276 = vld [vmem:[#allocation8 + $0x538] sm:$0xff]
    %v1277 = vld [vmem:[#allocation8 + $0x540] sm:$0xff]
    %v1278 = vld [vmem:[#allocation8 + $0x548] sm:$0xff]
    %v1279 = vld [vmem:[#allocation8 + $0x550] sm:$0xff]
    %v1280 = vld [vmem:[#allocation8 + $0x558] sm:$0xff]
    %v1281 = vld [vmem:[#allocation8 + $0x560] sm:$0xff]
    %v1282 = vld [vmem:[#allocation8 + $0x568] sm:$0xff]
    %v1283 = vld [vmem:[#allocation8 + $0x570] sm:$0xff]
    %v1284 = vld [vmem:[#allocation8 + $0x578] sm:$0xff]
    %v1285 = vld [vmem:[#allocation8 + $0x580] sm:$0xff]
    %v1286 = vld [vmem:[#allocation8 + $0x588] sm:$0xff]
    %v1287 = vld [vmem:[#allocation8 + $0x590] sm:$0xff]
    %v1288 = vld [vmem:[#allocation8 + $0x598] sm:$0xff]
    %v1289 = vld [vmem:[#allocation8 + $0x5a0] sm:$0xff]
    %v1290 = vld [vmem:[#allocation8 + $0x5a8] sm:$0xff]
    %v1291 = vld [vmem:[#allocation8 + $0x5b0] sm:$0xff]
    %v1292 = vld [vmem:[#allocation8 + $0x5b8] sm:$0xff]
    %v1293 = vld [vmem:[#allocation8 + $0x5c0] sm:$0xff]
    %v1294 = vld [vmem:[#allocation8 + $0x5c8] sm:$0xff]
    %v1295 = vld [vmem:[#allocation8 + $0x5d0] sm:$0xff]
    %v1296 = vld [vmem:[#allocation8 + $0x5d8] sm:$0xff]
    %v1297 = vld [vmem:[#allocation8 + $0x5e0] sm:$0xff]
    %v1298 = vld [vmem:[#allocation8 + $0x5e8] sm:$0xff]
    %v1299 = vld [vmem:[#allocation8 + $0x5f0] sm:$0xff]
    %v1300 = vld [vmem:[#allocation8 + $0x5f8] sm:$0xff]
    %v1301 = vld [vmem:[#allocation8 + $0x600] sm:$0xff]
    %v1302 = vld [vmem:[#allocation8 + $0x608] sm:$0xff]
    %v1303 = vld [vmem:[#allocation8 + $0x610] sm:$0xff]
    %v1304 = vld [vmem:[#allocation8 + $0x618] sm:$0xff]
    %v1305 = vld [vmem:[#allocation8 + $0x620] sm:$0xff]
    %v1306 = vld [vmem:[#allocation8 + $0x628] sm:$0xff]
    %v1307 = vld [vmem:[#allocation8 + $0x630] sm:$0xff]
    %v1308 = vld [vmem:[#allocation8 + $0x638] sm:$0xff]
    %v1309 = vld [vmem:[#allocation8 + $0x640] sm:$0xff]
    %v1310 = vld [vmem:[#allocation8 + $0x648] sm:$0xff]
    %v1311 = vld [vmem:[#allocation8 + $0x650] sm:$0xff]
    %v1312 = vld [vmem:[#allocation8 + $0x658] sm:$0xff]
    %v1313 = vld [vmem:[#allocation8 + $0x660] sm:$0xff]
    %v1314 = vld [vmem:[#allocation8 + $0x668] sm:$0xff]
    %v1315 = vld [vmem:[#allocation8 + $0x670] sm:$0xff]
    %v1316 = vld [vmem:[#allocation8 + $0x678] sm:$0xff]
    %v1317 = vld [vmem:[#allocation8 + $0x680] sm:$0xff]
    %v1318 = vld [vmem:[#allocation8 + $0x688] sm:$0xff]
    %v1319 = vld [vmem:[#allocation8 + $0x690] sm:$0xff]
    %v1320 = vld [vmem:[#allocation8 + $0x698] sm:$0xff]
    %v1321 = vld [vmem:[#allocation8 + $0x6a0] sm:$0xff]
    %v1322 = vld [vmem:[#allocation8 + $0x6a8] sm:$0xff]
    %v1323 = vld [vmem:[#allocation8 + $0x6b0] sm:$0xff]
    %v1324 = vld [vmem:[#allocation8 + $0x6b8] sm:$0xff]
    %v1325 = vld [vmem:[#allocation8 + $0x6c0] sm:$0xff]
    %v1326 = vld [vmem:[#allocation8 + $0x6c8] sm:$0xff]
    %v1327 = vld [vmem:[#allocation8 + $0x6d0] sm:$0xff]
    %v1328 = vld [vmem:[#allocation8 + $0x6d8] sm:$0xff]
    %v1329 = vld [vmem:[#allocation8 + $0x6e0] sm:$0xff]
    %v1330 = vld [vmem:[#allocation8 + $0x6e8] sm:$0xff]
    %v1331 = vld [vmem:[#allocation8 + $0x6f0] sm:$0xff]
    %v1332 = vld [vmem:[#allocation8 + $0x6f8] sm:$0xff]
    %v1333 = vld [vmem:[#allocation8 + $0x700] sm:$0xff]
    %v1334 = vld [vmem:[#allocation8 + $0x708] sm:$0xff]
    %v1335 = vld [vmem:[#allocation8 + $0x710] sm:$0xff]
    %v1336 = vld [vmem:[#allocation8 + $0x718] sm:$0xff]
    %v1337 = vld [vmem:[#allocation8 + $0x720] sm:$0xff]
    %v1338 = vld [vmem:[#allocation8 + $0x728] sm:$0xff]
    %v1339 = vld [vmem:[#allocation8 + $0x730] sm:$0xff]
    %v1340 = vld [vmem:[#allocation8 + $0x738] sm:$0xff]
    %v1341 = vld [vmem:[#allocation8 + $0x740] sm:$0xff]
    %v1342 = vld [vmem:[#allocation8 + $0x748] sm:$0xff]
    %v1343 = vld [vmem:[#allocation8 + $0x750] sm:$0xff]
    %v1344 = vld [vmem:[#allocation8 + $0x758] sm:$0xff]
    %v1345 = vld [vmem:[#allocation8 + $0x760] sm:$0xff]
    %v1346 = vld [vmem:[#allocation8 + $0x768] sm:$0xff]
    %v1347 = vld [vmem:[#allocation8 + $0x770] sm:$0xff]
    %v1348 = vld [vmem:[#allocation8 + $0x778] sm:$0xff]
    %v1349 = vld [vmem:[#allocation8 + $0x780] sm:$0xff]
    %v1350 = vld [vmem:[#allocation8 + $0x788] sm:$0xff]
    %v1351 = vld [vmem:[#allocation8 + $0x790] sm:$0xff]
    %v1352 = vld [vmem:[#allocation8 + $0x798] sm:$0xff]
    %v1353 = vld [vmem:[#allocation8 + $0x7a0] sm:$0xff]
    %v1354 = vld [vmem:[#allocation8 + $0x7a8] sm:$0xff]
    %v1355 = vld [vmem:[#allocation8 + $0x7b0] sm:$0xff]
    %v1356 = vld [vmem:[#allocation8 + $0x7b8] sm:$0xff]
    %v1357 = vld [vmem:[#allocation8 + $0x7c0] sm:$0xff]
    %v1358 = vld [vmem:[#allocation8 + $0x7c8] sm:$0xff]
    %v1359 = vld [vmem:[#allocation8 + $0x7d0] sm:$0xff]
    %v1360 = vld [vmem:[#allocation8 + $0x7d8] sm:$0xff]
    %v1361 = vld [vmem:[#allocation8 + $0x7e0] sm:$0xff]
    %v1362 = vld [vmem:[#allocation8 + $0x7e8] sm:$0xff]
    %v1363 = vld [vmem:[#allocation8 + $0x7f0] sm:$0xff]
    %v1364 = vld [vmem:[#allocation8 + $0x7f8] sm:$0xff]
    %v1365 = vld [vmem:[#allocation8 + $0x800] sm:$0xff]
    %v1366 = vld [vmem:[#allocation8 + $0x808] sm:$0xff]
    %v1367 = vld [vmem:[#allocation8 + $0x810] sm:$0xff]
    %v1368 = vld [vmem:[#allocation8 + $0x818] sm:$0xff]
    %v1369 = vld [vmem:[#allocation8 + $0x820] sm:$0xff]
    %v1370 = vld [vmem:[#allocation8 + $0x828] sm:$0xff]
    %v1371 = vld [vmem:[#allocation8 + $0x830] sm:$0xff]
    %v1372 = vld [vmem:[#allocation8 + $0x838] sm:$0xff]
    %v1373 = vld [vmem:[#allocation8 + $0x840] sm:$0xff]
    %v1374 = vld [vmem:[#allocation8 + $0x848] sm:$0xff]
    %v1375 = vld [vmem:[#allocation8 + $0x850] sm:$0xff]
    %v1376 = vld [vmem:[#allocation8 + $0x858] sm:$0xff]
    %v1377 = vld [vmem:[#allocation8 + $0x860] sm:$0xff]
    %v1378 = vld [vmem:[#allocation8 + $0x868] sm:$0xff]
    %v1379 = vld [vmem:[#allocation8 + $0x870] sm:$0xff]
    %v1380 = vld [vmem:[#allocation8 + $0x878] sm:$0xff]
    %v1381 = vld [vmem:[#allocation8 + $0x880] sm:$0xff]
    %v1382 = vld [vmem:[#allocation8 + $0x888] sm:$0xff]
    %v1383 = vld [vmem:[#allocation8 + $0x890] sm:$0xff]
    %v1384 = vld [vmem:[#allocation8 + $0x898] sm:$0xff]
    %v1385 = vld [vmem:[#allocation8 + $0x8a0] sm:$0xff]
    %v1386 = vld [vmem:[#allocation8 + $0x8a8] sm:$0xff]
    %v1387 = vld [vmem:[#allocation8 + $0x8b0] sm:$0xff]
    %v1388 = vld [vmem:[#allocation8 + $0x8b8] sm:$0xff]
    %v1389 = vld [vmem:[#allocation8 + $0x8c0] sm:$0xff]
    %v1390 = vld [vmem:[#allocation8 + $0x8c8] sm:$0xff]
    %v1391 = vld [vmem:[#allocation8 + $0x8d0] sm:$0xff]
    %v1392 = vld [vmem:[#allocation8 + $0x8d8] sm:$0xff]
    %v1393 = vld [vmem:[#allocation8 + $0x8e0] sm:$0xff]
    %v1394 = vld [vmem:[#allocation8 + $0x8e8] sm:$0xff]
    %v1395 = vld [vmem:[#allocation8 + $0x8f0] sm:$0xff]
    %v1396 = vld [vmem:[#allocation8 + $0x8f8] sm:$0xff]
    %v1397 = vld [vmem:[#allocation8 + $0x900] sm:$0xff]
    %v1398 = vld [vmem:[#allocation8 + $0x908] sm:$0xff]
    %v1399 = vld [vmem:[#allocation8 + $0x910] sm:$0xff]
    %v1400 = vld [vmem:[#allocation8 + $0x918] sm:$0xff]
    %v1401 = vld [vmem:[#allocation8 + $0x920] sm:$0xff]
    %v1402 = vld [vmem:[#allocation8 + $0x928] sm:$0xff]
    %v1403 = vld [vmem:[#allocation8 + $0x930] sm:$0xff]
    %v1404 = vld [vmem:[#allocation8 + $0x938] sm:$0xff]
    %v1405 = vld [vmem:[#allocation8 + $0x940] sm:$0xff]
    %v1406 = vld [vmem:[#allocation8 + $0x948] sm:$0xff]
    %v1407 = vld [vmem:[#allocation8 + $0x950] sm:$0xff]
    %v1408 = vld [vmem:[#allocation8 + $0x958] sm:$0xff]
    %v1409 = vld [vmem:[#allocation8 + $0x960] sm:$0xff]
    %v1410 = vld [vmem:[#allocation8 + $0x968] sm:$0xff]
    %v1411 = vld [vmem:[#allocation8 + $0x970] sm:$0xff]
    %v1412 = vld [vmem:[#allocation8 + $0x978] sm:$0xff]
    %v1413 = vld [vmem:[#allocation8 + $0x980] sm:$0xff]
    %v1414 = vld [vmem:[#allocation8 + $0x988] sm:$0xff]
    %v1415 = vld [vmem:[#allocation8 + $0x990] sm:$0xff]
    %v1416 = vld [vmem:[#allocation8 + $0x998] sm:$0xff]
    %v1417 = vld [vmem:[#allocation8 + $0x9a0] sm:$0xff]
    %v1418 = vld [vmem:[#allocation8 + $0x9a8] sm:$0xff]
    %v1419 = vld [vmem:[#allocation8 + $0x9b0] sm:$0xff]
    %v1420 = vld [vmem:[#allocation8 + $0x9b8] sm:$0xff]
    %v1421 = vld [vmem:[#allocation8 + $0x9c0] sm:$0xff]
    %v1422 = vld [vmem:[#allocation8 + $0x9c8] sm:$0xff]
    %v1423 = vld [vmem:[#allocation8 + $0x9d0] sm:$0xff]
    %v1424 = vld [vmem:[#allocation8 + $0x9d8] sm:$0xff]
    %v1425 = vld [vmem:[#allocation8 + $0x9e0] sm:$0xff]
    %v1426 = vld [vmem:[#allocation8 + $0x9e8] sm:$0xff]
    %v1427 = vld [vmem:[#allocation8 + $0x9f0] sm:$0xff]
    %v1428 = vld [vmem:[#allocation8 + $0x9f8] sm:$0xff]
    %v1429 = vld [vmem:[#allocation8 + $0xa00] sm:$0xff]
    %v1430 = vld [vmem:[#allocation8 + $0xa08] sm:$0xff]
    %v1431 = vld [vmem:[#allocation8 + $0xa10] sm:$0xff]
    %v1432 = vld [vmem:[#allocation8 + $0xa18] sm:$0xff]
    %v1433 = vld [vmem:[#allocation8 + $0xa20] sm:$0xff]
    %v1434 = vld [vmem:[#allocation8 + $0xa28] sm:$0xff]
    %v1435 = vld [vmem:[#allocation8 + $0xa30] sm:$0xff]
    %v1436 = vld [vmem:[#allocation8 + $0xa38] sm:$0xff]
    %v1437 = vld [vmem:[#allocation8 + $0xa40] sm:$0xff]
    %v1438 = vld [vmem:[#allocation8 + $0xa48] sm:$0xff]
    %v1439 = vld [vmem:[#allocation8 + $0xa50] sm:$0xff]
    %v1440 = vld [vmem:[#allocation8 + $0xa58] sm:$0xff]
    %v1441 = vld [vmem:[#allocation8 + $0xa60] sm:$0xff]
    %v1442 = vld [vmem:[#allocation8 + $0xa68] sm:$0xff]
    %v1443 = vld [vmem:[#allocation8 + $0xa70] sm:$0xff]
    %v1444 = vld [vmem:[#allocation8 + $0xa78] sm:$0xff]
    %v1445 = vld [vmem:[#allocation8 + $0xa80] sm:$0xff]
    %v1446 = vld [vmem:[#allocation8 + $0xa88] sm:$0xff]
    %v1447 = vld [vmem:[#allocation8 + $0xa90] sm:$0xff]
    %v1448 = vld [vmem:[#allocation8 + $0xa98] sm:$0xff]
    %v1449 = vld [vmem:[#allocation8 + $0xaa0] sm:$0xff]
    %v1450 = vld [vmem:[#allocation8 + $0xaa8] sm:$0xff]
    %v1451 = vld [vmem:[#allocation8 + $0xab0] sm:$0xff]
    %v1452 = vld [vmem:[#allocation8 + $0xab8] sm:$0xff]
    %v1453 = vld [vmem:[#allocation8 + $0xac0] sm:$0xff]
    %v1454 = vld [vmem:[#allocation8 + $0xac8] sm:$0xff]
    %v1455 = vld [vmem:[#allocation8 + $0xad0] sm:$0xff]
    %v1456 = vld [vmem:[#allocation8 + $0xad8] sm:$0xff]
    %v1457 = vld [vmem:[#allocation8 + $0xae0] sm:$0xff]
    %v1458 = vld [vmem:[#allocation8 + $0xae8] sm:$0xff]
    %v1459 = vld [vmem:[#allocation8 + $0xaf0] sm:$0xff]
    %v1460 = vld [vmem:[#allocation8 + $0xaf8] sm:$0xff]
    %v1461 = vld [vmem:[#allocation8 + $0xb00] sm:$0xff]
    %v1462 = vld [vmem:[#allocation8 + $0xb08] sm:$0xff]
    %v1463 = vld [vmem:[#allocation8 + $0xb10] sm:$0xff]
    %v1464 = vld [vmem:[#allocation8 + $0xb18] sm:$0xff]
    %v1465 = vld [vmem:[#allocation8 + $0xb20] sm:$0xff]
    %v1466 = vld [vmem:[#allocation8 + $0xb28] sm:$0xff]
    %v1467 = vld [vmem:[#allocation8 + $0xb30] sm:$0xff]
    %v1468 = vld [vmem:[#allocation8 + $0xb38] sm:$0xff]
    %v1469 = vld [vmem:[#allocation8 + $0xb40] sm:$0xff]
    %v1470 = vld [vmem:[#allocation8 + $0xb48] sm:$0xff]
    %v1471 = vld [vmem:[#allocation8 + $0xb50] sm:$0xff]
    %v1472 = vld [vmem:[#allocation8 + $0xb58] sm:$0xff]
    %v1473 = vld [vmem:[#allocation8 + $0xb60] sm:$0xff]
    %v1474 = vld [vmem:[#allocation8 + $0xb68] sm:$0xff]
    %v1475 = vld [vmem:[#allocation8 + $0xb70] sm:$0xff]
    %v1476 = vld [vmem:[#allocation8 + $0xb78] sm:$0xff]
    %v1477 = vld [vmem:[#allocation8 + $0xb80] sm:$0xff]
    %v1478 = vld [vmem:[#allocation8 + $0xb88] sm:$0xff]
    %v1479 = vld [vmem:[#allocation8 + $0xb90] sm:$0xff]
    %v1480 = vld [vmem:[#allocation8 + $0xb98] sm:$0xff]
    %v1481 = vld [vmem:[#allocation8 + $0xba0] sm:$0xff]
    %v1482 = vld [vmem:[#allocation8 + $0xba8] sm:$0xff]
    %v1483 = vld [vmem:[#allocation8 + $0xbb0] sm:$0xff]
    %v1484 = vld [vmem:[#allocation8 + $0xbb8] sm:$0xff]
    %v1485 = vld [vmem:[#allocation8 + $0xbc0] sm:$0xff]
    %v1486 = vld [vmem:[#allocation8 + $0xbc8] sm:$0xff]
    %v1487 = vld [vmem:[#allocation8 + $0xbd0] sm:$0xff]
    %v1488 = vld [vmem:[#allocation8 + $0xbd8] sm:$0xff]
    %v1489 = vld [vmem:[#allocation8 + $0xbe0] sm:$0xff]
    %v1490 = vld [vmem:[#allocation8 + $0xbe8] sm:$0xff]
    %v1491 = vld [vmem:[#allocation8 + $0xbf0] sm:$0xff]
    %v1492 = vld [vmem:[#allocation8 + $0xbf8] sm:$0xff]
    %v1493 = vld [vmem:[#allocation8 + $0xc00] sm:$0xff]
    %v1494 = vld [vmem:[#allocation8 + $0xc08] sm:$0xff]
    %v1495 = vld [vmem:[#allocation8 + $0xc10] sm:$0xff]
    %v1496 = vld [vmem:[#allocation8 + $0xc18] sm:$0xff]
    %v1497 = vld [vmem:[#allocation8 + $0xc20] sm:$0xff]
    %v1498 = vld [vmem:[#allocation8 + $0xc28] sm:$0xff]
    %v1499 = vld [vmem:[#allocation8 + $0xc30] sm:$0xff]
    %v1500 = vld [vmem:[#allocation8 + $0xc38] sm:$0xff]
    %v1501 = vld [vmem:[#allocation8 + $0xc40] sm:$0xff]
    %v1502 = vld [vmem:[#allocation8 + $0xc48] sm:$0xff]
    %v1503 = vld [vmem:[#allocation8 + $0xc50] sm:$0xff]
    %v1504 = vld [vmem:[#allocation8 + $0xc58] sm:$0xff]
    %v1505 = vld [vmem:[#allocation8 + $0xc60] sm:$0xff]
    %v1506 = vld [vmem:[#allocation8 + $0xc68] sm:$0xff]
    %v1507 = vld [vmem:[#allocation8 + $0xc70] sm:$0xff]
    %v1508 = vld [vmem:[#allocation8 + $0xc78] sm:$0xff]
    %v1509 = vld [vmem:[#allocation8 + $0xc80] sm:$0xff]
    %v1510 = vld [vmem:[#allocation8 + $0xc88] sm:$0xff]
    %v1511 = vld [vmem:[#allocation8 + $0xc90] sm:$0xff]
    %v1512 = vld [vmem:[#allocation8 + $0xc98] sm:$0xff]
    %v1513 = vld [vmem:[#allocation8 + $0xca0] sm:$0xff]
    %v1514 = vld [vmem:[#allocation8 + $0xca8] sm:$0xff]
    %v1515 = vld [vmem:[#allocation8 + $0xcb0] sm:$0xff]
    %v1516 = vld [vmem:[#allocation8 + $0xcb8] sm:$0xff]
    %v1517 = vld [vmem:[#allocation8 + $0xcc0] sm:$0xff]
    %v1518 = vld [vmem:[#allocation8 + $0xcc8] sm:$0xff]
    %v1519 = vld [vmem:[#allocation8 + $0xcd0] sm:$0xff]
    %v1520 = vld [vmem:[#allocation8 + $0xcd8] sm:$0xff]
    %v1521 = vld [vmem:[#allocation8 + $0xce0] sm:$0xff]
    %v1522 = vld [vmem:[#allocation8 + $0xce8] sm:$0xff]
    %v1523 = vld [vmem:[#allocation8 + $0xcf0] sm:$0xff]
    %v1524 = vld [vmem:[#allocation8 + $0xcf8] sm:$0xff]
    %v1525 = vld [vmem:[#allocation8 + $0xd00] sm:$0xff]
    %v1526 = vld [vmem:[#allocation8 + $0xd08] sm:$0xff]
    %v1527 = vld [vmem:[#allocation8 + $0xd10] sm:$0xff]
    %v1528 = vld [vmem:[#allocation8 + $0xd18] sm:$0xff]
    %v1529 = vld [vmem:[#allocation8 + $0xd20] sm:$0xff]
    %v1530 = vld [vmem:[#allocation8 + $0xd28] sm:$0xff]
    %v1531 = vld [vmem:[#allocation8 + $0xd30] sm:$0xff]
    %v1532 = vld [vmem:[#allocation8 + $0xd38] sm:$0xff]
    %v1533 = vld [vmem:[#allocation8 + $0xd40] sm:$0xff]
    %v1534 = vld [vmem:[#allocation8 + $0xd48] sm:$0xff]
    %v1535 = vld [vmem:[#allocation8 + $0xd50] sm:$0xff]
    %v1536 = vld [vmem:[#allocation8 + $0xd58] sm:$0xff]
    %v1537 = vld [vmem:[#allocation8 + $0xd60] sm:$0xff]
    %v1538 = vld [vmem:[#allocation8 + $0xd68] sm:$0xff]
    %v1539 = vld [vmem:[#allocation8 + $0xd70] sm:$0xff]
    %v1540 = vld [vmem:[#allocation8 + $0xd78] sm:$0xff]
    %v1541 = vld [vmem:[#allocation8 + $0xd80] sm:$0xff]
    %v1542 = vld [vmem:[#allocation8 + $0xd88] sm:$0xff]
    %v1543 = vld [vmem:[#allocation8 + $0xd90] sm:$0xff]
    %v1544 = vld [vmem:[#allocation8 + $0xd98] sm:$0xff]
    %v1545 = vld [vmem:[#allocation8 + $0xda0] sm:$0xff]
    %v1546 = vld [vmem:[#allocation8 + $0xda8] sm:$0xff]
    %v1547 = vld [vmem:[#allocation8 + $0xdb0] sm:$0xff]
    %v1548 = vld [vmem:[#allocation8 + $0xdb8] sm:$0xff]
    %v1549 = vld [vmem:[#allocation8 + $0xdc0] sm:$0xff]
    %v1550 = vld [vmem:[#allocation8 + $0xdc8] sm:$0xff]
    %v1551 = vld [vmem:[#allocation8 + $0xdd0] sm:$0xff]
    %v1552 = vld [vmem:[#allocation8 + $0xdd8] sm:$0xff]
    %v1553 = vld [vmem:[#allocation8 + $0xde0] sm:$0xff]
    %v1554 = vld [vmem:[#allocation8 + $0xde8] sm:$0xff]
    %v1555 = vld [vmem:[#allocation8 + $0xdf0] sm:$0xff]
    %v1556 = vld [vmem:[#allocation8 + $0xdf8] sm:$0xff]
    %v1557 = vld [vmem:[#allocation8 + $0xe00] sm:$0xff]
    %v1558 = vld [vmem:[#allocation8 + $0xe08] sm:$0xff]
    %v1559 = vld [vmem:[#allocation8 + $0xe10] sm:$0xff]
    %v1560 = vld [vmem:[#allocation8 + $0xe18] sm:$0xff]
    %v1561 = vld [vmem:[#allocation8 + $0xe20] sm:$0xff]
    %v1562 = vld [vmem:[#allocation8 + $0xe28] sm:$0xff]
    %v1563 = vld [vmem:[#allocation8 + $0xe30] sm:$0xff]
    %v1564 = vld [vmem:[#allocation8 + $0xe38] sm:$0xff]
    %v1565 = vld [vmem:[#allocation8 + $0xe40] sm:$0xff]
    %v1566 = vld [vmem:[#allocation8 + $0xe48] sm:$0xff]
    %v1567 = vld [vmem:[#allocation8 + $0xe50] sm:$0xff]
    %v1568 = vld [vmem:[#allocation8 + $0xe58] sm:$0xff]
    %v1569 = vld [vmem:[#allocation8 + $0xe60] sm:$0xff]
    %v1570 = vld [vmem:[#allocation8 + $0xe68] sm:$0xff]
    %v1571 = vld [vmem:[#allocation8 + $0xe70] sm:$0xff]
    %v1572 = vld [vmem:[#allocation8 + $0xe78] sm:$0xff]
    %v1573 = vld [vmem:[#allocation8 + $0xe80] sm:$0xff]
    %v1574 = vld [vmem:[#allocation8 + $0xe88] sm:$0xff]
    %v1575 = vld [vmem:[#allocation8 + $0xe90] sm:$0xff]
    %v1576 = vld [vmem:[#allocation8 + $0xe98] sm:$0xff]
    %v1577 = vld [vmem:[#allocation8 + $0xea0] sm:$0xff]
    %v1578 = vld [vmem:[#allocation8 + $0xea8] sm:$0xff]
    %v1579 = vld [vmem:[#allocation8 + $0xeb0] sm:$0xff]
    %v1580 = vld [vmem:[#allocation8 + $0xeb8] sm:$0xff]
    %v1581 = vld [vmem:[#allocation8 + $0xec0] sm:$0xff]
    %v1582 = vld [vmem:[#allocation8 + $0xec8] sm:$0xff]
    %v1583 = vld [vmem:[#allocation8 + $0xed0] sm:$0xff]
    %v1584 = vld [vmem:[#allocation8 + $0xed8] sm:$0xff]
    %v1585 = vld [vmem:[#allocation8 + $0xee0] sm:$0xff]
    %v1586 = vld [vmem:[#allocation8 + $0xee8] sm:$0xff]
    %v1587 = vld [vmem:[#allocation8 + $0xef0] sm:$0xff]
    %v1588 = vld [vmem:[#allocation8 + $0xef8] sm:$0xff]
    %v1589 = vld [vmem:[#allocation8 + $0xf00] sm:$0xff]
    %v1590 = vld [vmem:[#allocation8 + $0xf08] sm:$0xff]
    %v1591 = vld [vmem:[#allocation8 + $0xf10] sm:$0xff]
    %v1592 = vld [vmem:[#allocation8 + $0xf18] sm:$0xff]
    %v1593 = vld [vmem:[#allocation8 + $0xf20] sm:$0xff]
    %v1594 = vld [vmem:[#allocation8 + $0xf28] sm:$0xff]
    %v1595 = vld [vmem:[#allocation8 + $0xf30] sm:$0xff]
    %v1596 = vld [vmem:[#allocation8 + $0xf38] sm:$0xff]
    %v1597 = vld [vmem:[#allocation8 + $0xf40] sm:$0xff]
    %v1598 = vld [vmem:[#allocation8 + $0xf48] sm:$0xff]
    %v1599 = vld [vmem:[#allocation8 + $0xf50] sm:$0xff]
    %v1600 = vld [vmem:[#allocation8 + $0xf58] sm:$0xff]
    %v1601 = vld [vmem:[#allocation8 + $0xf60] sm:$0xff]
    %v1602 = vld [vmem:[#allocation8 + $0xf68] sm:$0xff]
    %v1603 = vld [vmem:[#allocation8 + $0xf70] sm:$0xff]
    %v1604 = vld [vmem:[#allocation8 + $0xf78] sm:$0xff]
    %v1605 = vld [vmem:[#allocation8 + $0xf80] sm:$0xff]
    %v1606 = vld [vmem:[#allocation8 + $0xf88] sm:$0xff]
    %v1607 = vld [vmem:[#allocation8 + $0xf90] sm:$0xff]
    %v1608 = vld [vmem:[#allocation8 + $0xf98] sm:$0xff]
    %v1609 = vld [vmem:[#allocation8 + $0xfa0] sm:$0xff]
    %v1610 = vld [vmem:[#allocation8 + $0xfa8] sm:$0xff]
    %v1611 = vld [vmem:[#allocation8 + $0xfb0] sm:$0xff]
    %v1612 = vld [vmem:[#allocation8 + $0xfb8] sm:$0xff]
    %v1613 = vld [vmem:[#allocation8 + $0xfc0] sm:$0xff]
    %v1614 = vld [vmem:[#allocation8 + $0xfc8] sm:$0xff]
    %v1615 = vld [vmem:[#allocation8 + $0xfd0] sm:$0xff]
    %v1616 = vld [vmem:[#allocation8 + $0xfd8] sm:$0xff]
    %v1617 = vld [vmem:[#allocation8 + $0xfe0] sm:$0xff]
    %v1618 = vld [vmem:[#allocation8 + $0xfe8] sm:$0xff]
    %v1619 = vld [vmem:[#allocation8 + $0xff0] sm:$0xff]
    %v1620 = vld [vmem:[#allocation8 + $0xff8] sm:$0xff]
    %v1621 = vld [vmem:[#allocation10] sm:$0xff]
    %v1623 = vlaneseq
    %v1624 = vshrl.u32 %v1623, 7
    %v1625 = vsub.s32 0, %v1624
    %v1626 = vrot.slane %v1621, %v1625
    %v1627 = vlaneseq
    %v1628 = vshrl.u32 %v1627, 7
    %v1629 = vsub.s32 1, %v1628
    %v1630 = vrot.slane %v1621, %v1629
    %v1631 = vlaneseq
    %v1632 = vshrl.u32 %v1631, 7
    %v1633 = vsub.s32 2, %v1632
    %v1634 = vrot.slane %v1621, %v1633
    %v1635 = vlaneseq
    %v1636 = vshrl.u32 %v1635, 7
    %v1637 = vsub.s32 3, %v1636
    %v1638 = vrot.slane %v1621, %v1637
    %v1639 = vlaneseq
    %v1640 = vshrl.u32 %v1639, 7
    %v1641 = vsub.s32 4, %v1640
    %v1642 = vrot.slane %v1621, %v1641
    %v1643 = vlaneseq
    %v1644 = vshrl.u32 %v1643, 7
    %v1645 = vsub.s32 5, %v1644
    %v1646 = vrot.slane %v1621, %v1645
    %v1647 = vlaneseq
    %v1648 = vshrl.u32 %v1647, 7
    %v1649 = vsub.s32 6, %v1648
    %v1650 = vrot.slane %v1621, %v1649
    %v1651 = vlaneseq
    %v1652 = vshrl.u32 %v1651, 7
    %v1653 = vsub.s32 7, %v1652
    %v1654 = vrot.slane %v1621, %v1653
    %v2175 = vunpack.c.l.b16 %v1109
    %v2176 = vunpack.c.h.b16 %v1109
    %v2177 = vunpack.c.l.b16 %v1110
    %v2178 = vunpack.c.h.b16 %v1110
    %v2179 = vunpack.c.l.b16 %v1111
    %v2180 = vunpack.c.h.b16 %v1111
    %v2181 = vunpack.c.l.b16 %v1112
    %v2182 = vunpack.c.h.b16 %v1112
    %v2183 = vunpack.c.l.b16 %v1113
    %v2184 = vunpack.c.h.b16 %v1113
    %v2185 = vunpack.c.l.b16 %v1114
    %v2186 = vunpack.c.h.b16 %v1114
    %v2187 = vunpack.c.l.b16 %v1115
    %v2188 = vunpack.c.h.b16 %v1115
    %v2189 = vunpack.c.l.b16 %v1116
    %v2190 = vunpack.c.h.b16 %v1116
    %v2191 = vunpack.c.l.b16 %v1117
    %v2192 = vunpack.c.h.b16 %v1117
    %v2193 = vunpack.c.l.b16 %v1118
    %v2194 = vunpack.c.h.b16 %v1118
    %v2195 = vunpack.c.l.b16 %v1119
    %v2196 = vunpack.c.h.b16 %v1119
    %v2197 = vunpack.c.l.b16 %v1120
    %v2198 = vunpack.c.h.b16 %v1120
    %v2199 = vunpack.c.l.b16 %v1121
    %v2200 = vunpack.c.h.b16 %v1121
    %v2201 = vunpack.c.l.b16 %v1122
    %v2202 = vunpack.c.h.b16 %v1122
    %v2203 = vunpack.c.l.b16 %v1123
    %v2204 = vunpack.c.h.b16 %v1123
    %v2205 = vunpack.c.l.b16 %v1124
    %v2206 = vunpack.c.h.b16 %v1124
    %v2207 = vunpack.c.l.b16 %v1125
    %v2208 = vunpack.c.h.b16 %v1125
    %v2209 = vunpack.c.l.b16 %v1126
    %v2210 = vunpack.c.h.b16 %v1126
    %v2211 = vunpack.c.l.b16 %v1127
    %v2212 = vunpack.c.h.b16 %v1127
    %v2213 = vunpack.c.l.b16 %v1128
    %v2214 = vunpack.c.h.b16 %v1128
    %v2215 = vunpack.c.l.b16 %v1129
    %v2216 = vunpack.c.h.b16 %v1129
    %v2217 = vunpack.c.l.b16 %v1130
    %v2218 = vunpack.c.h.b16 %v1130
    %v2219 = vunpack.c.l.b16 %v1131
    %v2220 = vunpack.c.h.b16 %v1131
    %v2221 = vunpack.c.l.b16 %v1132
    %v2222 = vunpack.c.h.b16 %v1132
    %v2223 = vunpack.c.l.b16 %v1133
    %v2224 = vunpack.c.h.b16 %v1133
    %v2225 = vunpack.c.l.b16 %v1134
    %v2226 = vunpack.c.h.b16 %v1134
    %v2227 = vunpack.c.l.b16 %v1135
    %v2228 = vunpack.c.h.b16 %v1135
    %v2229 = vunpack.c.l.b16 %v1136
    %v2230 = vunpack.c.h.b16 %v1136
    %v2231 = vunpack.c.l.b16 %v1137
    %v2232 = vunpack.c.h.b16 %v1137
    %v2233 = vunpack.c.l.b16 %v1138
    %v2234 = vunpack.c.h.b16 %v1138
    %v2235 = vunpack.c.l.b16 %v1139
    %v2236 = vunpack.c.h.b16 %v1139
    %v2237 = vunpack.c.l.b16 %v1140
    %v2238 = vunpack.c.h.b16 %v1140
    %v2239 = vunpack.c.l.b16 %v1141
    %v2240 = vunpack.c.h.b16 %v1141
    %v2241 = vunpack.c.l.b16 %v1142
    %v2242 = vunpack.c.h.b16 %v1142
    %v2243 = vunpack.c.l.b16 %v1143
    %v2244 = vunpack.c.h.b16 %v1143
    %v2245 = vunpack.c.l.b16 %v1144
    %v2246 = vunpack.c.h.b16 %v1144
    %v2247 = vunpack.c.l.b16 %v1145
    %v2248 = vunpack.c.h.b16 %v1145
    %v2249 = vunpack.c.l.b16 %v1146
    %v2250 = vunpack.c.h.b16 %v1146
    %v2251 = vunpack.c.l.b16 %v1147
    %v2252 = vunpack.c.h.b16 %v1147
    %v2253 = vunpack.c.l.b16 %v1148
    %v2254 = vunpack.c.h.b16 %v1148
    %v2255 = vunpack.c.l.b16 %v1149
    %v2256 = vunpack.c.h.b16 %v1149
    %v2257 = vunpack.c.l.b16 %v1150
    %v2258 = vunpack.c.h.b16 %v1150
    %v2259 = vunpack.c.l.b16 %v1151
    %v2260 = vunpack.c.h.b16 %v1151
    %v2261 = vunpack.c.l.b16 %v1152
    %v2262 = vunpack.c.h.b16 %v1152
    %v2263 = vunpack.c.l.b16 %v1153
    %v2264 = vunpack.c.h.b16 %v1153
    %v2265 = vunpack.c.l.b16 %v1154
    %v2266 = vunpack.c.h.b16 %v1154
    %v2267 = vunpack.c.l.b16 %v1155
    %v2268 = vunpack.c.h.b16 %v1155
    %v2269 = vunpack.c.l.b16 %v1156
    %v2270 = vunpack.c.h.b16 %v1156
    %v2271 = vunpack.c.l.b16 %v1157
    %v2272 = vunpack.c.h.b16 %v1157
    %v2273 = vunpack.c.l.b16 %v1158
    %v2274 = vunpack.c.h.b16 %v1158
    %v2275 = vunpack.c.l.b16 %v1159
    %v2276 = vunpack.c.h.b16 %v1159
    %v2277 = vunpack.c.l.b16 %v1160
    %v2278 = vunpack.c.h.b16 %v1160
    %v2279 = vunpack.c.l.b16 %v1161
    %v2280 = vunpack.c.h.b16 %v1161
    %v2281 = vunpack.c.l.b16 %v1162
    %v2282 = vunpack.c.h.b16 %v1162
    %v2283 = vunpack.c.l.b16 %v1163
    %v2284 = vunpack.c.h.b16 %v1163
    %v2285 = vunpack.c.l.b16 %v1164
    %v2286 = vunpack.c.h.b16 %v1164
    %v2287 = vunpack.c.l.b16 %v1165
    %v2288 = vunpack.c.h.b16 %v1165
    %v2289 = vunpack.c.l.b16 %v1166
    %v2290 = vunpack.c.h.b16 %v1166
    %v2291 = vunpack.c.l.b16 %v1167
    %v2292 = vunpack.c.h.b16 %v1167
    %v2293 = vunpack.c.l.b16 %v1168
    %v2294 = vunpack.c.h.b16 %v1168
    %v2295 = vunpack.c.l.b16 %v1169
    %v2296 = vunpack.c.h.b16 %v1169
    %v2297 = vunpack.c.l.b16 %v1170
    %v2298 = vunpack.c.h.b16 %v1170
    %v2299 = vunpack.c.l.b16 %v1171
    %v2300 = vunpack.c.h.b16 %v1171
    %v2301 = vunpack.c.l.b16 %v1172
    %v2302 = vunpack.c.h.b16 %v1172
    %v2303 = vunpack.c.l.b16 %v1173
    %v2304 = vunpack.c.h.b16 %v1173
    %v2305 = vunpack.c.l.b16 %v1174
    %v2306 = vunpack.c.h.b16 %v1174
    %v2307 = vunpack.c.l.b16 %v1175
    %v2308 = vunpack.c.h.b16 %v1175
    %v2309 = vunpack.c.l.b16 %v1176
    %v2310 = vunpack.c.h.b16 %v1176
    %v2311 = vunpack.c.l.b16 %v1177
    %v2312 = vunpack.c.h.b16 %v1177
    %v2313 = vunpack.c.l.b16 %v1178
    %v2314 = vunpack.c.h.b16 %v1178
    %v2315 = vunpack.c.l.b16 %v1179
    %v2316 = vunpack.c.h.b16 %v1179
    %v2317 = vunpack.c.l.b16 %v1180
    %v2318 = vunpack.c.h.b16 %v1180
    %v2319 = vunpack.c.l.b16 %v1181
    %v2320 = vunpack.c.h.b16 %v1181
    %v2321 = vunpack.c.l.b16 %v1182
    %v2322 = vunpack.c.h.b16 %v1182
    %v2323 = vunpack.c.l.b16 %v1183
    %v2324 = vunpack.c.h.b16 %v1183
    %v2325 = vunpack.c.l.b16 %v1184
    %v2326 = vunpack.c.h.b16 %v1184
    %v2327 = vunpack.c.l.b16 %v1185
    %v2328 = vunpack.c.h.b16 %v1185
    %v2329 = vunpack.c.l.b16 %v1186
    %v2330 = vunpack.c.h.b16 %v1186
    %v2331 = vunpack.c.l.b16 %v1187
    %v2332 = vunpack.c.h.b16 %v1187
    %v2333 = vunpack.c.l.b16 %v1188
    %v2334 = vunpack.c.h.b16 %v1188
    %v2335 = vunpack.c.l.b16 %v1189
    %v2336 = vunpack.c.h.b16 %v1189
    %v2337 = vunpack.c.l.b16 %v1190
    %v2338 = vunpack.c.h.b16 %v1190
    %v2339 = vunpack.c.l.b16 %v1191
    %v2340 = vunpack.c.h.b16 %v1191
    %v2341 = vunpack.c.l.b16 %v1192
    %v2342 = vunpack.c.h.b16 %v1192
    %v2343 = vunpack.c.l.b16 %v1193
    %v2344 = vunpack.c.h.b16 %v1193
    %v2345 = vunpack.c.l.b16 %v1194
    %v2346 = vunpack.c.h.b16 %v1194
    %v2347 = vunpack.c.l.b16 %v1195
    %v2348 = vunpack.c.h.b16 %v1195
    %v2349 = vunpack.c.l.b16 %v1196
    %v2350 = vunpack.c.h.b16 %v1196
    %v2351 = vunpack.c.l.b16 %v1197
    %v2352 = vunpack.c.h.b16 %v1197
    %v2353 = vunpack.c.l.b16 %v1198
    %v2354 = vunpack.c.h.b16 %v1198
    %v2355 = vunpack.c.l.b16 %v1199
    %v2356 = vunpack.c.h.b16 %v1199
    %v2357 = vunpack.c.l.b16 %v1200
    %v2358 = vunpack.c.h.b16 %v1200
    %v2359 = vunpack.c.l.b16 %v1201
    %v2360 = vunpack.c.h.b16 %v1201
    %v2361 = vunpack.c.l.b16 %v1202
    %v2362 = vunpack.c.h.b16 %v1202
    %v2363 = vunpack.c.l.b16 %v1203
    %v2364 = vunpack.c.h.b16 %v1203
    %v2365 = vunpack.c.l.b16 %v1204
    %v2366 = vunpack.c.h.b16 %v1204
    %v2367 = vunpack.c.l.b16 %v1205
    %v2368 = vunpack.c.h.b16 %v1205
    %v2369 = vunpack.c.l.b16 %v1206
    %v2370 = vunpack.c.h.b16 %v1206
    %v2371 = vunpack.c.l.b16 %v1207
    %v2372 = vunpack.c.h.b16 %v1207
    %v2373 = vunpack.c.l.b16 %v1208
    %v2374 = vunpack.c.h.b16 %v1208
    %v2375 = vunpack.c.l.b16 %v1209
    %v2376 = vunpack.c.h.b16 %v1209
    %v2377 = vunpack.c.l.b16 %v1210
    %v2378 = vunpack.c.h.b16 %v1210
    %v2379 = vunpack.c.l.b16 %v1211
    %v2380 = vunpack.c.h.b16 %v1211
    %v2381 = vunpack.c.l.b16 %v1212
    %v2382 = vunpack.c.h.b16 %v1212
    %v2383 = vunpack.c.l.b16 %v1213
    %v2384 = vunpack.c.h.b16 %v1213
    %v2385 = vunpack.c.l.b16 %v1214
    %v2386 = vunpack.c.h.b16 %v1214
    %v2387 = vunpack.c.l.b16 %v1215
    %v2388 = vunpack.c.h.b16 %v1215
    %v2389 = vunpack.c.l.b16 %v1216
    %v2390 = vunpack.c.h.b16 %v1216
    %v2391 = vunpack.c.l.b16 %v1217
    %v2392 = vunpack.c.h.b16 %v1217
    %v2393 = vunpack.c.l.b16 %v1218
    %v2394 = vunpack.c.h.b16 %v1218
    %v2395 = vunpack.c.l.b16 %v1219
    %v2396 = vunpack.c.h.b16 %v1219
    %v2397 = vunpack.c.l.b16 %v1220
    %v2398 = vunpack.c.h.b16 %v1220
    %v2399 = vunpack.c.l.b16 %v1221
    %v2400 = vunpack.c.h.b16 %v1221
    %v2401 = vunpack.c.l.b16 %v1222
    %v2402 = vunpack.c.h.b16 %v1222
    %v2403 = vunpack.c.l.b16 %v1223
    %v2404 = vunpack.c.h.b16 %v1223
    %v2405 = vunpack.c.l.b16 %v1224
    %v2406 = vunpack.c.h.b16 %v1224
    %v2407 = vunpack.c.l.b16 %v1225
    %v2408 = vunpack.c.h.b16 %v1225
    %v2409 = vunpack.c.l.b16 %v1226
    %v2410 = vunpack.c.h.b16 %v1226
    %v2411 = vunpack.c.l.b16 %v1227
    %v2412 = vunpack.c.h.b16 %v1227
    %v2413 = vunpack.c.l.b16 %v1228
    %v2414 = vunpack.c.h.b16 %v1228
    %v2415 = vunpack.c.l.b16 %v1229
    %v2416 = vunpack.c.h.b16 %v1229
    %v2417 = vunpack.c.l.b16 %v1230
    %v2418 = vunpack.c.h.b16 %v1230
    %v2419 = vunpack.c.l.b16 %v1231
    %v2420 = vunpack.c.h.b16 %v1231
    %v2421 = vunpack.c.l.b16 %v1232
    %v2422 = vunpack.c.h.b16 %v1232
    %v2423 = vunpack.c.l.b16 %v1233
    %v2424 = vunpack.c.h.b16 %v1233
    %v2425 = vunpack.c.l.b16 %v1234
    %v2426 = vunpack.c.h.b16 %v1234
    %v2427 = vunpack.c.l.b16 %v1235
    %v2428 = vunpack.c.h.b16 %v1235
    %v2429 = vunpack.c.l.b16 %v1236
    %v2430 = vunpack.c.h.b16 %v1236
    %v2431 = vunpack.c.l.b16 %v1237
    %v2432 = vunpack.c.h.b16 %v1237
    %v2433 = vunpack.c.l.b16 %v1238
    %v2434 = vunpack.c.h.b16 %v1238
    %v2435 = vunpack.c.l.b16 %v1239
    %v2436 = vunpack.c.h.b16 %v1239
    %v2437 = vunpack.c.l.b16 %v1240
    %v2438 = vunpack.c.h.b16 %v1240
    %v2439 = vunpack.c.l.b16 %v1241
    %v2440 = vunpack.c.h.b16 %v1241
    %v2441 = vunpack.c.l.b16 %v1242
    %v2442 = vunpack.c.h.b16 %v1242
    %v2443 = vunpack.c.l.b16 %v1243
    %v2444 = vunpack.c.h.b16 %v1243
    %v2445 = vunpack.c.l.b16 %v1244
    %v2446 = vunpack.c.h.b16 %v1244
    %v2447 = vunpack.c.l.b16 %v1245
    %v2448 = vunpack.c.h.b16 %v1245
    %v2449 = vunpack.c.l.b16 %v1246
    %v2450 = vunpack.c.h.b16 %v1246
    %v2451 = vunpack.c.l.b16 %v1247
    %v2452 = vunpack.c.h.b16 %v1247
    %v2453 = vunpack.c.l.b16 %v1248
    %v2454 = vunpack.c.h.b16 %v1248
    %v2455 = vunpack.c.l.b16 %v1249
    %v2456 = vunpack.c.h.b16 %v1249
    %v2457 = vunpack.c.l.b16 %v1250
    %v2458 = vunpack.c.h.b16 %v1250
    %v2459 = vunpack.c.l.b16 %v1251
    %v2460 = vunpack.c.h.b16 %v1251
    %v2461 = vunpack.c.l.b16 %v1252
    %v2462 = vunpack.c.h.b16 %v1252
    %v2463 = vunpack.c.l.b16 %v1253
    %v2464 = vunpack.c.h.b16 %v1253
    %v2465 = vunpack.c.l.b16 %v1254
    %v2466 = vunpack.c.h.b16 %v1254
    %v2467 = vunpack.c.l.b16 %v1255
    %v2468 = vunpack.c.h.b16 %v1255
    %v2469 = vunpack.c.l.b16 %v1256
    %v2470 = vunpack.c.h.b16 %v1256
    %v2471 = vunpack.c.l.b16 %v1257
    %v2472 = vunpack.c.h.b16 %v1257
    %v2473 = vunpack.c.l.b16 %v1258
    %v2474 = vunpack.c.h.b16 %v1258
    %v2475 = vunpack.c.l.b16 %v1259
    %v2476 = vunpack.c.h.b16 %v1259
    %v2477 = vunpack.c.l.b16 %v1260
    %v2478 = vunpack.c.h.b16 %v1260
    %v2479 = vunpack.c.l.b16 %v1261
    %v2480 = vunpack.c.h.b16 %v1261
    %v2481 = vunpack.c.l.b16 %v1262
    %v2482 = vunpack.c.h.b16 %v1262
    %v2483 = vunpack.c.l.b16 %v1263
    %v2484 = vunpack.c.h.b16 %v1263
    %v2485 = vunpack.c.l.b16 %v1264
    %v2486 = vunpack.c.h.b16 %v1264
    %v2487 = vunpack.c.l.b16 %v1265
    %v2488 = vunpack.c.h.b16 %v1265
    %v2489 = vunpack.c.l.b16 %v1266
    %v2490 = vunpack.c.h.b16 %v1266
    %v2491 = vunpack.c.l.b16 %v1267
    %v2492 = vunpack.c.h.b16 %v1267
    %v2493 = vunpack.c.l.b16 %v1268
    %v2494 = vunpack.c.h.b16 %v1268
    %v2495 = vunpack.c.l.b16 %v1269
    %v2496 = vunpack.c.h.b16 %v1269
    %v2497 = vunpack.c.l.b16 %v1270
    %v2498 = vunpack.c.h.b16 %v1270
    %v2499 = vunpack.c.l.b16 %v1271
    %v2500 = vunpack.c.h.b16 %v1271
    %v2501 = vunpack.c.l.b16 %v1272
    %v2502 = vunpack.c.h.b16 %v1272
    %v2503 = vunpack.c.l.b16 %v1273
    %v2504 = vunpack.c.h.b16 %v1273
    %v2505 = vunpack.c.l.b16 %v1274
    %v2506 = vunpack.c.h.b16 %v1274
    %v2507 = vunpack.c.l.b16 %v1275
    %v2508 = vunpack.c.h.b16 %v1275
    %v2509 = vunpack.c.l.b16 %v1276
    %v2510 = vunpack.c.h.b16 %v1276
    %v2511 = vunpack.c.l.b16 %v1277
    %v2512 = vunpack.c.h.b16 %v1277
    %v2513 = vunpack.c.l.b16 %v1278
    %v2514 = vunpack.c.h.b16 %v1278
    %v2515 = vunpack.c.l.b16 %v1279
    %v2516 = vunpack.c.h.b16 %v1279
    %v2517 = vunpack.c.l.b16 %v1280
    %v2518 = vunpack.c.h.b16 %v1280
    %v2519 = vunpack.c.l.b16 %v1281
    %v2520 = vunpack.c.h.b16 %v1281
    %v2521 = vunpack.c.l.b16 %v1282
    %v2522 = vunpack.c.h.b16 %v1282
    %v2523 = vunpack.c.l.b16 %v1283
    %v2524 = vunpack.c.h.b16 %v1283
    %v2525 = vunpack.c.l.b16 %v1284
    %v2526 = vunpack.c.h.b16 %v1284
    %v2527 = vunpack.c.l.b16 %v1285
    %v2528 = vunpack.c.h.b16 %v1285
    %v2529 = vunpack.c.l.b16 %v1286
    %v2530 = vunpack.c.h.b16 %v1286
    %v2531 = vunpack.c.l.b16 %v1287
    %v2532 = vunpack.c.h.b16 %v1287
    %v2533 = vunpack.c.l.b16 %v1288
    %v2534 = vunpack.c.h.b16 %v1288
    %v2535 = vunpack.c.l.b16 %v1289
    %v2536 = vunpack.c.h.b16 %v1289
    %v2537 = vunpack.c.l.b16 %v1290
    %v2538 = vunpack.c.h.b16 %v1290
    %v2539 = vunpack.c.l.b16 %v1291
    %v2540 = vunpack.c.h.b16 %v1291
    %v2541 = vunpack.c.l.b16 %v1292
    %v2542 = vunpack.c.h.b16 %v1292
    %v2543 = vunpack.c.l.b16 %v1293
    %v2544 = vunpack.c.h.b16 %v1293
    %v2545 = vunpack.c.l.b16 %v1294
    %v2546 = vunpack.c.h.b16 %v1294
    %v2547 = vunpack.c.l.b16 %v1295
    %v2548 = vunpack.c.h.b16 %v1295
    %v2549 = vunpack.c.l.b16 %v1296
    %v2550 = vunpack.c.h.b16 %v1296
    %v2551 = vunpack.c.l.b16 %v1297
    %v2552 = vunpack.c.h.b16 %v1297
    %v2553 = vunpack.c.l.b16 %v1298
    %v2554 = vunpack.c.h.b16 %v1298
    %v2555 = vunpack.c.l.b16 %v1299
    %v2556 = vunpack.c.h.b16 %v1299
    %v2557 = vunpack.c.l.b16 %v1300
    %v2558 = vunpack.c.h.b16 %v1300
    %v2559 = vunpack.c.l.b16 %v1301
    %v2560 = vunpack.c.h.b16 %v1301
    %v2561 = vunpack.c.l.b16 %v1302
    %v2562 = vunpack.c.h.b16 %v1302
    %v2563 = vunpack.c.l.b16 %v1303
    %v2564 = vunpack.c.h.b16 %v1303
    %v2565 = vunpack.c.l.b16 %v1304
    %v2566 = vunpack.c.h.b16 %v1304
    %v2567 = vunpack.c.l.b16 %v1305
    %v2568 = vunpack.c.h.b16 %v1305
    %v2569 = vunpack.c.l.b16 %v1306
    %v2570 = vunpack.c.h.b16 %v1306
    %v2571 = vunpack.c.l.b16 %v1307
    %v2572 = vunpack.c.h.b16 %v1307
    %v2573 = vunpack.c.l.b16 %v1308
    %v2574 = vunpack.c.h.b16 %v1308
    %v2575 = vunpack.c.l.b16 %v1309
    %v2576 = vunpack.c.h.b16 %v1309
    %v2577 = vunpack.c.l.b16 %v1310
    %v2578 = vunpack.c.h.b16 %v1310
    %v2579 = vunpack.c.l.b16 %v1311
    %v2580 = vunpack.c.h.b16 %v1311
    %v2581 = vunpack.c.l.b16 %v1312
    %v2582 = vunpack.c.h.b16 %v1312
    %v2583 = vunpack.c.l.b16 %v1313
    %v2584 = vunpack.c.h.b16 %v1313
    %v2585 = vunpack.c.l.b16 %v1314
    %v2586 = vunpack.c.h.b16 %v1314
    %v2587 = vunpack.c.l.b16 %v1315
    %v2588 = vunpack.c.h.b16 %v1315
    %v2589 = vunpack.c.l.b16 %v1316
    %v2590 = vunpack.c.h.b16 %v1316
    %v2591 = vunpack.c.l.b16 %v1317
    %v2592 = vunpack.c.h.b16 %v1317
    %v2593 = vunpack.c.l.b16 %v1318
    %v2594 = vunpack.c.h.b16 %v1318
    %v2595 = vunpack.c.l.b16 %v1319
    %v2596 = vunpack.c.h.b16 %v1319
    %v2597 = vunpack.c.l.b16 %v1320
    %v2598 = vunpack.c.h.b16 %v1320
    %v2599 = vunpack.c.l.b16 %v1321
    %v2600 = vunpack.c.h.b16 %v1321
    %v2601 = vunpack.c.l.b16 %v1322
    %v2602 = vunpack.c.h.b16 %v1322
    %v2603 = vunpack.c.l.b16 %v1323
    %v2604 = vunpack.c.h.b16 %v1323
    %v2605 = vunpack.c.l.b16 %v1324
    %v2606 = vunpack.c.h.b16 %v1324
    %v2607 = vunpack.c.l.b16 %v1325
    %v2608 = vunpack.c.h.b16 %v1325
    %v2609 = vunpack.c.l.b16 %v1326
    %v2610 = vunpack.c.h.b16 %v1326
    %v2611 = vunpack.c.l.b16 %v1327
    %v2612 = vunpack.c.h.b16 %v1327
    %v2613 = vunpack.c.l.b16 %v1328
    %v2614 = vunpack.c.h.b16 %v1328
    %v2615 = vunpack.c.l.b16 %v1329
    %v2616 = vunpack.c.h.b16 %v1329
    %v2617 = vunpack.c.l.b16 %v1330
    %v2618 = vunpack.c.h.b16 %v1330
    %v2619 = vunpack.c.l.b16 %v1331
    %v2620 = vunpack.c.h.b16 %v1331
    %v2621 = vunpack.c.l.b16 %v1332
    %v2622 = vunpack.c.h.b16 %v1332
    %v2623 = vunpack.c.l.b16 %v1333
    %v2624 = vunpack.c.h.b16 %v1333
    %v2625 = vunpack.c.l.b16 %v1334
    %v2626 = vunpack.c.h.b16 %v1334
    %v2627 = vunpack.c.l.b16 %v1335
    %v2628 = vunpack.c.h.b16 %v1335
    %v2629 = vunpack.c.l.b16 %v1336
    %v2630 = vunpack.c.h.b16 %v1336
    %v2631 = vunpack.c.l.b16 %v1337
    %v2632 = vunpack.c.h.b16 %v1337
    %v2633 = vunpack.c.l.b16 %v1338
    %v2634 = vunpack.c.h.b16 %v1338
    %v2635 = vunpack.c.l.b16 %v1339
    %v2636 = vunpack.c.h.b16 %v1339
    %v2637 = vunpack.c.l.b16 %v1340
    %v2638 = vunpack.c.h.b16 %v1340
    %v2639 = vunpack.c.l.b16 %v1341
    %v2640 = vunpack.c.h.b16 %v1341
    %v2641 = vunpack.c.l.b16 %v1342
    %v2642 = vunpack.c.h.b16 %v1342
    %v2643 = vunpack.c.l.b16 %v1343
    %v2644 = vunpack.c.h.b16 %v1343
    %v2645 = vunpack.c.l.b16 %v1344
    %v2646 = vunpack.c.h.b16 %v1344
    %v2647 = vunpack.c.l.b16 %v1345
    %v2648 = vunpack.c.h.b16 %v1345
    %v2649 = vunpack.c.l.b16 %v1346
    %v2650 = vunpack.c.h.b16 %v1346
    %v2651 = vunpack.c.l.b16 %v1347
    %v2652 = vunpack.c.h.b16 %v1347
    %v2653 = vunpack.c.l.b16 %v1348
    %v2654 = vunpack.c.h.b16 %v1348
    %v2655 = vunpack.c.l.b16 %v1349
    %v2656 = vunpack.c.h.b16 %v1349
    %v2657 = vunpack.c.l.b16 %v1350
    %v2658 = vunpack.c.h.b16 %v1350
    %v2659 = vunpack.c.l.b16 %v1351
    %v2660 = vunpack.c.h.b16 %v1351
    %v2661 = vunpack.c.l.b16 %v1352
    %v2662 = vunpack.c.h.b16 %v1352
    %v2663 = vunpack.c.l.b16 %v1353
    %v2664 = vunpack.c.h.b16 %v1353
    %v2665 = vunpack.c.l.b16 %v1354
    %v2666 = vunpack.c.h.b16 %v1354
    %v2667 = vunpack.c.l.b16 %v1355
    %v2668 = vunpack.c.h.b16 %v1355
    %v2669 = vunpack.c.l.b16 %v1356
    %v2670 = vunpack.c.h.b16 %v1356
    %v2671 = vunpack.c.l.b16 %v1357
    %v2672 = vunpack.c.h.b16 %v1357
    %v2673 = vunpack.c.l.b16 %v1358
    %v2674 = vunpack.c.h.b16 %v1358
    %v2675 = vunpack.c.l.b16 %v1359
    %v2676 = vunpack.c.h.b16 %v1359
    %v2677 = vunpack.c.l.b16 %v1360
    %v2678 = vunpack.c.h.b16 %v1360
    %v2679 = vunpack.c.l.b16 %v1361
    %v2680 = vunpack.c.h.b16 %v1361
    %v2681 = vunpack.c.l.b16 %v1362
    %v2682 = vunpack.c.h.b16 %v1362
    %v2683 = vunpack.c.l.b16 %v1363
    %v2684 = vunpack.c.h.b16 %v1363
    %v2685 = vunpack.c.l.b16 %v1364
    %v2686 = vunpack.c.h.b16 %v1364
    %v2687 = vunpack.c.l.b16 %v1365
    %v2688 = vunpack.c.h.b16 %v1365
    %v2689 = vunpack.c.l.b16 %v1366
    %v2690 = vunpack.c.h.b16 %v1366
    %v2691 = vunpack.c.l.b16 %v1367
    %v2692 = vunpack.c.h.b16 %v1367
    %v2693 = vunpack.c.l.b16 %v1368
    %v2694 = vunpack.c.h.b16 %v1368
    %v2695 = vunpack.c.l.b16 %v1369
    %v2696 = vunpack.c.h.b16 %v1369
    %v2697 = vunpack.c.l.b16 %v1370
    %v2698 = vunpack.c.h.b16 %v1370
    %v2699 = vunpack.c.l.b16 %v1371
    %v2700 = vunpack.c.h.b16 %v1371
    %v2701 = vunpack.c.l.b16 %v1372
    %v2702 = vunpack.c.h.b16 %v1372
    %v2703 = vunpack.c.l.b16 %v1373
    %v2704 = vunpack.c.h.b16 %v1373
    %v2705 = vunpack.c.l.b16 %v1374
    %v2706 = vunpack.c.h.b16 %v1374
    %v2707 = vunpack.c.l.b16 %v1375
    %v2708 = vunpack.c.h.b16 %v1375
    %v2709 = vunpack.c.l.b16 %v1376
    %v2710 = vunpack.c.h.b16 %v1376
    %v2711 = vunpack.c.l.b16 %v1377
    %v2712 = vunpack.c.h.b16 %v1377
    %v2713 = vunpack.c.l.b16 %v1378
    %v2714 = vunpack.c.h.b16 %v1378
    %v2715 = vunpack.c.l.b16 %v1379
    %v2716 = vunpack.c.h.b16 %v1379
    %v2717 = vunpack.c.l.b16 %v1380
    %v2718 = vunpack.c.h.b16 %v1380
    %v2719 = vunpack.c.l.b16 %v1381
    %v2720 = vunpack.c.h.b16 %v1381
    %v2721 = vunpack.c.l.b16 %v1382
    %v2722 = vunpack.c.h.b16 %v1382
    %v2723 = vunpack.c.l.b16 %v1383
    %v2724 = vunpack.c.h.b16 %v1383
    %v2725 = vunpack.c.l.b16 %v1384
    %v2726 = vunpack.c.h.b16 %v1384
    %v2727 = vunpack.c.l.b16 %v1385
    %v2728 = vunpack.c.h.b16 %v1385
    %v2729 = vunpack.c.l.b16 %v1386
    %v2730 = vunpack.c.h.b16 %v1386
    %v2731 = vunpack.c.l.b16 %v1387
    %v2732 = vunpack.c.h.b16 %v1387
    %v2733 = vunpack.c.l.b16 %v1388
    %v2734 = vunpack.c.h.b16 %v1388
    %v2735 = vunpack.c.l.b16 %v1389
    %v2736 = vunpack.c.h.b16 %v1389
    %v2737 = vunpack.c.l.b16 %v1390
    %v2738 = vunpack.c.h.b16 %v1390
    %v2739 = vunpack.c.l.b16 %v1391
    %v2740 = vunpack.c.h.b16 %v1391
    %v2741 = vunpack.c.l.b16 %v1392
    %v2742 = vunpack.c.h.b16 %v1392
    %v2743 = vunpack.c.l.b16 %v1393
    %v2744 = vunpack.c.h.b16 %v1393
    %v2745 = vunpack.c.l.b16 %v1394
    %v2746 = vunpack.c.h.b16 %v1394
    %v2747 = vunpack.c.l.b16 %v1395
    %v2748 = vunpack.c.h.b16 %v1395
    %v2749 = vunpack.c.l.b16 %v1396
    %v2750 = vunpack.c.h.b16 %v1396
    %v2751 = vunpack.c.l.b16 %v1397
    %v2752 = vunpack.c.h.b16 %v1397
    %v2753 = vunpack.c.l.b16 %v1398
    %v2754 = vunpack.c.h.b16 %v1398
    %v2755 = vunpack.c.l.b16 %v1399
    %v2756 = vunpack.c.h.b16 %v1399
    %v2757 = vunpack.c.l.b16 %v1400
    %v2758 = vunpack.c.h.b16 %v1400
    %v2759 = vunpack.c.l.b16 %v1401
    %v2760 = vunpack.c.h.b16 %v1401
    %v2761 = vunpack.c.l.b16 %v1402
    %v2762 = vunpack.c.h.b16 %v1402
    %v2763 = vunpack.c.l.b16 %v1403
    %v2764 = vunpack.c.h.b16 %v1403
    %v2765 = vunpack.c.l.b16 %v1404
    %v2766 = vunpack.c.h.b16 %v1404
    %v2767 = vunpack.c.l.b16 %v1405
    %v2768 = vunpack.c.h.b16 %v1405
    %v2769 = vunpack.c.l.b16 %v1406
    %v2770 = vunpack.c.h.b16 %v1406
    %v2771 = vunpack.c.l.b16 %v1407
    %v2772 = vunpack.c.h.b16 %v1407
    %v2773 = vunpack.c.l.b16 %v1408
    %v2774 = vunpack.c.h.b16 %v1408
    %v2775 = vunpack.c.l.b16 %v1409
    %v2776 = vunpack.c.h.b16 %v1409
    %v2777 = vunpack.c.l.b16 %v1410
    %v2778 = vunpack.c.h.b16 %v1410
    %v2779 = vunpack.c.l.b16 %v1411
    %v2780 = vunpack.c.h.b16 %v1411
    %v2781 = vunpack.c.l.b16 %v1412
    %v2782 = vunpack.c.h.b16 %v1412
    %v2783 = vunpack.c.l.b16 %v1413
    %v2784 = vunpack.c.h.b16 %v1413
    %v2785 = vunpack.c.l.b16 %v1414
    %v2786 = vunpack.c.h.b16 %v1414
    %v2787 = vunpack.c.l.b16 %v1415
    %v2788 = vunpack.c.h.b16 %v1415
    %v2789 = vunpack.c.l.b16 %v1416
    %v2790 = vunpack.c.h.b16 %v1416
    %v2791 = vunpack.c.l.b16 %v1417
    %v2792 = vunpack.c.h.b16 %v1417
    %v2793 = vunpack.c.l.b16 %v1418
    %v2794 = vunpack.c.h.b16 %v1418
    %v2795 = vunpack.c.l.b16 %v1419
    %v2796 = vunpack.c.h.b16 %v1419
    %v2797 = vunpack.c.l.b16 %v1420
    %v2798 = vunpack.c.h.b16 %v1420
    %v2799 = vunpack.c.l.b16 %v1421
    %v2800 = vunpack.c.h.b16 %v1421
    %v2801 = vunpack.c.l.b16 %v1422
    %v2802 = vunpack.c.h.b16 %v1422
    %v2803 = vunpack.c.l.b16 %v1423
    %v2804 = vunpack.c.h.b16 %v1423
    %v2805 = vunpack.c.l.b16 %v1424
    %v2806 = vunpack.c.h.b16 %v1424
    %v2807 = vunpack.c.l.b16 %v1425
    %v2808 = vunpack.c.h.b16 %v1425
    %v2809 = vunpack.c.l.b16 %v1426
    %v2810 = vunpack.c.h.b16 %v1426
    %v2811 = vunpack.c.l.b16 %v1427
    %v2812 = vunpack.c.h.b16 %v1427
    %v2813 = vunpack.c.l.b16 %v1428
    %v2814 = vunpack.c.h.b16 %v1428
    %v2815 = vunpack.c.l.b16 %v1429
    %v2816 = vunpack.c.h.b16 %v1429
    %v2817 = vunpack.c.l.b16 %v1430
    %v2818 = vunpack.c.h.b16 %v1430
    %v2819 = vunpack.c.l.b16 %v1431
    %v2820 = vunpack.c.h.b16 %v1431
    %v2821 = vunpack.c.l.b16 %v1432
    %v2822 = vunpack.c.h.b16 %v1432
    %v2823 = vunpack.c.l.b16 %v1433
    %v2824 = vunpack.c.h.b16 %v1433
    %v2825 = vunpack.c.l.b16 %v1434
    %v2826 = vunpack.c.h.b16 %v1434
    %v2827 = vunpack.c.l.b16 %v1435
    %v2828 = vunpack.c.h.b16 %v1435
    %v2829 = vunpack.c.l.b16 %v1436
    %v2830 = vunpack.c.h.b16 %v1436
    %v2831 = vunpack.c.l.b16 %v1437
    %v2832 = vunpack.c.h.b16 %v1437
    %v2833 = vunpack.c.l.b16 %v1438
    %v2834 = vunpack.c.h.b16 %v1438
    %v2835 = vunpack.c.l.b16 %v1439
    %v2836 = vunpack.c.h.b16 %v1439
    %v2837 = vunpack.c.l.b16 %v1440
    %v2838 = vunpack.c.h.b16 %v1440
    %v2839 = vunpack.c.l.b16 %v1441
    %v2840 = vunpack.c.h.b16 %v1441
    %v2841 = vunpack.c.l.b16 %v1442
    %v2842 = vunpack.c.h.b16 %v1442
    %v2843 = vunpack.c.l.b16 %v1443
    %v2844 = vunpack.c.h.b16 %v1443
    %v2845 = vunpack.c.l.b16 %v1444
    %v2846 = vunpack.c.h.b16 %v1444
    %v2847 = vunpack.c.l.b16 %v1445
    %v2848 = vunpack.c.h.b16 %v1445
    %v2849 = vunpack.c.l.b16 %v1446
    %v2850 = vunpack.c.h.b16 %v1446
    %v2851 = vunpack.c.l.b16 %v1447
    %v2852 = vunpack.c.h.b16 %v1447
    %v2853 = vunpack.c.l.b16 %v1448
    %v2854 = vunpack.c.h.b16 %v1448
    %v2855 = vunpack.c.l.b16 %v1449
    %v2856 = vunpack.c.h.b16 %v1449
    %v2857 = vunpack.c.l.b16 %v1450
    %v2858 = vunpack.c.h.b16 %v1450
    %v2859 = vunpack.c.l.b16 %v1451
    %v2860 = vunpack.c.h.b16 %v1451
    %v2861 = vunpack.c.l.b16 %v1452
    %v2862 = vunpack.c.h.b16 %v1452
    %v2863 = vunpack.c.l.b16 %v1453
    %v2864 = vunpack.c.h.b16 %v1453
    %v2865 = vunpack.c.l.b16 %v1454
    %v2866 = vunpack.c.h.b16 %v1454
    %v2867 = vunpack.c.l.b16 %v1455
    %v2868 = vunpack.c.h.b16 %v1455
    %v2869 = vunpack.c.l.b16 %v1456
    %v2870 = vunpack.c.h.b16 %v1456
    %v2871 = vunpack.c.l.b16 %v1457
    %v2872 = vunpack.c.h.b16 %v1457
    %v2873 = vunpack.c.l.b16 %v1458
    %v2874 = vunpack.c.h.b16 %v1458
    %v2875 = vunpack.c.l.b16 %v1459
    %v2876 = vunpack.c.h.b16 %v1459
    %v2877 = vunpack.c.l.b16 %v1460
    %v2878 = vunpack.c.h.b16 %v1460
    %v2879 = vunpack.c.l.b16 %v1461
    %v2880 = vunpack.c.h.b16 %v1461
    %v2881 = vunpack.c.l.b16 %v1462
    %v2882 = vunpack.c.h.b16 %v1462
    %v2883 = vunpack.c.l.b16 %v1463
    %v2884 = vunpack.c.h.b16 %v1463
    %v2885 = vunpack.c.l.b16 %v1464
    %v2886 = vunpack.c.h.b16 %v1464
    %v2887 = vunpack.c.l.b16 %v1465
    %v2888 = vunpack.c.h.b16 %v1465
    %v2889 = vunpack.c.l.b16 %v1466
    %v2890 = vunpack.c.h.b16 %v1466
    %v2891 = vunpack.c.l.b16 %v1467
    %v2892 = vunpack.c.h.b16 %v1467
    %v2893 = vunpack.c.l.b16 %v1468
    %v2894 = vunpack.c.h.b16 %v1468
    %v2895 = vunpack.c.l.b16 %v1469
    %v2896 = vunpack.c.h.b16 %v1469
    %v2897 = vunpack.c.l.b16 %v1470
    %v2898 = vunpack.c.h.b16 %v1470
    %v2899 = vunpack.c.l.b16 %v1471
    %v2900 = vunpack.c.h.b16 %v1471
    %v2901 = vunpack.c.l.b16 %v1472
    %v2902 = vunpack.c.h.b16 %v1472
    %v2903 = vunpack.c.l.b16 %v1473
    %v2904 = vunpack.c.h.b16 %v1473
    %v2905 = vunpack.c.l.b16 %v1474
    %v2906 = vunpack.c.h.b16 %v1474
    %v2907 = vunpack.c.l.b16 %v1475
    %v2908 = vunpack.c.h.b16 %v1475
    %v2909 = vunpack.c.l.b16 %v1476
    %v2910 = vunpack.c.h.b16 %v1476
    %v2911 = vunpack.c.l.b16 %v1477
    %v2912 = vunpack.c.h.b16 %v1477
    %v2913 = vunpack.c.l.b16 %v1478
    %v2914 = vunpack.c.h.b16 %v1478
    %v2915 = vunpack.c.l.b16 %v1479
    %v2916 = vunpack.c.h.b16 %v1479
    %v2917 = vunpack.c.l.b16 %v1480
    %v2918 = vunpack.c.h.b16 %v1480
    %v2919 = vunpack.c.l.b16 %v1481
    %v2920 = vunpack.c.h.b16 %v1481
    %v2921 = vunpack.c.l.b16 %v1482
    %v2922 = vunpack.c.h.b16 %v1482
    %v2923 = vunpack.c.l.b16 %v1483
    %v2924 = vunpack.c.h.b16 %v1483
    %v2925 = vunpack.c.l.b16 %v1484
    %v2926 = vunpack.c.h.b16 %v1484
    %v2927 = vunpack.c.l.b16 %v1485
    %v2928 = vunpack.c.h.b16 %v1485
    %v2929 = vunpack.c.l.b16 %v1486
    %v2930 = vunpack.c.h.b16 %v1486
    %v2931 = vunpack.c.l.b16 %v1487
    %v2932 = vunpack.c.h.b16 %v1487
    %v2933 = vunpack.c.l.b16 %v1488
    %v2934 = vunpack.c.h.b16 %v1488
    %v2935 = vunpack.c.l.b16 %v1489
    %v2936 = vunpack.c.h.b16 %v1489
    %v2937 = vunpack.c.l.b16 %v1490
    %v2938 = vunpack.c.h.b16 %v1490
    %v2939 = vunpack.c.l.b16 %v1491
    %v2940 = vunpack.c.h.b16 %v1491
    %v2941 = vunpack.c.l.b16 %v1492
    %v2942 = vunpack.c.h.b16 %v1492
    %v2943 = vunpack.c.l.b16 %v1493
    %v2944 = vunpack.c.h.b16 %v1493
    %v2945 = vunpack.c.l.b16 %v1494
    %v2946 = vunpack.c.h.b16 %v1494
    %v2947 = vunpack.c.l.b16 %v1495
    %v2948 = vunpack.c.h.b16 %v1495
    %v2949 = vunpack.c.l.b16 %v1496
    %v2950 = vunpack.c.h.b16 %v1496
    %v2951 = vunpack.c.l.b16 %v1497
    %v2952 = vunpack.c.h.b16 %v1497
    %v2953 = vunpack.c.l.b16 %v1498
    %v2954 = vunpack.c.h.b16 %v1498
    %v2955 = vunpack.c.l.b16 %v1499
    %v2956 = vunpack.c.h.b16 %v1499
    %v2957 = vunpack.c.l.b16 %v1500
    %v2958 = vunpack.c.h.b16 %v1500
    %v2959 = vunpack.c.l.b16 %v1501
    %v2960 = vunpack.c.h.b16 %v1501
    %v2961 = vunpack.c.l.b16 %v1502
    %v2962 = vunpack.c.h.b16 %v1502
    %v2963 = vunpack.c.l.b16 %v1503
    %v2964 = vunpack.c.h.b16 %v1503
    %v2965 = vunpack.c.l.b16 %v1504
    %v2966 = vunpack.c.h.b16 %v1504
    %v2967 = vunpack.c.l.b16 %v1505
    %v2968 = vunpack.c.h.b16 %v1505
    %v2969 = vunpack.c.l.b16 %v1506
    %v2970 = vunpack.c.h.b16 %v1506
    %v2971 = vunpack.c.l.b16 %v1507
    %v2972 = vunpack.c.h.b16 %v1507
    %v2973 = vunpack.c.l.b16 %v1508
    %v2974 = vunpack.c.h.b16 %v1508
    %v2975 = vunpack.c.l.b16 %v1509
    %v2976 = vunpack.c.h.b16 %v1509
    %v2977 = vunpack.c.l.b16 %v1510
    %v2978 = vunpack.c.h.b16 %v1510
    %v2979 = vunpack.c.l.b16 %v1511
    %v2980 = vunpack.c.h.b16 %v1511
    %v2981 = vunpack.c.l.b16 %v1512
    %v2982 = vunpack.c.h.b16 %v1512
    %v2983 = vunpack.c.l.b16 %v1513
    %v2984 = vunpack.c.h.b16 %v1513
    %v2985 = vunpack.c.l.b16 %v1514
    %v2986 = vunpack.c.h.b16 %v1514
    %v2987 = vunpack.c.l.b16 %v1515
    %v2988 = vunpack.c.h.b16 %v1515
    %v2989 = vunpack.c.l.b16 %v1516
    %v2990 = vunpack.c.h.b16 %v1516
    %v2991 = vunpack.c.l.b16 %v1517
    %v2992 = vunpack.c.h.b16 %v1517
    %v2993 = vunpack.c.l.b16 %v1518
    %v2994 = vunpack.c.h.b16 %v1518
    %v2995 = vunpack.c.l.b16 %v1519
    %v2996 = vunpack.c.h.b16 %v1519
    %v2997 = vunpack.c.l.b16 %v1520
    %v2998 = vunpack.c.h.b16 %v1520
    %v2999 = vunpack.c.l.b16 %v1521
    %v3000 = vunpack.c.h.b16 %v1521
    %v3001 = vunpack.c.l.b16 %v1522
    %v3002 = vunpack.c.h.b16 %v1522
    %v3003 = vunpack.c.l.b16 %v1523
    %v3004 = vunpack.c.h.b16 %v1523
    %v3005 = vunpack.c.l.b16 %v1524
    %v3006 = vunpack.c.h.b16 %v1524
    %v3007 = vunpack.c.l.b16 %v1525
    %v3008 = vunpack.c.h.b16 %v1525
    %v3009 = vunpack.c.l.b16 %v1526
    %v3010 = vunpack.c.h.b16 %v1526
    %v3011 = vunpack.c.l.b16 %v1527
    %v3012 = vunpack.c.h.b16 %v1527
    %v3013 = vunpack.c.l.b16 %v1528
    %v3014 = vunpack.c.h.b16 %v1528
    %v3015 = vunpack.c.l.b16 %v1529
    %v3016 = vunpack.c.h.b16 %v1529
    %v3017 = vunpack.c.l.b16 %v1530
    %v3018 = vunpack.c.h.b16 %v1530
    %v3019 = vunpack.c.l.b16 %v1531
    %v3020 = vunpack.c.h.b16 %v1531
    %v3021 = vunpack.c.l.b16 %v1532
    %v3022 = vunpack.c.h.b16 %v1532
    %v3023 = vunpack.c.l.b16 %v1533
    %v3024 = vunpack.c.h.b16 %v1533
    %v3025 = vunpack.c.l.b16 %v1534
    %v3026 = vunpack.c.h.b16 %v1534
    %v3027 = vunpack.c.l.b16 %v1535
    %v3028 = vunpack.c.h.b16 %v1535
    %v3029 = vunpack.c.l.b16 %v1536
    %v3030 = vunpack.c.h.b16 %v1536
    %v3031 = vunpack.c.l.b16 %v1537
    %v3032 = vunpack.c.h.b16 %v1537
    %v3033 = vunpack.c.l.b16 %v1538
    %v3034 = vunpack.c.h.b16 %v1538
    %v3035 = vunpack.c.l.b16 %v1539
    %v3036 = vunpack.c.h.b16 %v1539
    %v3037 = vunpack.c.l.b16 %v1540
    %v3038 = vunpack.c.h.b16 %v1540
    %v3039 = vunpack.c.l.b16 %v1541
    %v3040 = vunpack.c.h.b16 %v1541
    %v3041 = vunpack.c.l.b16 %v1542
    %v3042 = vunpack.c.h.b16 %v1542
    %v3043 = vunpack.c.l.b16 %v1543
    %v3044 = vunpack.c.h.b16 %v1543
    %v3045 = vunpack.c.l.b16 %v1544
    %v3046 = vunpack.c.h.b16 %v1544
    %v3047 = vunpack.c.l.b16 %v1545
    %v3048 = vunpack.c.h.b16 %v1545
    %v3049 = vunpack.c.l.b16 %v1546
    %v3050 = vunpack.c.h.b16 %v1546
    %v3051 = vunpack.c.l.b16 %v1547
    %v3052 = vunpack.c.h.b16 %v1547
    %v3053 = vunpack.c.l.b16 %v1548
    %v3054 = vunpack.c.h.b16 %v1548
    %v3055 = vunpack.c.l.b16 %v1549
    %v3056 = vunpack.c.h.b16 %v1549
    %v3057 = vunpack.c.l.b16 %v1550
    %v3058 = vunpack.c.h.b16 %v1550
    %v3059 = vunpack.c.l.b16 %v1551
    %v3060 = vunpack.c.h.b16 %v1551
    %v3061 = vunpack.c.l.b16 %v1552
    %v3062 = vunpack.c.h.b16 %v1552
    %v3063 = vunpack.c.l.b16 %v1553
    %v3064 = vunpack.c.h.b16 %v1553
    %v3065 = vunpack.c.l.b16 %v1554
    %v3066 = vunpack.c.h.b16 %v1554
    %v3067 = vunpack.c.l.b16 %v1555
    %v3068 = vunpack.c.h.b16 %v1555
    %v3069 = vunpack.c.l.b16 %v1556
    %v3070 = vunpack.c.h.b16 %v1556
    %v3071 = vunpack.c.l.b16 %v1557
    %v3072 = vunpack.c.h.b16 %v1557
    %v3073 = vunpack.c.l.b16 %v1558
    %v3074 = vunpack.c.h.b16 %v1558
    %v3075 = vunpack.c.l.b16 %v1559
    %v3076 = vunpack.c.h.b16 %v1559
    %v3077 = vunpack.c.l.b16 %v1560
    %v3078 = vunpack.c.h.b16 %v1560
    %v3079 = vunpack.c.l.b16 %v1561
    %v3080 = vunpack.c.h.b16 %v1561
    %v3081 = vunpack.c.l.b16 %v1562
    %v3082 = vunpack.c.h.b16 %v1562
    %v3083 = vunpack.c.l.b16 %v1563
    %v3084 = vunpack.c.h.b16 %v1563
    %v3085 = vunpack.c.l.b16 %v1564
    %v3086 = vunpack.c.h.b16 %v1564
    %v3087 = vunpack.c.l.b16 %v1565
    %v3088 = vunpack.c.h.b16 %v1565
    %v3089 = vunpack.c.l.b16 %v1566
    %v3090 = vunpack.c.h.b16 %v1566
    %v3091 = vunpack.c.l.b16 %v1567
    %v3092 = vunpack.c.h.b16 %v1567
    %v3093 = vunpack.c.l.b16 %v1568
    %v3094 = vunpack.c.h.b16 %v1568
    %v3095 = vunpack.c.l.b16 %v1569
    %v3096 = vunpack.c.h.b16 %v1569
    %v3097 = vunpack.c.l.b16 %v1570
    %v3098 = vunpack.c.h.b16 %v1570
    %v3099 = vunpack.c.l.b16 %v1571
    %v3100 = vunpack.c.h.b16 %v1571
    %v3101 = vunpack.c.l.b16 %v1572
    %v3102 = vunpack.c.h.b16 %v1572
    %v3103 = vunpack.c.l.b16 %v1573
    %v3104 = vunpack.c.h.b16 %v1573
    %v3105 = vunpack.c.l.b16 %v1574
    %v3106 = vunpack.c.h.b16 %v1574
    %v3107 = vunpack.c.l.b16 %v1575
    %v3108 = vunpack.c.h.b16 %v1575
    %v3109 = vunpack.c.l.b16 %v1576
    %v3110 = vunpack.c.h.b16 %v1576
    %v3111 = vunpack.c.l.b16 %v1577
    %v3112 = vunpack.c.h.b16 %v1577
    %v3113 = vunpack.c.l.b16 %v1578
    %v3114 = vunpack.c.h.b16 %v1578
    %v3115 = vunpack.c.l.b16 %v1579
    %v3116 = vunpack.c.h.b16 %v1579
    %v3117 = vunpack.c.l.b16 %v1580
    %v3118 = vunpack.c.h.b16 %v1580
    %v3119 = vunpack.c.l.b16 %v1581
    %v3120 = vunpack.c.h.b16 %v1581
    %v3121 = vunpack.c.l.b16 %v1582
    %v3122 = vunpack.c.h.b16 %v1582
    %v3123 = vunpack.c.l.b16 %v1583
    %v3124 = vunpack.c.h.b16 %v1583
    %v3125 = vunpack.c.l.b16 %v1584
    %v3126 = vunpack.c.h.b16 %v1584
    %v3127 = vunpack.c.l.b16 %v1585
    %v3128 = vunpack.c.h.b16 %v1585
    %v3129 = vunpack.c.l.b16 %v1586
    %v3130 = vunpack.c.h.b16 %v1586
    %v3131 = vunpack.c.l.b16 %v1587
    %v3132 = vunpack.c.h.b16 %v1587
    %v3133 = vunpack.c.l.b16 %v1588
    %v3134 = vunpack.c.h.b16 %v1588
    %v3135 = vunpack.c.l.b16 %v1589
    %v3136 = vunpack.c.h.b16 %v1589
    %v3137 = vunpack.c.l.b16 %v1590
    %v3138 = vunpack.c.h.b16 %v1590
    %v3139 = vunpack.c.l.b16 %v1591
    %v3140 = vunpack.c.h.b16 %v1591
    %v3141 = vunpack.c.l.b16 %v1592
    %v3142 = vunpack.c.h.b16 %v1592
    %v3143 = vunpack.c.l.b16 %v1593
    %v3144 = vunpack.c.h.b16 %v1593
    %v3145 = vunpack.c.l.b16 %v1594
    %v3146 = vunpack.c.h.b16 %v1594
    %v3147 = vunpack.c.l.b16 %v1595
    %v3148 = vunpack.c.h.b16 %v1595
    %v3149 = vunpack.c.l.b16 %v1596
    %v3150 = vunpack.c.h.b16 %v1596
    %v3151 = vunpack.c.l.b16 %v1597
    %v3152 = vunpack.c.h.b16 %v1597
    %v3153 = vunpack.c.l.b16 %v1598
    %v3154 = vunpack.c.h.b16 %v1598
    %v3155 = vunpack.c.l.b16 %v1599
    %v3156 = vunpack.c.h.b16 %v1599
    %v3157 = vunpack.c.l.b16 %v1600
    %v3158 = vunpack.c.h.b16 %v1600
    %v3159 = vunpack.c.l.b16 %v1601
    %v3160 = vunpack.c.h.b16 %v1601
    %v3161 = vunpack.c.l.b16 %v1602
    %v3162 = vunpack.c.h.b16 %v1602
    %v3163 = vunpack.c.l.b16 %v1603
    %v3164 = vunpack.c.h.b16 %v1603
    %v3165 = vunpack.c.l.b16 %v1604
    %v3166 = vunpack.c.h.b16 %v1604
    %v3167 = vunpack.c.l.b16 %v1605
    %v3168 = vunpack.c.h.b16 %v1605
    %v3169 = vunpack.c.l.b16 %v1606
    %v3170 = vunpack.c.h.b16 %v1606
    %v3171 = vunpack.c.l.b16 %v1607
    %v3172 = vunpack.c.h.b16 %v1607
    %v3173 = vunpack.c.l.b16 %v1608
    %v3174 = vunpack.c.h.b16 %v1608
    %v3175 = vunpack.c.l.b16 %v1609
    %v3176 = vunpack.c.h.b16 %v1609
    %v3177 = vunpack.c.l.b16 %v1610
    %v3178 = vunpack.c.h.b16 %v1610
    %v3179 = vunpack.c.l.b16 %v1611
    %v3180 = vunpack.c.h.b16 %v1611
    %v3181 = vunpack.c.l.b16 %v1612
    %v3182 = vunpack.c.h.b16 %v1612
    %v3183 = vunpack.c.l.b16 %v1613
    %v3184 = vunpack.c.h.b16 %v1613
    %v3185 = vunpack.c.l.b16 %v1614
    %v3186 = vunpack.c.h.b16 %v1614
    %v3187 = vunpack.c.l.b16 %v1615
    %v3188 = vunpack.c.h.b16 %v1615
    %v3189 = vunpack.c.l.b16 %v1616
    %v3190 = vunpack.c.h.b16 %v1616
    %v3191 = vunpack.c.l.b16 %v1617
    %v3192 = vunpack.c.h.b16 %v1617
    %v3193 = vunpack.c.l.b16 %v1618
    %v3194 = vunpack.c.h.b16 %v1618
    %v3195 = vunpack.c.l.b16 %v1619
    %v3196 = vunpack.c.h.b16 %v1619
    %v3197 = vunpack.c.l.b16 %v1620
    %v3198 = vunpack.c.h.b16 %v1620
    %v3199 = vpack.c.b16 %v2183, %v2175
    %v3200 = vpack.c.b16 %v2184, %v2176
    %v3201 = vpack.c.b16 %v2185, %v2177
    %v3202 = vpack.c.b16 %v2186, %v2178
    %v3203 = vpack.c.b16 %v2187, %v2179
    %v3204 = vpack.c.b16 %v2188, %v2180
    %v3205 = vpack.c.b16 %v2189, %v2181
    %v3206 = vpack.c.b16 %v2190, %v2182
    %v3207 = vpack.c.b16 %v2199, %v2191
    %v3208 = vpack.c.b16 %v2200, %v2192
    %v3209 = vpack.c.b16 %v2201, %v2193
    %v3210 = vpack.c.b16 %v2202, %v2194
    %v3211 = vpack.c.b16 %v2203, %v2195
    %v3212 = vpack.c.b16 %v2204, %v2196
    %v3213 = vpack.c.b16 %v2205, %v2197
    %v3214 = vpack.c.b16 %v2206, %v2198
    %v3215 = vpack.c.b16 %v2215, %v2207
    %v3216 = vpack.c.b16 %v2216, %v2208
    %v3217 = vpack.c.b16 %v2217, %v2209
    %v3218 = vpack.c.b16 %v2218, %v2210
    %v3219 = vpack.c.b16 %v2219, %v2211
    %v3220 = vpack.c.b16 %v2220, %v2212
    %v3221 = vpack.c.b16 %v2221, %v2213
    %v3222 = vpack.c.b16 %v2222, %v2214
    %v3223 = vpack.c.b16 %v2231, %v2223
    %v3224 = vpack.c.b16 %v2232, %v2224
    %v3225 = vpack.c.b16 %v2233, %v2225
    %v3226 = vpack.c.b16 %v2234, %v2226
    %v3227 = vpack.c.b16 %v2235, %v2227
    %v3228 = vpack.c.b16 %v2236, %v2228
    %v3229 = vpack.c.b16 %v2237, %v2229
    %v3230 = vpack.c.b16 %v2238, %v2230
    %v3231 = vpack.c.b16 %v2247, %v2239
    %v3232 = vpack.c.b16 %v2248, %v2240
    %v3233 = vpack.c.b16 %v2249, %v2241
    %v3234 = vpack.c.b16 %v2250, %v2242
    %v3235 = vpack.c.b16 %v2251, %v2243
    %v3236 = vpack.c.b16 %v2252, %v2244
    %v3237 = vpack.c.b16 %v2253, %v2245
    %v3238 = vpack.c.b16 %v2254, %v2246
    %v3239 = vpack.c.b16 %v2263, %v2255
    %v3240 = vpack.c.b16 %v2264, %v2256
    %v3241 = vpack.c.b16 %v2265, %v2257
    %v3242 = vpack.c.b16 %v2266, %v2258
    %v3243 = vpack.c.b16 %v2267, %v2259
    %v3244 = vpack.c.b16 %v2268, %v2260
    %v3245 = vpack.c.b16 %v2269, %v2261
    %v3246 = vpack.c.b16 %v2270, %v2262
    %v3247 = vpack.c.b16 %v2279, %v2271
    %v3248 = vpack.c.b16 %v2280, %v2272
    %v3249 = vpack.c.b16 %v2281, %v2273
    %v3250 = vpack.c.b16 %v2282, %v2274
    %v3251 = vpack.c.b16 %v2283, %v2275
    %v3252 = vpack.c.b16 %v2284, %v2276
    %v3253 = vpack.c.b16 %v2285, %v2277
    %v3254 = vpack.c.b16 %v2286, %v2278
    %v3255 = vpack.c.b16 %v2295, %v2287
    %v3256 = vpack.c.b16 %v2296, %v2288
    %v3257 = vpack.c.b16 %v2297, %v2289
    %v3258 = vpack.c.b16 %v2298, %v2290
    %v3259 = vpack.c.b16 %v2299, %v2291
    %v3260 = vpack.c.b16 %v2300, %v2292
    %v3261 = vpack.c.b16 %v2301, %v2293
    %v3262 = vpack.c.b16 %v2302, %v2294
    %v3263 = vpack.c.b16 %v2311, %v2303
    %v3264 = vpack.c.b16 %v2312, %v2304
    %v3265 = vpack.c.b16 %v2313, %v2305
    %v3266 = vpack.c.b16 %v2314, %v2306
    %v3267 = vpack.c.b16 %v2315, %v2307
    %v3268 = vpack.c.b16 %v2316, %v2308
    %v3269 = vpack.c.b16 %v2317, %v2309
    %v3270 = vpack.c.b16 %v2318, %v2310
    %v3271 = vpack.c.b16 %v2327, %v2319
    %v3272 = vpack.c.b16 %v2328, %v2320
    %v3273 = vpack.c.b16 %v2329, %v2321
    %v3274 = vpack.c.b16 %v2330, %v2322
    %v3275 = vpack.c.b16 %v2331, %v2323
    %v3276 = vpack.c.b16 %v2332, %v2324
    %v3277 = vpack.c.b16 %v2333, %v2325
    %v3278 = vpack.c.b16 %v2334, %v2326
    %v3279 = vpack.c.b16 %v2343, %v2335
    %v3280 = vpack.c.b16 %v2344, %v2336
    %v3281 = vpack.c.b16 %v2345, %v2337
    %v3282 = vpack.c.b16 %v2346, %v2338
    %v3283 = vpack.c.b16 %v2347, %v2339
    %v3284 = vpack.c.b16 %v2348, %v2340
    %v3285 = vpack.c.b16 %v2349, %v2341
    %v3286 = vpack.c.b16 %v2350, %v2342
    %v3287 = vpack.c.b16 %v2359, %v2351
    %v3288 = vpack.c.b16 %v2360, %v2352
    %v3289 = vpack.c.b16 %v2361, %v2353
    %v3290 = vpack.c.b16 %v2362, %v2354
    %v3291 = vpack.c.b16 %v2363, %v2355
    %v3292 = vpack.c.b16 %v2364, %v2356
    %v3293 = vpack.c.b16 %v2365, %v2357
    %v3294 = vpack.c.b16 %v2366, %v2358
    %v3295 = vpack.c.b16 %v2375, %v2367
    %v3296 = vpack.c.b16 %v2376, %v2368
    %v3297 = vpack.c.b16 %v2377, %v2369
    %v3298 = vpack.c.b16 %v2378, %v2370
    %v3299 = vpack.c.b16 %v2379, %v2371
    %v3300 = vpack.c.b16 %v2380, %v2372
    %v3301 = vpack.c.b16 %v2381, %v2373
    %v3302 = vpack.c.b16 %v2382, %v2374
    %v3303 = vpack.c.b16 %v2391, %v2383
    %v3304 = vpack.c.b16 %v2392, %v2384
    %v3305 = vpack.c.b16 %v2393, %v2385
    %v3306 = vpack.c.b16 %v2394, %v2386
    %v3307 = vpack.c.b16 %v2395, %v2387
    %v3308 = vpack.c.b16 %v2396, %v2388
    %v3309 = vpack.c.b16 %v2397, %v2389
    %v3310 = vpack.c.b16 %v2398, %v2390
    %v3311 = vpack.c.b16 %v2407, %v2399
    %v3312 = vpack.c.b16 %v2408, %v2400
    %v3313 = vpack.c.b16 %v2409, %v2401
    %v3314 = vpack.c.b16 %v2410, %v2402
    %v3315 = vpack.c.b16 %v2411, %v2403
    %v3316 = vpack.c.b16 %v2412, %v2404
    %v3317 = vpack.c.b16 %v2413, %v2405
    %v3318 = vpack.c.b16 %v2414, %v2406
    %v3319 = vpack.c.b16 %v2423, %v2415
    %v3320 = vpack.c.b16 %v2424, %v2416
    %v3321 = vpack.c.b16 %v2425, %v2417
    %v3322 = vpack.c.b16 %v2426, %v2418
    %v3323 = vpack.c.b16 %v2427, %v2419
    %v3324 = vpack.c.b16 %v2428, %v2420
    %v3325 = vpack.c.b16 %v2429, %v2421
    %v3326 = vpack.c.b16 %v2430, %v2422
    %v3327 = vpack.c.b16 %v2439, %v2431
    %v3328 = vpack.c.b16 %v2440, %v2432
    %v3329 = vpack.c.b16 %v2441, %v2433
    %v3330 = vpack.c.b16 %v2442, %v2434
    %v3331 = vpack.c.b16 %v2443, %v2435
    %v3332 = vpack.c.b16 %v2444, %v2436
    %v3333 = vpack.c.b16 %v2445, %v2437
    %v3334 = vpack.c.b16 %v2446, %v2438
    %v3335 = vpack.c.b16 %v2455, %v2447
    %v3336 = vpack.c.b16 %v2456, %v2448
    %v3337 = vpack.c.b16 %v2457, %v2449
    %v3338 = vpack.c.b16 %v2458, %v2450
    %v3339 = vpack.c.b16 %v2459, %v2451
    %v3340 = vpack.c.b16 %v2460, %v2452
    %v3341 = vpack.c.b16 %v2461, %v2453
    %v3342 = vpack.c.b16 %v2462, %v2454
    %v3343 = vpack.c.b16 %v2471, %v2463
    %v3344 = vpack.c.b16 %v2472, %v2464
    %v3345 = vpack.c.b16 %v2473, %v2465
    %v3346 = vpack.c.b16 %v2474, %v2466
    %v3347 = vpack.c.b16 %v2475, %v2467
    %v3348 = vpack.c.b16 %v2476, %v2468
    %v3349 = vpack.c.b16 %v2477, %v2469
    %v3350 = vpack.c.b16 %v2478, %v2470
    %v3351 = vpack.c.b16 %v2487, %v2479
    %v3352 = vpack.c.b16 %v2488, %v2480
    %v3353 = vpack.c.b16 %v2489, %v2481
    %v3354 = vpack.c.b16 %v2490, %v2482
    %v3355 = vpack.c.b16 %v2491, %v2483
    %v3356 = vpack.c.b16 %v2492, %v2484
    %v3357 = vpack.c.b16 %v2493, %v2485
    %v3358 = vpack.c.b16 %v2494, %v2486
    %v3359 = vpack.c.b16 %v2503, %v2495
    %v3360 = vpack.c.b16 %v2504, %v2496
    %v3361 = vpack.c.b16 %v2505, %v2497
    %v3362 = vpack.c.b16 %v2506, %v2498
    %v3363 = vpack.c.b16 %v2507, %v2499
    %v3364 = vpack.c.b16 %v2508, %v2500
    %v3365 = vpack.c.b16 %v2509, %v2501
    %v3366 = vpack.c.b16 %v2510, %v2502
    %v3367 = vpack.c.b16 %v2519, %v2511
    %v3368 = vpack.c.b16 %v2520, %v2512
    %v3369 = vpack.c.b16 %v2521, %v2513
    %v3370 = vpack.c.b16 %v2522, %v2514
    %v3371 = vpack.c.b16 %v2523, %v2515
    %v3372 = vpack.c.b16 %v2524, %v2516
    %v3373 = vpack.c.b16 %v2525, %v2517
    %v3374 = vpack.c.b16 %v2526, %v2518
    %v3375 = vpack.c.b16 %v2535, %v2527
    %v3376 = vpack.c.b16 %v2536, %v2528
    %v3377 = vpack.c.b16 %v2537, %v2529
    %v3378 = vpack.c.b16 %v2538, %v2530
    %v3379 = vpack.c.b16 %v2539, %v2531
    %v3380 = vpack.c.b16 %v2540, %v2532
    %v3381 = vpack.c.b16 %v2541, %v2533
    %v3382 = vpack.c.b16 %v2542, %v2534
    %v3383 = vpack.c.b16 %v2551, %v2543
    %v3384 = vpack.c.b16 %v2552, %v2544
    %v3385 = vpack.c.b16 %v2553, %v2545
    %v3386 = vpack.c.b16 %v2554, %v2546
    %v3387 = vpack.c.b16 %v2555, %v2547
    %v3388 = vpack.c.b16 %v2556, %v2548
    %v3389 = vpack.c.b16 %v2557, %v2549
    %v3390 = vpack.c.b16 %v2558, %v2550
    %v3391 = vpack.c.b16 %v2567, %v2559
    %v3392 = vpack.c.b16 %v2568, %v2560
    %v3393 = vpack.c.b16 %v2569, %v2561
    %v3394 = vpack.c.b16 %v2570, %v2562
    %v3395 = vpack.c.b16 %v2571, %v2563
    %v3396 = vpack.c.b16 %v2572, %v2564
    %v3397 = vpack.c.b16 %v2573, %v2565
    %v3398 = vpack.c.b16 %v2574, %v2566
    %v3399 = vpack.c.b16 %v2583, %v2575
    %v3400 = vpack.c.b16 %v2584, %v2576
    %v3401 = vpack.c.b16 %v2585, %v2577
    %v3402 = vpack.c.b16 %v2586, %v2578
    %v3403 = vpack.c.b16 %v2587, %v2579
    %v3404 = vpack.c.b16 %v2588, %v2580
    %v3405 = vpack.c.b16 %v2589, %v2581
    %v3406 = vpack.c.b16 %v2590, %v2582
    %v3407 = vpack.c.b16 %v2599, %v2591
    %v3408 = vpack.c.b16 %v2600, %v2592
    %v3409 = vpack.c.b16 %v2601, %v2593
    %v3410 = vpack.c.b16 %v2602, %v2594
    %v3411 = vpack.c.b16 %v2603, %v2595
    %v3412 = vpack.c.b16 %v2604, %v2596
    %v3413 = vpack.c.b16 %v2605, %v2597
    %v3414 = vpack.c.b16 %v2606, %v2598
    %v3415 = vpack.c.b16 %v2615, %v2607
    %v3416 = vpack.c.b16 %v2616, %v2608
    %v3417 = vpack.c.b16 %v2617, %v2609
    %v3418 = vpack.c.b16 %v2618, %v2610
    %v3419 = vpack.c.b16 %v2619, %v2611
    %v3420 = vpack.c.b16 %v2620, %v2612
    %v3421 = vpack.c.b16 %v2621, %v2613
    %v3422 = vpack.c.b16 %v2622, %v2614
    %v3423 = vpack.c.b16 %v2631, %v2623
    %v3424 = vpack.c.b16 %v2632, %v2624
    %v3425 = vpack.c.b16 %v2633, %v2625
    %v3426 = vpack.c.b16 %v2634, %v2626
    %v3427 = vpack.c.b16 %v2635, %v2627
    %v3428 = vpack.c.b16 %v2636, %v2628
    %v3429 = vpack.c.b16 %v2637, %v2629
    %v3430 = vpack.c.b16 %v2638, %v2630
    %v3431 = vpack.c.b16 %v2647, %v2639
    %v3432 = vpack.c.b16 %v2648, %v2640
    %v3433 = vpack.c.b16 %v2649, %v2641
    %v3434 = vpack.c.b16 %v2650, %v2642
    %v3435 = vpack.c.b16 %v2651, %v2643
    %v3436 = vpack.c.b16 %v2652, %v2644
    %v3437 = vpack.c.b16 %v2653, %v2645
    %v3438 = vpack.c.b16 %v2654, %v2646
    %v3439 = vpack.c.b16 %v2663, %v2655
    %v3440 = vpack.c.b16 %v2664, %v2656
    %v3441 = vpack.c.b16 %v2665, %v2657
    %v3442 = vpack.c.b16 %v2666, %v2658
    %v3443 = vpack.c.b16 %v2667, %v2659
    %v3444 = vpack.c.b16 %v2668, %v2660
    %v3445 = vpack.c.b16 %v2669, %v2661
    %v3446 = vpack.c.b16 %v2670, %v2662
    %v3447 = vpack.c.b16 %v2679, %v2671
    %v3448 = vpack.c.b16 %v2680, %v2672
    %v3449 = vpack.c.b16 %v2681, %v2673
    %v3450 = vpack.c.b16 %v2682, %v2674
    %v3451 = vpack.c.b16 %v2683, %v2675
    %v3452 = vpack.c.b16 %v2684, %v2676
    %v3453 = vpack.c.b16 %v2685, %v2677
    %v3454 = vpack.c.b16 %v2686, %v2678
    %v3455 = vpack.c.b16 %v2695, %v2687
    %v3456 = vpack.c.b16 %v2696, %v2688
    %v3457 = vpack.c.b16 %v2697, %v2689
    %v3458 = vpack.c.b16 %v2698, %v2690
    %v3459 = vpack.c.b16 %v2699, %v2691
    %v3460 = vpack.c.b16 %v2700, %v2692
    %v3461 = vpack.c.b16 %v2701, %v2693
    %v3462 = vpack.c.b16 %v2702, %v2694
    %v3463 = vpack.c.b16 %v2711, %v2703
    %v3464 = vpack.c.b16 %v2712, %v2704
    %v3465 = vpack.c.b16 %v2713, %v2705
    %v3466 = vpack.c.b16 %v2714, %v2706
    %v3467 = vpack.c.b16 %v2715, %v2707
    %v3468 = vpack.c.b16 %v2716, %v2708
    %v3469 = vpack.c.b16 %v2717, %v2709
    %v3470 = vpack.c.b16 %v2718, %v2710
    %v3471 = vpack.c.b16 %v2727, %v2719
    %v3472 = vpack.c.b16 %v2728, %v2720
    %v3473 = vpack.c.b16 %v2729, %v2721
    %v3474 = vpack.c.b16 %v2730, %v2722
    %v3475 = vpack.c.b16 %v2731, %v2723
    %v3476 = vpack.c.b16 %v2732, %v2724
    %v3477 = vpack.c.b16 %v2733, %v2725
    %v3478 = vpack.c.b16 %v2734, %v2726
    %v3479 = vpack.c.b16 %v2743, %v2735
    %v3480 = vpack.c.b16 %v2744, %v2736
    %v3481 = vpack.c.b16 %v2745, %v2737
    %v3482 = vpack.c.b16 %v2746, %v2738
    %v3483 = vpack.c.b16 %v2747, %v2739
    %v3484 = vpack.c.b16 %v2748, %v2740
    %v3485 = vpack.c.b16 %v2749, %v2741
    %v3486 = vpack.c.b16 %v2750, %v2742
    %v3487 = vpack.c.b16 %v2759, %v2751
    %v3488 = vpack.c.b16 %v2760, %v2752
    %v3489 = vpack.c.b16 %v2761, %v2753
    %v3490 = vpack.c.b16 %v2762, %v2754
    %v3491 = vpack.c.b16 %v2763, %v2755
    %v3492 = vpack.c.b16 %v2764, %v2756
    %v3493 = vpack.c.b16 %v2765, %v2757
    %v3494 = vpack.c.b16 %v2766, %v2758
    %v3495 = vpack.c.b16 %v2775, %v2767
    %v3496 = vpack.c.b16 %v2776, %v2768
    %v3497 = vpack.c.b16 %v2777, %v2769
    %v3498 = vpack.c.b16 %v2778, %v2770
    %v3499 = vpack.c.b16 %v2779, %v2771
    %v3500 = vpack.c.b16 %v2780, %v2772
    %v3501 = vpack.c.b16 %v2781, %v2773
    %v3502 = vpack.c.b16 %v2782, %v2774
    %v3503 = vpack.c.b16 %v2791, %v2783
    %v3504 = vpack.c.b16 %v2792, %v2784
    %v3505 = vpack.c.b16 %v2793, %v2785
    %v3506 = vpack.c.b16 %v2794, %v2786
    %v3507 = vpack.c.b16 %v2795, %v2787
    %v3508 = vpack.c.b16 %v2796, %v2788
    %v3509 = vpack.c.b16 %v2797, %v2789
    %v3510 = vpack.c.b16 %v2798, %v2790
    %v3511 = vpack.c.b16 %v2807, %v2799
    %v3512 = vpack.c.b16 %v2808, %v2800
    %v3513 = vpack.c.b16 %v2809, %v2801
    %v3514 = vpack.c.b16 %v2810, %v2802
    %v3515 = vpack.c.b16 %v2811, %v2803
    %v3516 = vpack.c.b16 %v2812, %v2804
    %v3517 = vpack.c.b16 %v2813, %v2805
    %v3518 = vpack.c.b16 %v2814, %v2806
    %v3519 = vpack.c.b16 %v2823, %v2815
    %v3520 = vpack.c.b16 %v2824, %v2816
    %v3521 = vpack.c.b16 %v2825, %v2817
    %v3522 = vpack.c.b16 %v2826, %v2818
    %v3523 = vpack.c.b16 %v2827, %v2819
    %v3524 = vpack.c.b16 %v2828, %v2820
    %v3525 = vpack.c.b16 %v2829, %v2821
    %v3526 = vpack.c.b16 %v2830, %v2822
    %v3527 = vpack.c.b16 %v2839, %v2831
    %v3528 = vpack.c.b16 %v2840, %v2832
    %v3529 = vpack.c.b16 %v2841, %v2833
    %v3530 = vpack.c.b16 %v2842, %v2834
    %v3531 = vpack.c.b16 %v2843, %v2835
    %v3532 = vpack.c.b16 %v2844, %v2836
    %v3533 = vpack.c.b16 %v2845, %v2837
    %v3534 = vpack.c.b16 %v2846, %v2838
    %v3535 = vpack.c.b16 %v2855, %v2847
    %v3536 = vpack.c.b16 %v2856, %v2848
    %v3537 = vpack.c.b16 %v2857, %v2849
    %v3538 = vpack.c.b16 %v2858, %v2850
    %v3539 = vpack.c.b16 %v2859, %v2851
    %v3540 = vpack.c.b16 %v2860, %v2852
    %v3541 = vpack.c.b16 %v2861, %v2853
    %v3542 = vpack.c.b16 %v2862, %v2854
    %v3543 = vpack.c.b16 %v2871, %v2863
    %v3544 = vpack.c.b16 %v2872, %v2864
    %v3545 = vpack.c.b16 %v2873, %v2865
    %v3546 = vpack.c.b16 %v2874, %v2866
    %v3547 = vpack.c.b16 %v2875, %v2867
    %v3548 = vpack.c.b16 %v2876, %v2868
    %v3549 = vpack.c.b16 %v2877, %v2869
    %v3550 = vpack.c.b16 %v2878, %v2870
    %v3551 = vpack.c.b16 %v2887, %v2879
    %v3552 = vpack.c.b16 %v2888, %v2880
    %v3553 = vpack.c.b16 %v2889, %v2881
    %v3554 = vpack.c.b16 %v2890, %v2882
    %v3555 = vpack.c.b16 %v2891, %v2883
    %v3556 = vpack.c.b16 %v2892, %v2884
    %v3557 = vpack.c.b16 %v2893, %v2885
    %v3558 = vpack.c.b16 %v2894, %v2886
    %v3559 = vpack.c.b16 %v2903, %v2895
    %v3560 = vpack.c.b16 %v2904, %v2896
    %v3561 = vpack.c.b16 %v2905, %v2897
    %v3562 = vpack.c.b16 %v2906, %v2898
    %v3563 = vpack.c.b16 %v2907, %v2899
    %v3564 = vpack.c.b16 %v2908, %v2900
    %v3565 = vpack.c.b16 %v2909, %v2901
    %v3566 = vpack.c.b16 %v2910, %v2902
    %v3567 = vpack.c.b16 %v2919, %v2911
    %v3568 = vpack.c.b16 %v2920, %v2912
    %v3569 = vpack.c.b16 %v2921, %v2913
    %v3570 = vpack.c.b16 %v2922, %v2914
    %v3571 = vpack.c.b16 %v2923, %v2915
    %v3572 = vpack.c.b16 %v2924, %v2916
    %v3573 = vpack.c.b16 %v2925, %v2917
    %v3574 = vpack.c.b16 %v2926, %v2918
    %v3575 = vpack.c.b16 %v2935, %v2927
    %v3576 = vpack.c.b16 %v2936, %v2928
    %v3577 = vpack.c.b16 %v2937, %v2929
    %v3578 = vpack.c.b16 %v2938, %v2930
    %v3579 = vpack.c.b16 %v2939, %v2931
    %v3580 = vpack.c.b16 %v2940, %v2932
    %v3581 = vpack.c.b16 %v2941, %v2933
    %v3582 = vpack.c.b16 %v2942, %v2934
    %v3583 = vpack.c.b16 %v2951, %v2943
    %v3584 = vpack.c.b16 %v2952, %v2944
    %v3585 = vpack.c.b16 %v2953, %v2945
    %v3586 = vpack.c.b16 %v2954, %v2946
    %v3587 = vpack.c.b16 %v2955, %v2947
    %v3588 = vpack.c.b16 %v2956, %v2948
    %v3589 = vpack.c.b16 %v2957, %v2949
    %v3590 = vpack.c.b16 %v2958, %v2950
    %v3591 = vpack.c.b16 %v2967, %v2959
    %v3592 = vpack.c.b16 %v2968, %v2960
    %v3593 = vpack.c.b16 %v2969, %v2961
    %v3594 = vpack.c.b16 %v2970, %v2962
    %v3595 = vpack.c.b16 %v2971, %v2963
    %v3596 = vpack.c.b16 %v2972, %v2964
    %v3597 = vpack.c.b16 %v2973, %v2965
    %v3598 = vpack.c.b16 %v2974, %v2966
    %v3599 = vpack.c.b16 %v2983, %v2975
    %v3600 = vpack.c.b16 %v2984, %v2976
    %v3601 = vpack.c.b16 %v2985, %v2977
    %v3602 = vpack.c.b16 %v2986, %v2978
    %v3603 = vpack.c.b16 %v2987, %v2979
    %v3604 = vpack.c.b16 %v2988, %v2980
    %v3605 = vpack.c.b16 %v2989, %v2981
    %v3606 = vpack.c.b16 %v2990, %v2982
    %v3607 = vpack.c.b16 %v2999, %v2991
    %v3608 = vpack.c.b16 %v3000, %v2992
    %v3609 = vpack.c.b16 %v3001, %v2993
    %v3610 = vpack.c.b16 %v3002, %v2994
    %v3611 = vpack.c.b16 %v3003, %v2995
    %v3612 = vpack.c.b16 %v3004, %v2996
    %v3613 = vpack.c.b16 %v3005, %v2997
    %v3614 = vpack.c.b16 %v3006, %v2998
    %v3615 = vpack.c.b16 %v3015, %v3007
    %v3616 = vpack.c.b16 %v3016, %v3008
    %v3617 = vpack.c.b16 %v3017, %v3009
    %v3618 = vpack.c.b16 %v3018, %v3010
    %v3619 = vpack.c.b16 %v3019, %v3011
    %v3620 = vpack.c.b16 %v3020, %v3012
    %v3621 = vpack.c.b16 %v3021, %v3013
    %v3622 = vpack.c.b16 %v3022, %v3014
    %v3623 = vpack.c.b16 %v3031, %v3023
    %v3624 = vpack.c.b16 %v3032, %v3024
    %v3625 = vpack.c.b16 %v3033, %v3025
    %v3626 = vpack.c.b16 %v3034, %v3026
    %v3627 = vpack.c.b16 %v3035, %v3027
    %v3628 = vpack.c.b16 %v3036, %v3028
    %v3629 = vpack.c.b16 %v3037, %v3029
    %v3630 = vpack.c.b16 %v3038, %v3030
    %v3631 = vpack.c.b16 %v3047, %v3039
    %v3632 = vpack.c.b16 %v3048, %v3040
    %v3633 = vpack.c.b16 %v3049, %v3041
    %v3634 = vpack.c.b16 %v3050, %v3042
    %v3635 = vpack.c.b16 %v3051, %v3043
    %v3636 = vpack.c.b16 %v3052, %v3044
    %v3637 = vpack.c.b16 %v3053, %v3045
    %v3638 = vpack.c.b16 %v3054, %v3046
    %v3639 = vpack.c.b16 %v3063, %v3055
    %v3640 = vpack.c.b16 %v3064, %v3056
    %v3641 = vpack.c.b16 %v3065, %v3057
    %v3642 = vpack.c.b16 %v3066, %v3058
    %v3643 = vpack.c.b16 %v3067, %v3059
    %v3644 = vpack.c.b16 %v3068, %v3060
    %v3645 = vpack.c.b16 %v3069, %v3061
    %v3646 = vpack.c.b16 %v3070, %v3062
    %v3647 = vpack.c.b16 %v3079, %v3071
    %v3648 = vpack.c.b16 %v3080, %v3072
    %v3649 = vpack.c.b16 %v3081, %v3073
    %v3650 = vpack.c.b16 %v3082, %v3074
    %v3651 = vpack.c.b16 %v3083, %v3075
    %v3652 = vpack.c.b16 %v3084, %v3076
    %v3653 = vpack.c.b16 %v3085, %v3077
    %v3654 = vpack.c.b16 %v3086, %v3078
    %v3655 = vpack.c.b16 %v3095, %v3087
    %v3656 = vpack.c.b16 %v3096, %v3088
    %v3657 = vpack.c.b16 %v3097, %v3089
    %v3658 = vpack.c.b16 %v3098, %v3090
    %v3659 = vpack.c.b16 %v3099, %v3091
    %v3660 = vpack.c.b16 %v3100, %v3092
    %v3661 = vpack.c.b16 %v3101, %v3093
    %v3662 = vpack.c.b16 %v3102, %v3094
    %v3663 = vpack.c.b16 %v3111, %v3103
    %v3664 = vpack.c.b16 %v3112, %v3104
    %v3665 = vpack.c.b16 %v3113, %v3105
    %v3666 = vpack.c.b16 %v3114, %v3106
    %v3667 = vpack.c.b16 %v3115, %v3107
    %v3668 = vpack.c.b16 %v3116, %v3108
    %v3669 = vpack.c.b16 %v3117, %v3109
    %v3670 = vpack.c.b16 %v3118, %v3110
    %v3671 = vpack.c.b16 %v3127, %v3119
    %v3672 = vpack.c.b16 %v3128, %v3120
    %v3673 = vpack.c.b16 %v3129, %v3121
    %v3674 = vpack.c.b16 %v3130, %v3122
    %v3675 = vpack.c.b16 %v3131, %v3123
    %v3676 = vpack.c.b16 %v3132, %v3124
    %v3677 = vpack.c.b16 %v3133, %v3125
    %v3678 = vpack.c.b16 %v3134, %v3126
    %v3679 = vpack.c.b16 %v3143, %v3135
    %v3680 = vpack.c.b16 %v3144, %v3136
    %v3681 = vpack.c.b16 %v3145, %v3137
    %v3682 = vpack.c.b16 %v3146, %v3138
    %v3683 = vpack.c.b16 %v3147, %v3139
    %v3684 = vpack.c.b16 %v3148, %v3140
    %v3685 = vpack.c.b16 %v3149, %v3141
    %v3686 = vpack.c.b16 %v3150, %v3142
    %v3687 = vpack.c.b16 %v3159, %v3151
    %v3688 = vpack.c.b16 %v3160, %v3152
    %v3689 = vpack.c.b16 %v3161, %v3153
    %v3690 = vpack.c.b16 %v3162, %v3154
    %v3691 = vpack.c.b16 %v3163, %v3155
    %v3692 = vpack.c.b16 %v3164, %v3156
    %v3693 = vpack.c.b16 %v3165, %v3157
    %v3694 = vpack.c.b16 %v3166, %v3158
    %v3695 = vpack.c.b16 %v3175, %v3167
    %v3696 = vpack.c.b16 %v3176, %v3168
    %v3697 = vpack.c.b16 %v3177, %v3169
    %v3698 = vpack.c.b16 %v3178, %v3170
    %v3699 = vpack.c.b16 %v3179, %v3171
    %v3700 = vpack.c.b16 %v3180, %v3172
    %v3701 = vpack.c.b16 %v3181, %v3173
    %v3702 = vpack.c.b16 %v3182, %v3174
    %v3703 = vpack.c.b16 %v3191, %v3183
    %v3704 = vpack.c.b16 %v3192, %v3184
    %v3705 = vpack.c.b16 %v3193, %v3185
    %v3706 = vpack.c.b16 %v3194, %v3186
    %v3707 = vpack.c.b16 %v3195, %v3187
    %v3708 = vpack.c.b16 %v3196, %v3188
    %v3709 = vpack.c.b16 %v3197, %v3189
    %v3710 = vpack.c.b16 %v3198, %v3190
    %4223 = vmatprep.subr.bf16.mxu0 %v3256
    %4224 = vmatpush1.bf16.msra.mxu0 %v3255
    %4225 = vmatprep.subr.bf16.mxu0 %v3248
    %4226 = vmatpush1.bf16.msra.mxu0 %v3247
    %4227 = vmatprep.subr.bf16.mxu0 %v3240
    %4228 = vmatpush1.bf16.msra.mxu0 %v3239
    %4229 = vmatprep.subr.bf16.mxu0 %v3232
    %4230 = vmatpush1.bf16.msra.mxu0 %v3231
    %4231 = vmatprep.subr.bf16.mxu0 %v3224
    %4232 = vmatpush1.bf16.msra.mxu0 %v3223
    %4233 = vmatprep.subr.bf16.mxu0 %v3216
    %4234 = vmatpush1.bf16.msra.mxu0 %v3215
    %4235 = vmatprep.subr.bf16.mxu0 %v3208
    %4236 = vmatpush1.bf16.msra.mxu0 %v3207
    %4237 = vmatprep.subr.bf16.mxu0 %v3200
    %4238 = vmatpush1.bf16.msra.mxu0 %v3199
    %4239 = vmatprep.subr.bf16.mxu0 %v3320
    %4240 = vmatpush2.bf16.msra.mxu0 %v3319
    %4241 = vmatprep.subr.bf16.mxu0 %v3312
    %4242 = vmatpush2.bf16.msra.mxu0 %v3311
    %4243 = vmatprep.subr.bf16.mxu0 %v3304
    %4244 = vmatpush2.bf16.msra.mxu0 %v3303
    %4245 = vmatprep.subr.bf16.mxu0 %v3296
    %4246 = vmatpush2.bf16.msra.mxu0 %v3295
    %4247 = vmatprep.subr.bf16.mxu0 %v3288
    %4248 = vmatpush2.bf16.msra.mxu0 %v3287
    %4249 = vmatprep.subr.bf16.mxu0 %v3280
    %4250 = vmatpush2.bf16.msra.mxu0 %v3279
    %4251 = vmatprep.subr.bf16.mxu0 %v3272
    %4252 = vmatpush2.bf16.msra.mxu0 %v3271
    %4253 = vmatprep.subr.bf16.mxu0 %v3264
    %4254 = vmatpush2.bf16.msra.mxu0 %v3263
    %4255 = vmatprep.mubr.bf16.mxu0 %v1102
    %4256 = vmatmul.mubr.bf16.gmra.mxu0 %v1101
    %v4257 = vpop.f32.mrf.mxu0
    %v4258 = vadd.f32 %v1626, %v4257
    %v4259 = vpop.f32.mrf.mxu0
    %v4260 = vadd.f32 %v1630, %v4259
    %v4261 = vpop.f32.mrf.mxu0
    %v4262 = vpop.f32.mrf.mxu0
    %4263 = vdwg.mxu0
    %4264 = vmatprep.subr.bf16.mxu0 %v3384
    %4265 = vmatpush1.bf16.msra.mxu0 %v3383
    %4266 = vmatprep.subr.bf16.mxu0 %v3376
    %4267 = vmatpush1.bf16.msra.mxu0 %v3375
    %4268 = vmatprep.subr.bf16.mxu0 %v3368
    %4269 = vmatpush1.bf16.msra.mxu0 %v3367
    %4270 = vmatprep.subr.bf16.mxu0 %v3360
    %4271 = vmatpush1.bf16.msra.mxu0 %v3359
    %4272 = vmatprep.subr.bf16.mxu0 %v3352
    %4273 = vmatpush1.bf16.msra.mxu0 %v3351
    %4274 = vmatprep.subr.bf16.mxu0 %v3344
    %4275 = vmatpush1.bf16.msra.mxu0 %v3343
    %4276 = vmatprep.subr.bf16.mxu0 %v3336
    %4277 = vmatpush1.bf16.msra.mxu0 %v3335
    %4278 = vmatprep.subr.bf16.mxu0 %v3328
    %4279 = vmatpush1.bf16.msra.mxu0 %v3327
    %4280 = vmatprep.subr.bf16.mxu0 %v3448
    %4281 = vmatpush2.bf16.msra.mxu0 %v3447
    %4282 = vmatprep.subr.bf16.mxu0 %v3440
    %4283 = vmatpush2.bf16.msra.mxu0 %v3439
    %4284 = vmatprep.subr.bf16.mxu0 %v3432
    %4285 = vmatpush2.bf16.msra.mxu0 %v3431
    %4286 = vmatprep.subr.bf16.mxu0 %v3424
    %4287 = vmatpush2.bf16.msra.mxu0 %v3423
    %4288 = vmatprep.subr.bf16.mxu0 %v3416
    %4289 = vmatpush2.bf16.msra.mxu0 %v3415
    %4290 = vmatprep.subr.bf16.mxu0 %v3408
    %4291 = vmatpush2.bf16.msra.mxu0 %v3407
    %4292 = vmatprep.subr.bf16.mxu0 %v3400
    %4293 = vmatpush2.bf16.msra.mxu0 %v3399
    %4294 = vmatprep.subr.bf16.mxu0 %v3392
    %4295 = vmatpush2.bf16.msra.mxu0 %v3391
    %4296 = vmatprep.mubr.bf16.mxu0 %v1104
    %4297 = vmatmul.mubr.bf16.gmra.mxu0 %v1103
    %v4298 = vpop.f32.mrf.mxu0
    %v4299 = vadd.f32 %v4258, %v4298
    %v4300 = vpop.f32.mrf.mxu0
    %v4301 = vadd.f32 %v4260, %v4300
    %v4302 = vpop.f32.mrf.mxu0
    %v4303 = vpop.f32.mrf.mxu0
    %4304 = vdwg.mxu0
    %4305 = vmatprep.subr.bf16.mxu0 %v3512
    %4306 = vmatpush1.bf16.msra.mxu0 %v3511
    %4307 = vmatprep.subr.bf16.mxu0 %v3504
    %4308 = vmatpush1.bf16.msra.mxu0 %v3503
    %4309 = vmatprep.subr.bf16.mxu0 %v3496
    %4310 = vmatpush1.bf16.msra.mxu0 %v3495
    %4311 = vmatprep.subr.bf16.mxu0 %v3488
    %4312 = vmatpush1.bf16.msra.mxu0 %v3487
    %4313 = vmatprep.subr.bf16.mxu0 %v3480
    %4314 = vmatpush1.bf16.msra.mxu0 %v3479
    %4315 = vmatprep.subr.bf16.mxu0 %v3472
    %4316 = vmatpush1.bf16.msra.mxu0 %v3471
    %4317 = vmatprep.subr.bf16.mxu0 %v3464
    %4318 = vmatpush1.bf16.msra.mxu0 %v3463
    %4319 = vmatprep.subr.bf16.mxu0 %v3456
    %4320 = vmatpush1.bf16.msra.mxu0 %v3455
    %4321 = vmatprep.subr.bf16.mxu0 %v3576
    %4322 = vmatpush2.bf16.msra.mxu0 %v3575
    %4323 = vmatprep.subr.bf16.mxu0 %v3568
    %4324 = vmatpush2.bf16.msra.mxu0 %v3567
    %4325 = vmatprep.subr.bf16.mxu0 %v3560
    %4326 = vmatpush2.bf16.msra.mxu0 %v3559
    %4327 = vmatprep.subr.bf16.mxu0 %v3552
    %4328 = vmatpush2.bf16.msra.mxu0 %v3551
    %4329 = vmatprep.subr.bf16.mxu0 %v3544
    %4330 = vmatpush2.bf16.msra.mxu0 %v3543
    %4331 = vmatprep.subr.bf16.mxu0 %v3536
    %4332 = vmatpush2.bf16.msra.mxu0 %v3535
    %4333 = vmatprep.subr.bf16.mxu0 %v3528
    %4334 = vmatpush2.bf16.msra.mxu0 %v3527
    %4335 = vmatprep.subr.bf16.mxu0 %v3520
    %4336 = vmatpush2.bf16.msra.mxu0 %v3519
    %4337 = vmatprep.mubr.bf16.mxu0 %v1106
    %4338 = vmatmul.mubr.bf16.gmra.mxu0 %v1105
    %v4339 = vpop.f32.mrf.mxu0
    %v4340 = vadd.f32 %v4299, %v4339
    %v4341 = vpop.f32.mrf.mxu0
    %v4342 = vadd.f32 %v4301, %v4341
    %v4343 = vpop.f32.mrf.mxu0
    %v4344 = vpop.f32.mrf.mxu0
    %4345 = vdwg.mxu0
    %4346 = vmatprep.subr.bf16.mxu0 %v3640
    %4347 = vmatpush1.bf16.msra.mxu0 %v3639
    %4348 = vmatprep.subr.bf16.mxu0 %v3632
    %4349 = vmatpush1.bf16.msra.mxu0 %v3631
    %4350 = vmatprep.subr.bf16.mxu0 %v3624
    %4351 = vmatpush1.bf16.msra.mxu0 %v3623
    %4352 = vmatprep.subr.bf16.mxu0 %v3616
    %4353 = vmatpush1.bf16.msra.mxu0 %v3615
    %4354 = vmatprep.subr.bf16.mxu0 %v3608
    %4355 = vmatpush1.bf16.msra.mxu0 %v3607
    %4356 = vmatprep.subr.bf16.mxu0 %v3600
    %4357 = vmatpush1.bf16.msra.mxu0 %v3599
    %4358 = vmatprep.subr.bf16.mxu0 %v3592
    %4359 = vmatpush1.bf16.msra.mxu0 %v3591
    %4360 = vmatprep.subr.bf16.mxu0 %v3584
    %4361 = vmatpush1.bf16.msra.mxu0 %v3583
    %4362 = vmatprep.subr.bf16.mxu0 %v3704
    %4363 = vmatpush2.bf16.msra.mxu0 %v3703
    %4364 = vmatprep.subr.bf16.mxu0 %v3696
    %4365 = vmatpush2.bf16.msra.mxu0 %v3695
    %4366 = vmatprep.subr.bf16.mxu0 %v3688
    %4367 = vmatpush2.bf16.msra.mxu0 %v3687
    %4368 = vmatprep.subr.bf16.mxu0 %v3680
    %4369 = vmatpush2.bf16.msra.mxu0 %v3679
    %4370 = vmatprep.subr.bf16.mxu0 %v3672
    %4371 = vmatpush2.bf16.msra.mxu0 %v3671
    %4372 = vmatprep.subr.bf16.mxu0 %v3664
    %4373 = vmatpush2.bf16.msra.mxu0 %v3663
    %4374 = vmatprep.subr.bf16.mxu0 %v3656
    %4375 = vmatpush2.bf16.msra.mxu0 %v3655
    %4376 = vmatprep.subr.bf16.mxu0 %v3648
    %4377 = vmatpush2.bf16.msra.mxu0 %v3647
    %4378 = vmatprep.mubr.bf16.mxu0 %v1108
    %4379 = vmatmul.mubr.bf16.gmra.mxu0 %v1107
    %v4380 = vpop.f32.mrf.mxu0
    %v4381 = vadd.f32 %v4340, %v4380
    %v4382 = vpop.f32.mrf.mxu0
    %v4383 = vadd.f32 %v4342, %v4382
    %v4384 = vpop.f32.mrf.mxu0
    %v4385 = vpop.f32.mrf.mxu0
    %4386 = vdwg.mxu0
    %4387 = vmatprep.subr.bf16.mxu0 %v3258
    %4388 = vmatpush1.bf16.msra.mxu0 %v3257
    %4389 = vmatprep.subr.bf16.mxu0 %v3250
    %4390 = vmatpush1.bf16.msra.mxu0 %v3249
    %4391 = vmatprep.subr.bf16.mxu0 %v3242
    %4392 = vmatpush1.bf16.msra.mxu0 %v3241
    %4393 = vmatprep.subr.bf16.mxu0 %v3234
    %4394 = vmatpush1.bf16.msra.mxu0 %v3233
    %4395 = vmatprep.subr.bf16.mxu0 %v3226
    %4396 = vmatpush1.bf16.msra.mxu0 %v3225
    %4397 = vmatprep.subr.bf16.mxu0 %v3218
    %4398 = vmatpush1.bf16.msra.mxu0 %v3217
    %4399 = vmatprep.subr.bf16.mxu0 %v3210
    %4400 = vmatpush1.bf16.msra.mxu0 %v3209
    %4401 = vmatprep.subr.bf16.mxu0 %v3202
    %4402 = vmatpush1.bf16.msra.mxu0 %v3201
    %4403 = vmatprep.subr.bf16.mxu0 %v3322
    %4404 = vmatpush2.bf16.msra.mxu0 %v3321
    %4405 = vmatprep.subr.bf16.mxu0 %v3314
    %4406 = vmatpush2.bf16.msra.mxu0 %v3313
    %4407 = vmatprep.subr.bf16.mxu0 %v3306
    %4408 = vmatpush2.bf16.msra.mxu0 %v3305
    %4409 = vmatprep.subr.bf16.mxu0 %v3298
    %4410 = vmatpush2.bf16.msra.mxu0 %v3297
    %4411 = vmatprep.subr.bf16.mxu0 %v3290
    %4412 = vmatpush2.bf16.msra.mxu0 %v3289
    %4413 = vmatprep.subr.bf16.mxu0 %v3282
    %4414 = vmatpush2.bf16.msra.mxu0 %v3281
    %4415 = vmatprep.subr.bf16.mxu0 %v3274
    %4416 = vmatpush2.bf16.msra.mxu0 %v3273
    %4417 = vmatprep.subr.bf16.mxu0 %v3266
    %4418 = vmatpush2.bf16.msra.mxu0 %v3265
    %4419 = vmatprep.mubr.bf16.mxu0 %v1102
    %4420 = vmatmul.mubr.bf16.gmra.mxu0 %v1101
    %v4421 = vpop.f32.mrf.mxu0
    %v4422 = vadd.f32 %v1634, %v4421
    %v4423 = vpop.f32.mrf.mxu0
    %v4424 = vadd.f32 %v1638, %v4423
    %v4425 = vpop.f32.mrf.mxu0
    %v4426 = vpop.f32.mrf.mxu0
    %4427 = vdwg.mxu0
    %4428 = vmatprep.subr.bf16.mxu0 %v3386
    %4429 = vmatpush1.bf16.msra.mxu0 %v3385
    %4430 = vmatprep.subr.bf16.mxu0 %v3378
    %4431 = vmatpush1.bf16.msra.mxu0 %v3377
    %4432 = vmatprep.subr.bf16.mxu0 %v3370
    %4433 = vmatpush1.bf16.msra.mxu0 %v3369
    %4434 = vmatprep.subr.bf16.mxu0 %v3362
    %4435 = vmatpush1.bf16.msra.mxu0 %v3361
    %4436 = vmatprep.subr.bf16.mxu0 %v3354
    %4437 = vmatpush1.bf16.msra.mxu0 %v3353
    %4438 = vmatprep.subr.bf16.mxu0 %v3346
    %4439 = vmatpush1.bf16.msra.mxu0 %v3345
    %4440 = vmatprep.subr.bf16.mxu0 %v3338
    %4441 = vmatpush1.bf16.msra.mxu0 %v3337
    %4442 = vmatprep.subr.bf16.mxu0 %v3330
    %4443 = vmatpush1.bf16.msra.mxu0 %v3329
    %4444 = vmatprep.subr.bf16.mxu0 %v3450
    %4445 = vmatpush2.bf16.msra.mxu0 %v3449
    %4446 = vmatprep.subr.bf16.mxu0 %v3442
    %4447 = vmatpush2.bf16.msra.mxu0 %v3441
    %4448 = vmatprep.subr.bf16.mxu0 %v3434
    %4449 = vmatpush2.bf16.msra.mxu0 %v3433
    %4450 = vmatprep.subr.bf16.mxu0 %v3426
    %4451 = vmatpush2.bf16.msra.mxu0 %v3425
    %4452 = vmatprep.subr.bf16.mxu0 %v3418
    %4453 = vmatpush2.bf16.msra.mxu0 %v3417
    %4454 = vmatprep.subr.bf16.mxu0 %v3410
    %4455 = vmatpush2.bf16.msra.mxu0 %v3409
    %4456 = vmatprep.subr.bf16.mxu0 %v3402
    %4457 = vmatpush2.bf16.msra.mxu0 %v3401
    %4458 = vmatprep.subr.bf16.mxu0 %v3394
    %4459 = vmatpush2.bf16.msra.mxu0 %v3393
    %4460 = vmatprep.mubr.bf16.mxu0 %v1104
    %4461 = vmatmul.mubr.bf16.gmra.mxu0 %v1103
    %v4462 = vpop.f32.mrf.mxu0
    %v4463 = vadd.f32 %v4422, %v4462
    %v4464 = vpop.f32.mrf.mxu0
    %v4465 = vadd.f32 %v4424, %v4464
    %v4466 = vpop.f32.mrf.mxu0
    %v4467 = vpop.f32.mrf.mxu0
    %4468 = vdwg.mxu0
    %4469 = vmatprep.subr.bf16.mxu0 %v3514
    %4470 = vmatpush1.bf16.msra.mxu0 %v3513
    %4471 = vmatprep.subr.bf16.mxu0 %v3506
    %4472 = vmatpush1.bf16.msra.mxu0 %v3505
    %4473 = vmatprep.subr.bf16.mxu0 %v3498
    %4474 = vmatpush1.bf16.msra.mxu0 %v3497
    %4475 = vmatprep.subr.bf16.mxu0 %v3490
    %4476 = vmatpush1.bf16.msra.mxu0 %v3489
    %4477 = vmatprep.subr.bf16.mxu0 %v3482
    %4478 = vmatpush1.bf16.msra.mxu0 %v3481
    %4479 = vmatprep.subr.bf16.mxu0 %v3474
    %4480 = vmatpush1.bf16.msra.mxu0 %v3473
    %4481 = vmatprep.subr.bf16.mxu0 %v3466
    %4482 = vmatpush1.bf16.msra.mxu0 %v3465
    %4483 = vmatprep.subr.bf16.mxu0 %v3458
    %4484 = vmatpush1.bf16.msra.mxu0 %v3457
    %4485 = vmatprep.subr.bf16.mxu0 %v3578
    %4486 = vmatpush2.bf16.msra.mxu0 %v3577
    %4487 = vmatprep.subr.bf16.mxu0 %v3570
    %4488 = vmatpush2.bf16.msra.mxu0 %v3569
    %4489 = vmatprep.subr.bf16.mxu0 %v3562
    %4490 = vmatpush2.bf16.msra.mxu0 %v3561
    %4491 = vmatprep.subr.bf16.mxu0 %v3554
    %4492 = vmatpush2.bf16.msra.mxu0 %v3553
    %4493 = vmatprep.subr.bf16.mxu0 %v3546
    %4494 = vmatpush2.bf16.msra.mxu0 %v3545
    %4495 = vmatprep.subr.bf16.mxu0 %v3538
    %4496 = vmatpush2.bf16.msra.mxu0 %v3537
    %4497 = vmatprep.subr.bf16.mxu0 %v3530
    %4498 = vmatpush2.bf16.msra.mxu0 %v3529
    %4499 = vmatprep.subr.bf16.mxu0 %v3522
    %4500 = vmatpush2.bf16.msra.mxu0 %v3521
    %4501 = vmatprep.mubr.bf16.mxu0 %v1106
    %4502 = vmatmul.mubr.bf16.gmra.mxu0 %v1105
    %v4503 = vpop.f32.mrf.mxu0
    %v4504 = vadd.f32 %v4463, %v4503
    %v4505 = vpop.f32.mrf.mxu0
    %v4506 = vadd.f32 %v4465, %v4505
    %v4507 = vpop.f32.mrf.mxu0
    %v4508 = vpop.f32.mrf.mxu0
    %4509 = vdwg.mxu0
    %4510 = vmatprep.subr.bf16.mxu0 %v3642
    %4511 = vmatpush1.bf16.msra.mxu0 %v3641
    %4512 = vmatprep.subr.bf16.mxu0 %v3634
    %4513 = vmatpush1.bf16.msra.mxu0 %v3633
    %4514 = vmatprep.subr.bf16.mxu0 %v3626
    %4515 = vmatpush1.bf16.msra.mxu0 %v3625
    %4516 = vmatprep.subr.bf16.mxu0 %v3618
    %4517 = vmatpush1.bf16.msra.mxu0 %v3617
    %4518 = vmatprep.subr.bf16.mxu0 %v3610
    %4519 = vmatpush1.bf16.msra.mxu0 %v3609
    %4520 = vmatprep.subr.bf16.mxu0 %v3602
    %4521 = vmatpush1.bf16.msra.mxu0 %v3601
    %4522 = vmatprep.subr.bf16.mxu0 %v3594
    %4523 = vmatpush1.bf16.msra.mxu0 %v3593
    %4524 = vmatprep.subr.bf16.mxu0 %v3586
    %4525 = vmatpush1.bf16.msra.mxu0 %v3585
    %4526 = vmatprep.subr.bf16.mxu0 %v3706
    %4527 = vmatpush2.bf16.msra.mxu0 %v3705
    %4528 = vmatprep.subr.bf16.mxu0 %v3698
    %4529 = vmatpush2.bf16.msra.mxu0 %v3697
    %4530 = vmatprep.subr.bf16.mxu0 %v3690
    %4531 = vmatpush2.bf16.msra.mxu0 %v3689
    %4532 = vmatprep.subr.bf16.mxu0 %v3682
    %4533 = vmatpush2.bf16.msra.mxu0 %v3681
    %4534 = vmatprep.subr.bf16.mxu0 %v3674
    %4535 = vmatpush2.bf16.msra.mxu0 %v3673
    %4536 = vmatprep.subr.bf16.mxu0 %v3666
    %4537 = vmatpush2.bf16.msra.mxu0 %v3665
    %4538 = vmatprep.subr.bf16.mxu0 %v3658
    %4539 = vmatpush2.bf16.msra.mxu0 %v3657
    %4540 = vmatprep.subr.bf16.mxu0 %v3650
    %4541 = vmatpush2.bf16.msra.mxu0 %v3649
    %4542 = vmatprep.mubr.bf16.mxu0 %v1108
    %4543 = vmatmul.mubr.bf16.gmra.mxu0 %v1107
    %v4544 = vpop.f32.mrf.mxu0
    %v4545 = vadd.f32 %v4504, %v4544
    %v4546 = vpop.f32.mrf.mxu0
    %v4547 = vadd.f32 %v4506, %v4546
    %v4548 = vpop.f32.mrf.mxu0
    %v4549 = vpop.f32.mrf.mxu0
    %4550 = vdwg.mxu0
    %4551 = vmatprep.subr.bf16.mxu0 %v3260
    %4552 = vmatpush1.bf16.msra.mxu0 %v3259
    %4553 = vmatprep.subr.bf16.mxu0 %v3252
    %4554 = vmatpush1.bf16.msra.mxu0 %v3251
    %4555 = vmatprep.subr.bf16.mxu0 %v3244
    %4556 = vmatpush1.bf16.msra.mxu0 %v3243
    %4557 = vmatprep.subr.bf16.mxu0 %v3236
    %4558 = vmatpush1.bf16.msra.mxu0 %v3235
    %4559 = vmatprep.subr.bf16.mxu0 %v3228
    %4560 = vmatpush1.bf16.msra.mxu0 %v3227
    %4561 = vmatprep.subr.bf16.mxu0 %v3220
    %4562 = vmatpush1.bf16.msra.mxu0 %v3219
    %4563 = vmatprep.subr.bf16.mxu0 %v3212
    %4564 = vmatpush1.bf16.msra.mxu0 %v3211
    %4565 = vmatprep.subr.bf16.mxu0 %v3204
    %4566 = vmatpush1.bf16.msra.mxu0 %v3203
    %4567 = vmatprep.subr.bf16.mxu0 %v3324
    %4568 = vmatpush2.bf16.msra.mxu0 %v3323
    %4569 = vmatprep.subr.bf16.mxu0 %v3316
    %4570 = vmatpush2.bf16.msra.mxu0 %v3315
    %4571 = vmatprep.subr.bf16.mxu0 %v3308
    %4572 = vmatpush2.bf16.msra.mxu0 %v3307
    %4573 = vmatprep.subr.bf16.mxu0 %v3300
    %4574 = vmatpush2.bf16.msra.mxu0 %v3299
    %4575 = vmatprep.subr.bf16.mxu0 %v3292
    %4576 = vmatpush2.bf16.msra.mxu0 %v3291
    %4577 = vmatprep.subr.bf16.mxu0 %v3284
    %4578 = vmatpush2.bf16.msra.mxu0 %v3283
    %4579 = vmatprep.subr.bf16.mxu0 %v3276
    %4580 = vmatpush2.bf16.msra.mxu0 %v3275
    %4581 = vmatprep.subr.bf16.mxu0 %v3268
    %4582 = vmatpush2.bf16.msra.mxu0 %v3267
    %4583 = vmatprep.mubr.bf16.mxu0 %v1102
    %4584 = vmatmul.mubr.bf16.gmra.mxu0 %v1101
    %v4585 = vpop.f32.mrf.mxu0
    %v4586 = vadd.f32 %v1642, %v4585
    %v4587 = vpop.f32.mrf.mxu0
    %v4588 = vadd.f32 %v1646, %v4587
    %v4589 = vpop.f32.mrf.mxu0
    %v4590 = vpop.f32.mrf.mxu0
    %4591 = vdwg.mxu0
    %4592 = vmatprep.subr.bf16.mxu0 %v3388
    %4593 = vmatpush1.bf16.msra.mxu0 %v3387
    %4594 = vmatprep.subr.bf16.mxu0 %v3380
    %4595 = vmatpush1.bf16.msra.mxu0 %v3379
    %4596 = vmatprep.subr.bf16.mxu0 %v3372
    %4597 = vmatpush1.bf16.msra.mxu0 %v3371
    %4598 = vmatprep.subr.bf16.mxu0 %v3364
    %4599 = vmatpush1.bf16.msra.mxu0 %v3363
    %4600 = vmatprep.subr.bf16.mxu0 %v3356
    %4601 = vmatpush1.bf16.msra.mxu0 %v3355
    %4602 = vmatprep.subr.bf16.mxu0 %v3348
    %4603 = vmatpush1.bf16.msra.mxu0 %v3347
    %4604 = vmatprep.subr.bf16.mxu0 %v3340
    %4605 = vmatpush1.bf16.msra.mxu0 %v3339
    %4606 = vmatprep.subr.bf16.mxu0 %v3332
    %4607 = vmatpush1.bf16.msra.mxu0 %v3331
    %4608 = vmatprep.subr.bf16.mxu0 %v3452
    %4609 = vmatpush2.bf16.msra.mxu0 %v3451
    %4610 = vmatprep.subr.bf16.mxu0 %v3444
    %4611 = vmatpush2.bf16.msra.mxu0 %v3443
    %4612 = vmatprep.subr.bf16.mxu0 %v3436
    %4613 = vmatpush2.bf16.msra.mxu0 %v3435
    %4614 = vmatprep.subr.bf16.mxu0 %v3428
    %4615 = vmatpush2.bf16.msra.mxu0 %v3427
    %4616 = vmatprep.subr.bf16.mxu0 %v3420
    %4617 = vmatpush2.bf16.msra.mxu0 %v3419
    %4618 = vmatprep.subr.bf16.mxu0 %v3412
    %4619 = vmatpush2.bf16.msra.mxu0 %v3411
    %4620 = vmatprep.subr.bf16.mxu0 %v3404
    %4621 = vmatpush2.bf16.msra.mxu0 %v3403
    %4622 = vmatprep.subr.bf16.mxu0 %v3396
    %4623 = vmatpush2.bf16.msra.mxu0 %v3395
    %4624 = vmatprep.mubr.bf16.mxu0 %v1104
    %4625 = vmatmul.mubr.bf16.gmra.mxu0 %v1103
    %v4626 = vpop.f32.mrf.mxu0
    %v4627 = vadd.f32 %v4586, %v4626
    %v4628 = vpop.f32.mrf.mxu0
    %v4629 = vadd.f32 %v4588, %v4628
    %v4630 = vpop.f32.mrf.mxu0
    %v4631 = vpop.f32.mrf.mxu0
    %4632 = vdwg.mxu0
    %4633 = vmatprep.subr.bf16.mxu0 %v3516
    %4634 = vmatpush1.bf16.msra.mxu0 %v3515
    %4635 = vmatprep.subr.bf16.mxu0 %v3508
    %4636 = vmatpush1.bf16.msra.mxu0 %v3507
    %4637 = vmatprep.subr.bf16.mxu0 %v3500
    %4638 = vmatpush1.bf16.msra.mxu0 %v3499
    %4639 = vmatprep.subr.bf16.mxu0 %v3492
    %4640 = vmatpush1.bf16.msra.mxu0 %v3491
    %4641 = vmatprep.subr.bf16.mxu0 %v3484
    %4642 = vmatpush1.bf16.msra.mxu0 %v3483
    %4643 = vmatprep.subr.bf16.mxu0 %v3476
    %4644 = vmatpush1.bf16.msra.mxu0 %v3475
    %4645 = vmatprep.subr.bf16.mxu0 %v3468
    %4646 = vmatpush1.bf16.msra.mxu0 %v3467
    %4647 = vmatprep.subr.bf16.mxu0 %v3460
    %4648 = vmatpush1.bf16.msra.mxu0 %v3459
    %4649 = vmatprep.subr.bf16.mxu0 %v3580
    %4650 = vmatpush2.bf16.msra.mxu0 %v3579
    %4651 = vmatprep.subr.bf16.mxu0 %v3572
    %4652 = vmatpush2.bf16.msra.mxu0 %v3571
    %4653 = vmatprep.subr.bf16.mxu0 %v3564
    %4654 = vmatpush2.bf16.msra.mxu0 %v3563
    %4655 = vmatprep.subr.bf16.mxu0 %v3556
    %4656 = vmatpush2.bf16.msra.mxu0 %v3555
    %4657 = vmatprep.subr.bf16.mxu0 %v3548
    %4658 = vmatpush2.bf16.msra.mxu0 %v3547
    %4659 = vmatprep.subr.bf16.mxu0 %v3540
    %4660 = vmatpush2.bf16.msra.mxu0 %v3539
    %4661 = vmatprep.subr.bf16.mxu0 %v3532
    %4662 = vmatpush2.bf16.msra.mxu0 %v3531
    %4663 = vmatprep.subr.bf16.mxu0 %v3524
    %4664 = vmatpush2.bf16.msra.mxu0 %v3523
    %4665 = vmatprep.mubr.bf16.mxu0 %v1106
    %4666 = vmatmul.mubr.bf16.gmra.mxu0 %v1105
    %v4667 = vpop.f32.mrf.mxu0
    %v4668 = vadd.f32 %v4627, %v4667
    %v4669 = vpop.f32.mrf.mxu0
    %v4670 = vadd.f32 %v4629, %v4669
    %v4671 = vpop.f32.mrf.mxu0
    %v4672 = vpop.f32.mrf.mxu0
    %4673 = vdwg.mxu0
    %4674 = vmatprep.subr.bf16.mxu0 %v3644
    %4675 = vmatpush1.bf16.msra.mxu0 %v3643
    %4676 = vmatprep.subr.bf16.mxu0 %v3636
    %4677 = vmatpush1.bf16.msra.mxu0 %v3635
    %4678 = vmatprep.subr.bf16.mxu0 %v3628
    %4679 = vmatpush1.bf16.msra.mxu0 %v3627
    %4680 = vmatprep.subr.bf16.mxu0 %v3620
    %4681 = vmatpush1.bf16.msra.mxu0 %v3619
    %4682 = vmatprep.subr.bf16.mxu0 %v3612
    %4683 = vmatpush1.bf16.msra.mxu0 %v3611
    %4684 = vmatprep.subr.bf16.mxu0 %v3604
    %4685 = vmatpush1.bf16.msra.mxu0 %v3603
    %4686 = vmatprep.subr.bf16.mxu0 %v3596
    %4687 = vmatpush1.bf16.msra.mxu0 %v3595
    %4688 = vmatprep.subr.bf16.mxu0 %v3588
    %4689 = vmatpush1.bf16.msra.mxu0 %v3587
    %4690 = vmatprep.subr.bf16.mxu0 %v3708
    %4691 = vmatpush2.bf16.msra.mxu0 %v3707
    %4692 = vmatprep.subr.bf16.mxu0 %v3700
    %4693 = vmatpush2.bf16.msra.mxu0 %v3699
    %4694 = vmatprep.subr.bf16.mxu0 %v3692
    %4695 = vmatpush2.bf16.msra.mxu0 %v3691
    %4696 = vmatprep.subr.bf16.mxu0 %v3684
    %4697 = vmatpush2.bf16.msra.mxu0 %v3683
    %4698 = vmatprep.subr.bf16.mxu0 %v3676
    %4699 = vmatpush2.bf16.msra.mxu0 %v3675
    %4700 = vmatprep.subr.bf16.mxu0 %v3668
    %4701 = vmatpush2.bf16.msra.mxu0 %v3667
    %4702 = vmatprep.subr.bf16.mxu0 %v3660
    %4703 = vmatpush2.bf16.msra.mxu0 %v3659
    %4704 = vmatprep.subr.bf16.mxu0 %v3652
    %4705 = vmatpush2.bf16.msra.mxu0 %v3651
    %4706 = vmatprep.mubr.bf16.mxu0 %v1108
    %4707 = vmatmul.mubr.bf16.gmra.mxu0 %v1107
    %v4708 = vpop.f32.mrf.mxu0
    %v4709 = vadd.f32 %v4668, %v4708
    %v4710 = vpop.f32.mrf.mxu0
    %v4711 = vadd.f32 %v4670, %v4710
    %v4712 = vpop.f32.mrf.mxu0
    %v4713 = vpop.f32.mrf.mxu0
    %4714 = vdwg.mxu0
    %4715 = vmatprep.subr.bf16.mxu0 %v3262
    %4716 = vmatpush1.bf16.msra.mxu0 %v3261
    %4717 = vmatprep.subr.bf16.mxu0 %v3254
    %4718 = vmatpush1.bf16.msra.mxu0 %v3253
    %4719 = vmatprep.subr.bf16.mxu0 %v3246
    %4720 = vmatpush1.bf16.msra.mxu0 %v3245
    %4721 = vmatprep.subr.bf16.mxu0 %v3238
    %4722 = vmatpush1.bf16.msra.mxu0 %v3237
    %4723 = vmatprep.subr.bf16.mxu0 %v3230
    %4724 = vmatpush1.bf16.msra.mxu0 %v3229
    %4725 = vmatprep.subr.bf16.mxu0 %v3222
    %4726 = vmatpush1.bf16.msra.mxu0 %v3221
    %4727 = vmatprep.subr.bf16.mxu0 %v3214
    %4728 = vmatpush1.bf16.msra.mxu0 %v3213
    %4729 = vmatprep.subr.bf16.mxu0 %v3206
    %4730 = vmatpush1.bf16.msra.mxu0 %v3205
    %4731 = vmatprep.subr.bf16.mxu0 %v3326
    %4732 = vmatpush2.bf16.msra.mxu0 %v3325
    %4733 = vmatprep.subr.bf16.mxu0 %v3318
    %4734 = vmatpush2.bf16.msra.mxu0 %v3317
    %4735 = vmatprep.subr.bf16.mxu0 %v3310
    %4736 = vmatpush2.bf16.msra.mxu0 %v3309
    %4737 = vmatprep.subr.bf16.mxu0 %v3302
    %4738 = vmatpush2.bf16.msra.mxu0 %v3301
    %4739 = vmatprep.subr.bf16.mxu0 %v3294
    %4740 = vmatpush2.bf16.msra.mxu0 %v3293
    %4741 = vmatprep.subr.bf16.mxu0 %v3286
    %4742 = vmatpush2.bf16.msra.mxu0 %v3285
    %4743 = vmatprep.subr.bf16.mxu0 %v3278
    %4744 = vmatpush2.bf16.msra.mxu0 %v3277
    %4745 = vmatprep.subr.bf16.mxu0 %v3270
    %4746 = vmatpush2.bf16.msra.mxu0 %v3269
    %4747 = vmatprep.mubr.bf16.mxu0 %v1102
    %4748 = vmatmul.mubr.bf16.gmra.mxu0 %v1101
    %v4749 = vpop.f32.mrf.mxu0
    %v4750 = vadd.f32 %v1650, %v4749
    %v4751 = vpop.f32.mrf.mxu0
    %v4752 = vadd.f32 %v1654, %v4751
    %v4753 = vpop.f32.mrf.mxu0
    %v4754 = vpop.f32.mrf.mxu0
    %4755 = vdwg.mxu0
    %4756 = vmatprep.subr.bf16.mxu0 %v3390
    %4757 = vmatpush1.bf16.msra.mxu0 %v3389
    %4758 = vmatprep.subr.bf16.mxu0 %v3382
    %4759 = vmatpush1.bf16.msra.mxu0 %v3381
    %4760 = vmatprep.subr.bf16.mxu0 %v3374
    %4761 = vmatpush1.bf16.msra.mxu0 %v3373
    %4762 = vmatprep.subr.bf16.mxu0 %v3366
    %4763 = vmatpush1.bf16.msra.mxu0 %v3365
    %4764 = vmatprep.subr.bf16.mxu0 %v3358
    %4765 = vmatpush1.bf16.msra.mxu0 %v3357
    %4766 = vmatprep.subr.bf16.mxu0 %v3350
    %4767 = vmatpush1.bf16.msra.mxu0 %v3349
    %4768 = vmatprep.subr.bf16.mxu0 %v3342
    %4769 = vmatpush1.bf16.msra.mxu0 %v3341
    %4770 = vmatprep.subr.bf16.mxu0 %v3334
    %4771 = vmatpush1.bf16.msra.mxu0 %v3333
    %4772 = vmatprep.subr.bf16.mxu0 %v3454
    %4773 = vmatpush2.bf16.msra.mxu0 %v3453
    %4774 = vmatprep.subr.bf16.mxu0 %v3446
    %4775 = vmatpush2.bf16.msra.mxu0 %v3445
    %4776 = vmatprep.subr.bf16.mxu0 %v3438
    %4777 = vmatpush2.bf16.msra.mxu0 %v3437
    %4778 = vmatprep.subr.bf16.mxu0 %v3430
    %4779 = vmatpush2.bf16.msra.mxu0 %v3429
    %4780 = vmatprep.subr.bf16.mxu0 %v3422
    %4781 = vmatpush2.bf16.msra.mxu0 %v3421
    %4782 = vmatprep.subr.bf16.mxu0 %v3414
    %4783 = vmatpush2.bf16.msra.mxu0 %v3413
    %4784 = vmatprep.subr.bf16.mxu0 %v3406
    %4785 = vmatpush2.bf16.msra.mxu0 %v3405
    %4786 = vmatprep.subr.bf16.mxu0 %v3398
    %4787 = vmatpush2.bf16.msra.mxu0 %v3397
    %4788 = vmatprep.mubr.bf16.mxu0 %v1104
    %4789 = vmatmul.mubr.bf16.gmra.mxu0 %v1103
    %v4790 = vpop.f32.mrf.mxu0
    %v4791 = vadd.f32 %v4750, %v4790
    %v4792 = vpop.f32.mrf.mxu0
    %v4793 = vadd.f32 %v4752, %v4792
    %v4794 = vpop.f32.mrf.mxu0
    %v4795 = vpop.f32.mrf.mxu0
    %4796 = vdwg.mxu0
    %4797 = vmatprep.subr.bf16.mxu0 %v3518
    %4798 = vmatpush1.bf16.msra.mxu0 %v3517
    %4799 = vmatprep.subr.bf16.mxu0 %v3510
    %4800 = vmatpush1.bf16.msra.mxu0 %v3509
    %4801 = vmatprep.subr.bf16.mxu0 %v3502
    %4802 = vmatpush1.bf16.msra.mxu0 %v3501
    %4803 = vmatprep.subr.bf16.mxu0 %v3494
    %4804 = vmatpush1.bf16.msra.mxu0 %v3493
    %4805 = vmatprep.subr.bf16.mxu0 %v3486
    %4806 = vmatpush1.bf16.msra.mxu0 %v3485
    %4807 = vmatprep.subr.bf16.mxu0 %v3478
    %4808 = vmatpush1.bf16.msra.mxu0 %v3477
    %4809 = vmatprep.subr.bf16.mxu0 %v3470
    %4810 = vmatpush1.bf16.msra.mxu0 %v3469
    %4811 = vmatprep.subr.bf16.mxu0 %v3462
    %4812 = vmatpush1.bf16.msra.mxu0 %v3461
    %4813 = vmatprep.subr.bf16.mxu0 %v3582
    %4814 = vmatpush2.bf16.msra.mxu0 %v3581
    %4815 = vmatprep.subr.bf16.mxu0 %v3574
    %4816 = vmatpush2.bf16.msra.mxu0 %v3573
    %4817 = vmatprep.subr.bf16.mxu0 %v3566
    %4818 = vmatpush2.bf16.msra.mxu0 %v3565
    %4819 = vmatprep.subr.bf16.mxu0 %v3558
    %4820 = vmatpush2.bf16.msra.mxu0 %v3557
    %4821 = vmatprep.subr.bf16.mxu0 %v3550
    %4822 = vmatpush2.bf16.msra.mxu0 %v3549
    %4823 = vmatprep.subr.bf16.mxu0 %v3542
    %4824 = vmatpush2.bf16.msra.mxu0 %v3541
    %4825 = vmatprep.subr.bf16.mxu0 %v3534
    %4826 = vmatpush2.bf16.msra.mxu0 %v3533
    %4827 = vmatprep.subr.bf16.mxu0 %v3526
    %4828 = vmatpush2.bf16.msra.mxu0 %v3525
    %4829 = vmatprep.mubr.bf16.mxu0 %v1106
    %4830 = vmatmul.mubr.bf16.gmra.mxu0 %v1105
    %v4831 = vpop.f32.mrf.mxu0
    %v4832 = vadd.f32 %v4791, %v4831
    %v4833 = vpop.f32.mrf.mxu0
    %v4834 = vadd.f32 %v4793, %v4833
    %v4835 = vpop.f32.mrf.mxu0
    %v4836 = vpop.f32.mrf.mxu0
    %4837 = vdwg.mxu0
    %4838 = vmatprep.subr.bf16.mxu0 %v3646
    %4839 = vmatpush1.bf16.msra.mxu0 %v3645
    %4840 = vmatprep.subr.bf16.mxu0 %v3638
    %4841 = vmatpush1.bf16.msra.mxu0 %v3637
    %4842 = vmatprep.subr.bf16.mxu0 %v3630
    %4843 = vmatpush1.bf16.msra.mxu0 %v3629
    %4844 = vmatprep.subr.bf16.mxu0 %v3622
    %4845 = vmatpush1.bf16.msra.mxu0 %v3621
    %4846 = vmatprep.subr.bf16.mxu0 %v3614
    %4847 = vmatpush1.bf16.msra.mxu0 %v3613
    %4848 = vmatprep.subr.bf16.mxu0 %v3606
    %4849 = vmatpush1.bf16.msra.mxu0 %v3605
    %4850 = vmatprep.subr.bf16.mxu0 %v3598
    %4851 = vmatpush1.bf16.msra.mxu0 %v3597
    %4852 = vmatprep.subr.bf16.mxu0 %v3590
    %4853 = vmatpush1.bf16.msra.mxu0 %v3589
    %4854 = vmatprep.subr.bf16.mxu0 %v3710
    %4855 = vmatpush2.bf16.msra.mxu0 %v3709
    %4856 = vmatprep.subr.bf16.mxu0 %v3702
    %4857 = vmatpush2.bf16.msra.mxu0 %v3701
    %4858 = vmatprep.subr.bf16.mxu0 %v3694
    %4859 = vmatpush2.bf16.msra.mxu0 %v3693
    %4860 = vmatprep.subr.bf16.mxu0 %v3686
    %4861 = vmatpush2.bf16.msra.mxu0 %v3685
    %4862 = vmatprep.subr.bf16.mxu0 %v3678
    %4863 = vmatpush2.bf16.msra.mxu0 %v3677
    %4864 = vmatprep.subr.bf16.mxu0 %v3670
    %4865 = vmatpush2.bf16.msra.mxu0 %v3669
    %4866 = vmatprep.subr.bf16.mxu0 %v3662
    %4867 = vmatpush2.bf16.msra.mxu0 %v3661
    %4868 = vmatprep.subr.bf16.mxu0 %v3654
    %4869 = vmatpush2.bf16.msra.mxu0 %v3653
    %4870 = vmatprep.mubr.bf16.mxu0 %v1108
    %4871 = vmatmul.mubr.bf16.gmra.mxu0 %v1107
    %v4872 = vpop.f32.mrf.mxu0
    %v4873 = vadd.f32 %v4832, %v4872
    %v4874 = vpop.f32.mrf.mxu0
    %v4875 = vadd.f32 %v4834, %v4874
    %v4876 = vpop.f32.mrf.mxu0
    %v4877 = vpop.f32.mrf.mxu0
    %4878 = vdwg.mxu0
    %v4879 = vmax.f32 %v4381, 0.0
    %v4880 = vmax.f32 %v4383, 0.0
    %v4881 = vmax.f32 %v4545, 0.0
    %v4882 = vmax.f32 %v4547, 0.0
    %v4883 = vmax.f32 %v4709, 0.0
    %v4884 = vmax.f32 %v4711, 0.0
    %v4885 = vmax.f32 %v4873, 0.0
    %v4886 = vmax.f32 %v4875, 0.0
    %v4887 = vpack.c.bf16 %v4879, %v4879
    %v4888 = vpack.c.bf16 %v4880, %v4880
    %v4889 = vpack.c.bf16 %v4881, %v4881
    %v4890 = vpack.c.bf16 %v4882, %v4882
    %v4891 = vpack.c.bf16 %v4883, %v4883
    %v4892 = vpack.c.bf16 %v4884, %v4884
    %v4893 = vpack.c.bf16 %v4885, %v4885
    %v4894 = vpack.c.bf16 %v4886, %v4886
    %v4895 = vld [vmem:[#allocation11] sm:$0xf]
    %v4896 = vld [vmem:[#allocation11 + $0x4] sm:$0xf]
    %v4897 = vld [vmem:[#allocation11 + $0x8] sm:$0xf]
    %v4898 = vld [vmem:[#allocation11 + $0xc] sm:$0xf]
    %v4899 = vld [vmem:[#allocation11 + $0x10] sm:$0xf]
    %v4900 = vld [vmem:[#allocation11 + $0x14] sm:$0xf]
    %v4901 = vld [vmem:[#allocation11 + $0x18] sm:$0xf]
    %v4902 = vld [vmem:[#allocation11 + $0x1c] sm:$0xf]
    %v4903 = vld [vmem:[#allocation11 + $0x20] sm:$0xf]
    %v4904 = vld [vmem:[#allocation11 + $0x24] sm:$0xf]
    %v4905 = vld [vmem:[#allocation11 + $0x28] sm:$0xf]
    %v4906 = vld [vmem:[#allocation11 + $0x2c] sm:$0xf]
    %v4907 = vld [vmem:[#allocation11 + $0x30] sm:$0xf]
    %v4908 = vld [vmem:[#allocation11 + $0x34] sm:$0xf]
    %v4909 = vld [vmem:[#allocation11 + $0x38] sm:$0xf]
    %v4910 = vld [vmem:[#allocation11 + $0x3c] sm:$0xf]
    %v4911 = vld [vmem:[#allocation11 + $0x40] sm:$0xf]
    %v4912 = vld [vmem:[#allocation11 + $0x44] sm:$0xf]
    %v4913 = vld [vmem:[#allocation11 + $0x48] sm:$0xf]
    %v4914 = vld [vmem:[#allocation11 + $0x4c] sm:$0xf]
    %v4915 = vld [vmem:[#allocation11 + $0x50] sm:$0xf]
    %v4916 = vld [vmem:[#allocation11 + $0x54] sm:$0xf]
    %v4917 = vld [vmem:[#allocation11 + $0x58] sm:$0xf]
    %v4918 = vld [vmem:[#allocation11 + $0x5c] sm:$0xf]
    %v4919 = vld [vmem:[#allocation11 + $0x60] sm:$0xf]
    %v4920 = vld [vmem:[#allocation11 + $0x64] sm:$0xf]
    %v4921 = vld [vmem:[#allocation11 + $0x68] sm:$0xf]
    %v4922 = vld [vmem:[#allocation11 + $0x6c] sm:$0xf]
    %v4923 = vld [vmem:[#allocation11 + $0x70] sm:$0xf]
    %v4924 = vld [vmem:[#allocation11 + $0x74] sm:$0xf]
    %v4925 = vld [vmem:[#allocation11 + $0x78] sm:$0xf]
    %v4926 = vld [vmem:[#allocation11 + $0x7c] sm:$0xf]
    %v4927 = vld [vmem:[#allocation11 + $0x80] sm:$0xf]
    %v4928 = vld [vmem:[#allocation11 + $0x84] sm:$0xf]
    %v4929 = vld [vmem:[#allocation11 + $0x88] sm:$0xf]
    %v4930 = vld [vmem:[#allocation11 + $0x8c] sm:$0xf]
    %v4931 = vld [vmem:[#allocation11 + $0x90] sm:$0xf]
    %v4932 = vld [vmem:[#allocation11 + $0x94] sm:$0xf]
    %v4933 = vld [vmem:[#allocation11 + $0x98] sm:$0xf]
    %v4934 = vld [vmem:[#allocation11 + $0x9c] sm:$0xf]
    %v4935 = vld [vmem:[#allocation11 + $0xa0] sm:$0xf]
    %v4936 = vld [vmem:[#allocation11 + $0xa4] sm:$0xf]
    %v4937 = vld [vmem:[#allocation11 + $0xa8] sm:$0xf]
    %v4938 = vld [vmem:[#allocation11 + $0xac] sm:$0xf]
    %v4939 = vld [vmem:[#allocation11 + $0xb0] sm:$0xf]
    %v4940 = vld [vmem:[#allocation11 + $0xb4] sm:$0xf]
    %v4941 = vld [vmem:[#allocation11 + $0xb8] sm:$0xf]
    %v4942 = vld [vmem:[#allocation11 + $0xbc] sm:$0xf]
    %v4943 = vld [vmem:[#allocation11 + $0xc0] sm:$0xf]
    %v4944 = vld [vmem:[#allocation11 + $0xc4] sm:$0xf]
    %v4945 = vld [vmem:[#allocation11 + $0xc8] sm:$0xf]
    %v4946 = vld [vmem:[#allocation11 + $0xcc] sm:$0xf]
    %v4947 = vld [vmem:[#allocation11 + $0xd0] sm:$0xf]
    %v4948 = vld [vmem:[#allocation11 + $0xd4] sm:$0xf]
    %v4949 = vld [vmem:[#allocation11 + $0xd8] sm:$0xf]
    %v4950 = vld [vmem:[#allocation11 + $0xdc] sm:$0xf]
    %v4951 = vld [vmem:[#allocation11 + $0xe0] sm:$0xf]
    %v4952 = vld [vmem:[#allocation11 + $0xe4] sm:$0xf]
    %v4953 = vld [vmem:[#allocation11 + $0xe8] sm:$0xf]
    %v4954 = vld [vmem:[#allocation11 + $0xec] sm:$0xf]
    %v4955 = vld [vmem:[#allocation11 + $0xf0] sm:$0xf]
    %v4956 = vld [vmem:[#allocation11 + $0xf4] sm:$0xf]
    %v4957 = vld [vmem:[#allocation11 + $0xf8] sm:$0xf]
    %v4958 = vld [vmem:[#allocation11 + $0xfc] sm:$0xf]
    %v4959 = vld [vmem:[#allocation11 + $0x100] sm:$0xf]
    %v4960 = vld [vmem:[#allocation11 + $0x104] sm:$0xf]
    %v4961 = vld [vmem:[#allocation11 + $0x108] sm:$0xf]
    %v4962 = vld [vmem:[#allocation11 + $0x10c] sm:$0xf]
    %v4963 = vld [vmem:[#allocation11 + $0x110] sm:$0xf]
    %v4964 = vld [vmem:[#allocation11 + $0x114] sm:$0xf]
    %v4965 = vld [vmem:[#allocation11 + $0x118] sm:$0xf]
    %v4966 = vld [vmem:[#allocation11 + $0x11c] sm:$0xf]
    %v4967 = vld [vmem:[#allocation11 + $0x120] sm:$0xf]
    %v4968 = vld [vmem:[#allocation11 + $0x124] sm:$0xf]
    %v4969 = vld [vmem:[#allocation11 + $0x128] sm:$0xf]
    %v4970 = vld [vmem:[#allocation11 + $0x12c] sm:$0xf]
    %v4971 = vld [vmem:[#allocation11 + $0x130] sm:$0xf]
    %v4972 = vld [vmem:[#allocation11 + $0x134] sm:$0xf]
    %v4973 = vld [vmem:[#allocation11 + $0x138] sm:$0xf]
    %v4974 = vld [vmem:[#allocation11 + $0x13c] sm:$0xf]
    %v4975 = vld [vmem:[#allocation11 + $0x140] sm:$0xf]
    %v4976 = vld [vmem:[#allocation11 + $0x144] sm:$0xf]
    %v4977 = vld [vmem:[#allocation11 + $0x148] sm:$0xf]
    %v4978 = vld [vmem:[#allocation11 + $0x14c] sm:$0xf]
    %v4979 = vld [vmem:[#allocation11 + $0x150] sm:$0xf]
    %v4980 = vld [vmem:[#allocation11 + $0x154] sm:$0xf]
    %v4981 = vld [vmem:[#allocation11 + $0x158] sm:$0xf]
    %v4982 = vld [vmem:[#allocation11 + $0x15c] sm:$0xf]
    %v4983 = vld [vmem:[#allocation11 + $0x160] sm:$0xf]
    %v4984 = vld [vmem:[#allocation11 + $0x164] sm:$0xf]
    %v4985 = vld [vmem:[#allocation11 + $0x168] sm:$0xf]
    %v4986 = vld [vmem:[#allocation11 + $0x16c] sm:$0xf]
    %v4987 = vld [vmem:[#allocation11 + $0x170] sm:$0xf]
    %v4988 = vld [vmem:[#allocation11 + $0x174] sm:$0xf]
    %v4989 = vld [vmem:[#allocation11 + $0x178] sm:$0xf]
    %v4990 = vld [vmem:[#allocation11 + $0x17c] sm:$0xf]
    %v4991 = vld [vmem:[#allocation11 + $0x180] sm:$0xf]
    %v4992 = vld [vmem:[#allocation11 + $0x184] sm:$0xf]
    %v4993 = vld [vmem:[#allocation11 + $0x188] sm:$0xf]
    %v4994 = vld [vmem:[#allocation11 + $0x18c] sm:$0xf]
    %v4995 = vld [vmem:[#allocation11 + $0x190] sm:$0xf]
    %v4996 = vld [vmem:[#allocation11 + $0x194] sm:$0xf]
    %v4997 = vld [vmem:[#allocation11 + $0x198] sm:$0xf]
    %v4998 = vld [vmem:[#allocation11 + $0x19c] sm:$0xf]
    %v4999 = vld [vmem:[#allocation11 + $0x1a0] sm:$0xf]
    %v5000 = vld [vmem:[#allocation11 + $0x1a4] sm:$0xf]
    %v5001 = vld [vmem:[#allocation11 + $0x1a8] sm:$0xf]
    %v5002 = vld [vmem:[#allocation11 + $0x1ac] sm:$0xf]
    %v5003 = vld [vmem:[#allocation11 + $0x1b0] sm:$0xf]
    %v5004 = vld [vmem:[#allocation11 + $0x1b4] sm:$0xf]
    %v5005 = vld [vmem:[#allocation11 + $0x1b8] sm:$0xf]
    %v5006 = vld [vmem:[#allocation11 + $0x1bc] sm:$0xf]
    %v5007 = vld [vmem:[#allocation11 + $0x1c0] sm:$0xf]
    %v5008 = vld [vmem:[#allocation11 + $0x1c4] sm:$0xf]
    %v5009 = vld [vmem:[#allocation11 + $0x1c8] sm:$0xf]
    %v5010 = vld [vmem:[#allocation11 + $0x1cc] sm:$0xf]
    %v5011 = vld [vmem:[#allocation11 + $0x1d0] sm:$0xf]
    %v5012 = vld [vmem:[#allocation11 + $0x1d4] sm:$0xf]
    %v5013 = vld [vmem:[#allocation11 + $0x1d8] sm:$0xf]
    %v5014 = vld [vmem:[#allocation11 + $0x1dc] sm:$0xf]
    %v5015 = vld [vmem:[#allocation11 + $0x1e0] sm:$0xf]
    %v5016 = vld [vmem:[#allocation11 + $0x1e4] sm:$0xf]
    %v5017 = vld [vmem:[#allocation11 + $0x1e8] sm:$0xf]
    %v5018 = vld [vmem:[#allocation11 + $0x1ec] sm:$0xf]
    %v5019 = vld [vmem:[#allocation11 + $0x1f0] sm:$0xf]
    %v5020 = vld [vmem:[#allocation11 + $0x1f4] sm:$0xf]
    %v5021 = vld [vmem:[#allocation11 + $0x1f8] sm:$0xf]
    %v5022 = vld [vmem:[#allocation11 + $0x1fc] sm:$0xf]
    %v5023 = vld [vmem:[#allocation13] sm:$0x1]
    %v5025 = vlaneseq
    %v5026 = vshrl.u32 %v5025, 7
    %v5027 = vsub.s32 0, %v5026
    %v5028 = vrot.slane %v5023, %v5027
    %v5158 = vunpack.c.l.b16 %v4895
    %v5159 = vunpack.c.l.b16 %v4896
    %v5160 = vunpack.c.l.b16 %v4897
    %v5161 = vunpack.c.l.b16 %v4898
    %v5162 = vunpack.c.l.b16 %v4899
    %v5163 = vunpack.c.l.b16 %v4900
    %v5164 = vunpack.c.l.b16 %v4901
    %v5165 = vunpack.c.l.b16 %v4902
    %v5166 = vunpack.c.l.b16 %v4903
    %v5167 = vunpack.c.l.b16 %v4904
    %v5168 = vunpack.c.l.b16 %v4905
    %v5169 = vunpack.c.l.b16 %v4906
    %v5170 = vunpack.c.l.b16 %v4907
    %v5171 = vunpack.c.l.b16 %v4908
    %v5172 = vunpack.c.l.b16 %v4909
    %v5173 = vunpack.c.l.b16 %v4910
    %v5174 = vunpack.c.l.b16 %v4911
    %v5175 = vunpack.c.l.b16 %v4912
    %v5176 = vunpack.c.l.b16 %v4913
    %v5177 = vunpack.c.l.b16 %v4914
    %v5178 = vunpack.c.l.b16 %v4915
    %v5179 = vunpack.c.l.b16 %v4916
    %v5180 = vunpack.c.l.b16 %v4917
    %v5181 = vunpack.c.l.b16 %v4918
    %v5182 = vunpack.c.l.b16 %v4919
    %v5183 = vunpack.c.l.b16 %v4920
    %v5184 = vunpack.c.l.b16 %v4921
    %v5185 = vunpack.c.l.b16 %v4922
    %v5186 = vunpack.c.l.b16 %v4923
    %v5187 = vunpack.c.l.b16 %v4924
    %v5188 = vunpack.c.l.b16 %v4925
    %v5189 = vunpack.c.l.b16 %v4926
    %v5190 = vunpack.c.l.b16 %v4927
    %v5191 = vunpack.c.l.b16 %v4928
    %v5192 = vunpack.c.l.b16 %v4929
    %v5193 = vunpack.c.l.b16 %v4930
    %v5194 = vunpack.c.l.b16 %v4931
    %v5195 = vunpack.c.l.b16 %v4932
    %v5196 = vunpack.c.l.b16 %v4933
    %v5197 = vunpack.c.l.b16 %v4934
    %v5198 = vunpack.c.l.b16 %v4935
    %v5199 = vunpack.c.l.b16 %v4936
    %v5200 = vunpack.c.l.b16 %v4937
    %v5201 = vunpack.c.l.b16 %v4938
    %v5202 = vunpack.c.l.b16 %v4939
    %v5203 = vunpack.c.l.b16 %v4940
    %v5204 = vunpack.c.l.b16 %v4941
    %v5205 = vunpack.c.l.b16 %v4942
    %v5206 = vunpack.c.l.b16 %v4943
    %v5207 = vunpack.c.l.b16 %v4944
    %v5208 = vunpack.c.l.b16 %v4945
    %v5209 = vunpack.c.l.b16 %v4946
    %v5210 = vunpack.c.l.b16 %v4947
    %v5211 = vunpack.c.l.b16 %v4948
    %v5212 = vunpack.c.l.b16 %v4949
    %v5213 = vunpack.c.l.b16 %v4950
    %v5214 = vunpack.c.l.b16 %v4951
    %v5215 = vunpack.c.l.b16 %v4952
    %v5216 = vunpack.c.l.b16 %v4953
    %v5217 = vunpack.c.l.b16 %v4954
    %v5218 = vunpack.c.l.b16 %v4955
    %v5219 = vunpack.c.l.b16 %v4956
    %v5220 = vunpack.c.l.b16 %v4957
    %v5221 = vunpack.c.l.b16 %v4958
    %v5222 = vunpack.c.l.b16 %v4959
    %v5223 = vunpack.c.l.b16 %v4960
    %v5224 = vunpack.c.l.b16 %v4961
    %v5225 = vunpack.c.l.b16 %v4962
    %v5226 = vunpack.c.l.b16 %v4963
    %v5227 = vunpack.c.l.b16 %v4964
    %v5228 = vunpack.c.l.b16 %v4965
    %v5229 = vunpack.c.l.b16 %v4966
    %v5230 = vunpack.c.l.b16 %v4967
    %v5231 = vunpack.c.l.b16 %v4968
    %v5232 = vunpack.c.l.b16 %v4969
    %v5233 = vunpack.c.l.b16 %v4970
    %v5234 = vunpack.c.l.b16 %v4971
    %v5235 = vunpack.c.l.b16 %v4972
    %v5236 = vunpack.c.l.b16 %v4973
    %v5237 = vunpack.c.l.b16 %v4974
    %v5238 = vunpack.c.l.b16 %v4975
    %v5239 = vunpack.c.l.b16 %v4976
    %v5240 = vunpack.c.l.b16 %v4977
    %v5241 = vunpack.c.l.b16 %v4978
    %v5242 = vunpack.c.l.b16 %v4979
    %v5243 = vunpack.c.l.b16 %v4980
    %v5244 = vunpack.c.l.b16 %v4981
    %v5245 = vunpack.c.l.b16 %v4982
    %v5246 = vunpack.c.l.b16 %v4983
    %v5247 = vunpack.c.l.b16 %v4984
    %v5248 = vunpack.c.l.b16 %v4985
    %v5249 = vunpack.c.l.b16 %v4986
    %v5250 = vunpack.c.l.b16 %v4987
    %v5251 = vunpack.c.l.b16 %v4988
    %v5252 = vunpack.c.l.b16 %v4989
    %v5253 = vunpack.c.l.b16 %v4990
    %v5254 = vunpack.c.l.b16 %v4991
    %v5255 = vunpack.c.l.b16 %v4992
    %v5256 = vunpack.c.l.b16 %v4993
    %v5257 = vunpack.c.l.b16 %v4994
    %v5258 = vunpack.c.l.b16 %v4995
    %v5259 = vunpack.c.l.b16 %v4996
    %v5260 = vunpack.c.l.b16 %v4997
    %v5261 = vunpack.c.l.b16 %v4998
    %v5262 = vunpack.c.l.b16 %v4999
    %v5263 = vunpack.c.l.b16 %v5000
    %v5264 = vunpack.c.l.b16 %v5001
    %v5265 = vunpack.c.l.b16 %v5002
    %v5266 = vunpack.c.l.b16 %v5003
    %v5267 = vunpack.c.l.b16 %v5004
    %v5268 = vunpack.c.l.b16 %v5005
    %v5269 = vunpack.c.l.b16 %v5006
    %v5270 = vunpack.c.l.b16 %v5007
    %v5271 = vunpack.c.l.b16 %v5008
    %v5272 = vunpack.c.l.b16 %v5009
    %v5273 = vunpack.c.l.b16 %v5010
    %v5274 = vunpack.c.l.b16 %v5011
    %v5275 = vunpack.c.l.b16 %v5012
    %v5276 = vunpack.c.l.b16 %v5013
    %v5277 = vunpack.c.l.b16 %v5014
    %v5278 = vunpack.c.l.b16 %v5015
    %v5279 = vunpack.c.l.b16 %v5016
    %v5280 = vunpack.c.l.b16 %v5017
    %v5281 = vunpack.c.l.b16 %v5018
    %v5282 = vunpack.c.l.b16 %v5019
    %v5283 = vunpack.c.l.b16 %v5020
    %v5284 = vunpack.c.l.b16 %v5021
    %v5285 = vunpack.c.l.b16 %v5022
    %v5286 = vpack.c.b16 %v5159, %v5158
    %v5287 = vpack.c.b16 %v5161, %v5160
    %v5288 = vpack.c.b16 %v5163, %v5162
    %v5289 = vpack.c.b16 %v5165, %v5164
    %v5290 = vpack.c.b16 %v5167, %v5166
    %v5291 = vpack.c.b16 %v5169, %v5168
    %v5292 = vpack.c.b16 %v5171, %v5170
    %v5293 = vpack.c.b16 %v5173, %v5172
    %v5294 = vpack.c.b16 %v5175, %v5174
    %v5295 = vpack.c.b16 %v5177, %v5176
    %v5296 = vpack.c.b16 %v5179, %v5178
    %v5297 = vpack.c.b16 %v5181, %v5180
    %v5298 = vpack.c.b16 %v5183, %v5182
    %v5299 = vpack.c.b16 %v5185, %v5184
    %v5300 = vpack.c.b16 %v5187, %v5186
    %v5301 = vpack.c.b16 %v5189, %v5188
    %v5302 = vpack.c.b16 %v5191, %v5190
    %v5303 = vpack.c.b16 %v5193, %v5192
    %v5304 = vpack.c.b16 %v5195, %v5194
    %v5305 = vpack.c.b16 %v5197, %v5196
    %v5306 = vpack.c.b16 %v5199, %v5198
    %v5307 = vpack.c.b16 %v5201, %v5200
    %v5308 = vpack.c.b16 %v5203, %v5202
    %v5309 = vpack.c.b16 %v5205, %v5204
    %v5310 = vpack.c.b16 %v5207, %v5206
    %v5311 = vpack.c.b16 %v5209, %v5208
    %v5312 = vpack.c.b16 %v5211, %v5210
    %v5313 = vpack.c.b16 %v5213, %v5212
    %v5314 = vpack.c.b16 %v5215, %v5214
    %v5315 = vpack.c.b16 %v5217, %v5216
    %v5316 = vpack.c.b16 %v5219, %v5218
    %v5317 = vpack.c.b16 %v5221, %v5220
    %v5318 = vpack.c.b16 %v5223, %v5222
    %v5319 = vpack.c.b16 %v5225, %v5224
    %v5320 = vpack.c.b16 %v5227, %v5226
    %v5321 = vpack.c.b16 %v5229, %v5228
    %v5322 = vpack.c.b16 %v5231, %v5230
    %v5323 = vpack.c.b16 %v5233, %v5232
    %v5324 = vpack.c.b16 %v5235, %v5234
    %v5325 = vpack.c.b16 %v5237, %v5236
    %v5326 = vpack.c.b16 %v5239, %v5238
    %v5327 = vpack.c.b16 %v5241, %v5240
    %v5328 = vpack.c.b16 %v5243, %v5242
    %v5329 = vpack.c.b16 %v5245, %v5244
    %v5330 = vpack.c.b16 %v5247, %v5246
    %v5331 = vpack.c.b16 %v5249, %v5248
    %v5332 = vpack.c.b16 %v5251, %v5250
    %v5333 = vpack.c.b16 %v5253, %v5252
    %v5334 = vpack.c.b16 %v5255, %v5254
    %v5335 = vpack.c.b16 %v5257, %v5256
    %v5336 = vpack.c.b16 %v5259, %v5258
    %v5337 = vpack.c.b16 %v5261, %v5260
    %v5338 = vpack.c.b16 %v5263, %v5262
    %v5339 = vpack.c.b16 %v5265, %v5264
    %v5340 = vpack.c.b16 %v5267, %v5266
    %v5341 = vpack.c.b16 %v5269, %v5268
    %v5342 = vpack.c.b16 %v5271, %v5270
    %v5343 = vpack.c.b16 %v5273, %v5272
    %v5344 = vpack.c.b16 %v5275, %v5274
    %v5345 = vpack.c.b16 %v5277, %v5276
    %v5346 = vpack.c.b16 %v5279, %v5278
    %v5347 = vpack.c.b16 %v5281, %v5280
    %v5348 = vpack.c.b16 %v5283, %v5282
    %v5349 = vpack.c.b16 %v5285, %v5284
    %5414 = vmatprep.subr.bf16.mxu0 0
    %5415 = vmatpush1.bf16.msra.mxu0 %v5293
    %5416 = vmatprep.subr.bf16.mxu0 0
    %5417 = vmatpush1.bf16.msra.mxu0 %v5292
    %5418 = vmatprep.subr.bf16.mxu0 0
    %5419 = vmatpush1.bf16.msra.mxu0 %v5291
    %5420 = vmatprep.subr.bf16.mxu0 0
    %5421 = vmatpush1.bf16.msra.mxu0 %v5290
    %5422 = vmatprep.subr.bf16.mxu0 0
    %5423 = vmatpush1.bf16.msra.mxu0 %v5289
    %5424 = vmatprep.subr.bf16.mxu0 0
    %5425 = vmatpush1.bf16.msra.mxu0 %v5288
    %5426 = vmatprep.subr.bf16.mxu0 0
    %5427 = vmatpush1.bf16.msra.mxu0 %v5287
    %5428 = vmatprep.subr.bf16.mxu0 0
    %5429 = vmatpush1.bf16.msra.mxu0 %v5286
    %5430 = vmatprep.subr.bf16.mxu0 0
    %5431 = vmatpush2.bf16.msra.mxu0 %v5301
    %5432 = vmatprep.subr.bf16.mxu0 0
    %5433 = vmatpush2.bf16.msra.mxu0 %v5300
    %5434 = vmatprep.subr.bf16.mxu0 0
    %5435 = vmatpush2.bf16.msra.mxu0 %v5299
    %5436 = vmatprep.subr.bf16.mxu0 0
    %5437 = vmatpush2.bf16.msra.mxu0 %v5298
    %5438 = vmatprep.subr.bf16.mxu0 0
    %5439 = vmatpush2.bf16.msra.mxu0 %v5297
    %5440 = vmatprep.subr.bf16.mxu0 0
    %5441 = vmatpush2.bf16.msra.mxu0 %v5296
    %5442 = vmatprep.subr.bf16.mxu0 0
    %5443 = vmatpush2.bf16.msra.mxu0 %v5295
    %5444 = vmatprep.subr.bf16.mxu0 0
    %5445 = vmatpush2.bf16.msra.mxu0 %v5294
    %5446 = vmatprep.mubr.bf16.mxu0 %v4888
    %5447 = vmatmul.mubr.bf16.gmra.mxu0 %v4887
    %v5448 = vpop.f32.mrf.mxu0
    %v5449 = vadd.f32 %v5028, %v5448
    %v5450 = vpop.f32.mrf.mxu0
    %v5451 = vpop.f32.mrf.mxu0
    %v5452 = vpop.f32.mrf.mxu0
    %5453 = vdwg.mxu0
    %5454 = vmatprep.subr.bf16.mxu0 0
    %5455 = vmatpush1.bf16.msra.mxu0 %v5309
    %5456 = vmatprep.subr.bf16.mxu0 0
    %5457 = vmatpush1.bf16.msra.mxu0 %v5308
    %5458 = vmatprep.subr.bf16.mxu0 0
    %5459 = vmatpush1.bf16.msra.mxu0 %v5307
    %5460 = vmatprep.subr.bf16.mxu0 0
    %5461 = vmatpush1.bf16.msra.mxu0 %v5306
    %5462 = vmatprep.subr.bf16.mxu0 0
    %5463 = vmatpush1.bf16.msra.mxu0 %v5305
    %5464 = vmatprep.subr.bf16.mxu0 0
    %5465 = vmatpush1.bf16.msra.mxu0 %v5304
    %5466 = vmatprep.subr.bf16.mxu0 0
    %5467 = vmatpush1.bf16.msra.mxu0 %v5303
    %5468 = vmatprep.subr.bf16.mxu0 0
    %5469 = vmatpush1.bf16.msra.mxu0 %v5302
    %5470 = vmatprep.subr.bf16.mxu0 0
    %5471 = vmatpush2.bf16.msra.mxu0 %v5317
    %5472 = vmatprep.subr.bf16.mxu0 0
    %5473 = vmatpush2.bf16.msra.mxu0 %v5316
    %5474 = vmatprep.subr.bf16.mxu0 0
    %5475 = vmatpush2.bf16.msra.mxu0 %v5315
    %5476 = vmatprep.subr.bf16.mxu0 0
    %5477 = vmatpush2.bf16.msra.mxu0 %v5314
    %5478 = vmatprep.subr.bf16.mxu0 0
    %5479 = vmatpush2.bf16.msra.mxu0 %v5313
    %5480 = vmatprep.subr.bf16.mxu0 0
    %5481 = vmatpush2.bf16.msra.mxu0 %v5312
    %5482 = vmatprep.subr.bf16.mxu0 0
    %5483 = vmatpush2.bf16.msra.mxu0 %v5311
    %5484 = vmatprep.subr.bf16.mxu0 0
    %5485 = vmatpush2.bf16.msra.mxu0 %v5310
    %5486 = vmatprep.mubr.bf16.mxu0 %v4890
    %5487 = vmatmul.mubr.bf16.gmra.mxu0 %v4889
    %v5488 = vpop.f32.mrf.mxu0
    %v5489 = vadd.f32 %v5449, %v5488
    %v5490 = vpop.f32.mrf.mxu0
    %v5491 = vpop.f32.mrf.mxu0
    %v5492 = vpop.f32.mrf.mxu0
    %5493 = vdwg.mxu0
    %5494 = vmatprep.subr.bf16.mxu0 0
    %5495 = vmatpush1.bf16.msra.mxu0 %v5325
    %5496 = vmatprep.subr.bf16.mxu0 0
    %5497 = vmatpush1.bf16.msra.mxu0 %v5324
    %5498 = vmatprep.subr.bf16.mxu0 0
    %5499 = vmatpush1.bf16.msra.mxu0 %v5323
    %5500 = vmatprep.subr.bf16.mxu0 0
    %5501 = vmatpush1.bf16.msra.mxu0 %v5322
    %5502 = vmatprep.subr.bf16.mxu0 0
    %5503 = vmatpush1.bf16.msra.mxu0 %v5321
    %5504 = vmatprep.subr.bf16.mxu0 0
    %5505 = vmatpush1.bf16.msra.mxu0 %v5320
    %5506 = vmatprep.subr.bf16.mxu0 0
    %5507 = vmatpush1.bf16.msra.mxu0 %v5319
    %5508 = vmatprep.subr.bf16.mxu0 0
    %5509 = vmatpush1.bf16.msra.mxu0 %v5318
    %5510 = vmatprep.subr.bf16.mxu0 0
    %5511 = vmatpush2.bf16.msra.mxu0 %v5333
    %5512 = vmatprep.subr.bf16.mxu0 0
    %5513 = vmatpush2.bf16.msra.mxu0 %v5332
    %5514 = vmatprep.subr.bf16.mxu0 0
    %5515 = vmatpush2.bf16.msra.mxu0 %v5331
    %5516 = vmatprep.subr.bf16.mxu0 0
    %5517 = vmatpush2.bf16.msra.mxu0 %v5330
    %5518 = vmatprep.subr.bf16.mxu0 0
    %5519 = vmatpush2.bf16.msra.mxu0 %v5329
    %5520 = vmatprep.subr.bf16.mxu0 0
    %5521 = vmatpush2.bf16.msra.mxu0 %v5328
    %5522 = vmatprep.subr.bf16.mxu0 0
    %5523 = vmatpush2.bf16.msra.mxu0 %v5327
    %5524 = vmatprep.subr.bf16.mxu0 0
    %5525 = vmatpush2.bf16.msra.mxu0 %v5326
    %5526 = vmatprep.mubr.bf16.mxu0 %v4892
    %5527 = vmatmul.mubr.bf16.gmra.mxu0 %v4891
    %v5528 = vpop.f32.mrf.mxu0
    %v5529 = vadd.f32 %v5489, %v5528
    %v5530 = vpop.f32.mrf.mxu0
    %v5531 = vpop.f32.mrf.mxu0
    %v5532 = vpop.f32.mrf.mxu0
    %5533 = vdwg.mxu0
    %5534 = vmatprep.subr.bf16.mxu0 0
    %5535 = vmatpush1.bf16.msra.mxu0 %v5341
    %5536 = vmatprep.subr.bf16.mxu0 0
    %5537 = vmatpush1.bf16.msra.mxu0 %v5340
    %5538 = vmatprep.subr.bf16.mxu0 0
    %5539 = vmatpush1.bf16.msra.mxu0 %v5339
    %5540 = vmatprep.subr.bf16.mxu0 0
    %5541 = vmatpush1.bf16.msra.mxu0 %v5338
    %5542 = vmatprep.subr.bf16.mxu0 0
    %5543 = vmatpush1.bf16.msra.mxu0 %v5337
    %5544 = vmatprep.subr.bf16.mxu0 0
    %5545 = vmatpush1.bf16.msra.mxu0 %v5336
    %5546 = vmatprep.subr.bf16.mxu0 0
    %5547 = vmatpush1.bf16.msra.mxu0 %v5335
    %5548 = vmatprep.subr.bf16.mxu0 0
    %5549 = vmatpush1.bf16.msra.mxu0 %v5334
    %5550 = vmatprep.subr.bf16.mxu0 0
    %5551 = vmatpush2.bf16.msra.mxu0 %v5349
    %5552 = vmatprep.subr.bf16.mxu0 0
    %5553 = vmatpush2.bf16.msra.mxu0 %v5348
    %5554 = vmatprep.subr.bf16.mxu0 0
    %5555 = vmatpush2.bf16.msra.mxu0 %v5347
    %5556 = vmatprep.subr.bf16.mxu0 0
    %5557 = vmatpush2.bf16.msra.mxu0 %v5346
    %5558 = vmatprep.subr.bf16.mxu0 0
    %5559 = vmatpush2.bf16.msra.mxu0 %v5345
    %5560 = vmatprep.subr.bf16.mxu0 0
    %5561 = vmatpush2.bf16.msra.mxu0 %v5344
    %5562 = vmatprep.subr.bf16.mxu0 0
    %5563 = vmatpush2.bf16.msra.mxu0 %v5343
    %5564 = vmatprep.subr.bf16.mxu0 0
    %5565 = vmatpush2.bf16.msra.mxu0 %v5342
    %5566 = vmatprep.mubr.bf16.mxu0 %v4894
    %5567 = vmatmul.mubr.bf16.gmra.mxu0 %v4893
    %v5568 = vpop.f32.mrf.mxu0
    %v5569 = vadd.f32 %v5529, %v5568
    %v5570 = vpop.f32.mrf.mxu0
    %v5571 = vpop.f32.mrf.mxu0
    %v5572 = vpop.f32.mrf.mxu0
    %5573 = vdwg.mxu0
    %5574 = vst [vmem:[#allocation14] sm:$0xff] %v5569
    // Predicated region
    $region58: #{label_predictor_forward.1} parent=1 // pred_check
      _
    $region59: #{label_predictor_forward.1} parent=1 // pred_check_branch
      %5576 = sbr.rel (0) target = $region61
    $region60: #{label_predictor_forward.1} parent=1 // pred_region
      %s5578 = ssub.s32 128, 128
      %5579 = vsyncadd [#allocation4], %s5578
      %s5581 = sshll.u32 [#allocation14], 4
      %s5582 = int_to_ptr.vmem [resolvable:$true] %s5581
      %5584 = dma.vmem_to_hbm [thread:$0]  %s5582, 128, %s7, [#allocation4]
    $region61: #{label_predictor_forward.1} parent=1 // pred_fallthru
      _
    // Predicated region
    $region62: #{label_predictor_forward.1} parent=1 // pred_check
      _
    $region63: #{label_predictor_forward.1} parent=1 // pred_check_branch
      %5586 = sbr.rel (0) target = $region65
    $region64: #{label_predictor_forward.1} parent=1 // pred_region
      %5587 = dma.done [#allocation4], 128
    $region65: #{label_predictor_forward.1} parent=1 // pred_fallthru
      _
    %5588 = vsyncpa [#allocation3], 1
    %5589 = vsyncpa [#allocation6], 1
    %5590 = vsyncpa [#allocation9], 1
    %5591 = vsyncpa [#allocation12], 1
    %5592 = vsyncpa [#allocation4], 1

</llo_original>
